<compile_context>
chip_gen: v7x
topology: tpu7x:2x2x1
jax: 0.10.0
libtpu: 0.0.40
codegen_flags: <defaults>
</compile_context>

<pallas_src>
import math
from functools import partial

import jax
import jax.numpy as jnp
from jax.experimental import pallas as pl
from jax.experimental.pallas import tpu as pltpu

EPS = 1e-5  # nn.BatchNorm2d default


# ----------------------- tiled matmul (+ fused epilogue) ----------------------

def _matmul_kernel(x_ref, w_ref, b_ref, *rest, relu, residual):
    """acc += x @ w over the K grid axis; bias [+ReLU] [+residual] epilogue runs
    only on the last K step.  NOTE: residual (if any) is added AFTER the ReLU;
    callers never enable both flags (asserted in the wrapper)."""
    if residual:
        r_ref, o_ref, acc_ref = rest
    else:
        o_ref, acc_ref = rest
    k = pl.program_id(2)

    @pl.when(k == 0)
    def _():
        acc_ref[...] = jnp.zeros_like(acc_ref)

    acc_ref[...] += jnp.dot(x_ref[...], w_ref[...],
                            preferred_element_type=jnp.float32)

    @pl.when(k == pl.num_programs(2) - 1)
    def _():
        acc = acc_ref[...] + b_ref[...]
        if relu:
            acc = jnp.maximum(acc, 0.0)
        if residual:
            acc = acc + r_ref[...]
        o_ref[...] = acc.astype(o_ref.dtype)


def _pick_tile(dim, cap, align):
    """Largest tile <= cap that is a multiple of `align` and divides `dim`,
    or the whole dim if it already fits under the cap."""
    if dim <= cap:
        return dim
    best = None
    t = align
    while t <= cap:
        if dim % t == 0:
            best = t
        t += align
    return best if best is not None else dim


def matmul_bias(x, w, b, *, relu=False, residual=None):
    """out = x @ w + b [+ReLU] [+residual]; bf16 MXU inputs, f32 accumulation."""
    assert not (relu and residual is not None), \
        "epilogue order is ReLU-then-residual; enable only one per call"
    M, K = x.shape
    Kw, N = w.shape
    assert K == Kw
    tm = _pick_tile(M, 256, 8)
    tn = _pick_tile(N, 256, 128)
    tk = _pick_tile(K, 512, 128)
    grid = (M // tm, N // tn, K // tk)

    args = [x.astype(jnp.bfloat16), w.astype(jnp.bfloat16),
            b.reshape(1, N).astype(jnp.float32)]
    in_specs = [
        pl.BlockSpec((tm, tk), lambda i, j, k: (i, k)),
        pl.BlockSpec((tk, tn), lambda i, j, k: (k, j)),
        pl.BlockSpec((1, tn), lambda i, j, k: (0, j)),
    ]
    if residual is not None:
        args.append(residual.astype(jnp.float32))
        in_specs.append(pl.BlockSpec((tm, tn), lambda i, j, k: (i, j)))

    kernel = partial(_matmul_kernel, relu=relu, residual=residual is not None)
    return pl.pallas_call(
        kernel,
        out_shape=jax.ShapeDtypeStruct((M, N), jnp.float32),
        grid_spec=pltpu.PrefetchScalarGridSpec(
            num_scalar_prefetch=0,
            grid=grid,
            in_specs=in_specs,
            out_specs=pl.BlockSpec((tm, tn), lambda i, j, k: (i, j)),
            scratch_shapes=[pltpu.VMEM((tm, tn), jnp.float32)],
        ),
        compiler_params=pltpu.CompilerParams(
            dimension_semantics=("parallel", "parallel", "arbitrary"),
            vmem_limit_bytes=32 * 1024 * 1024,
        ),
    )(*args)


# ---------------------------- BatchNorm2d + ReLU -----------------------------

def _bn_relu_kernel(x_ref, gamma_ref, beta_ref, o_ref):
    """Training-mode batch stats (biased variance) + ReLU on a (M, C) slab."""
    x = x_ref[...]
    mean = jnp.mean(x, axis=0, keepdims=True)
    var = jnp.mean((x - mean) ** 2, axis=0, keepdims=True)
    inv = jax.lax.rsqrt(var + EPS)
    o_ref[...] = jnp.maximum((x - mean) * inv * gamma_ref[...] + beta_ref[...], 0.0)


# TODO(synk): for large activations this should become a two-stage tiled
# reduction fused into the following conv's prologue; at decoder shapes the
# whole (M, C) slab fits VMEM easily.
def bn_relu(x2d, gamma, beta):
    M, C = x2d.shape
    return pl.pallas_call(
        _bn_relu_kernel,
        out_shape=jax.ShapeDtypeStruct((M, C), jnp.float32),
        in_specs=[pl.BlockSpec(memory_space=pltpu.MemorySpace.VMEM)] * 3,
        out_specs=pl.BlockSpec(memory_space=pltpu.MemorySpace.VMEM),
    )(x2d, gamma.reshape(1, C), beta.reshape(1, C))


# --------------------------------- JAX glue ----------------------------------

def im2col(x_nhwc, k, stride, pad):
    """Extract conv patches; returns (N*Ho*Wo, k*k*C) ordered (kh, kw, Cin)."""
    N, H, W, C = x_nhwc.shape
    xp = jnp.pad(x_nhwc, ((0, 0), (pad, pad), (pad, pad), (0, 0)))
    Ho = (H + 2 * pad - k) // stride + 1
    Wo = (W + 2 * pad - k) // stride + 1
    patches = []
    for di in range(k):
        for dj in range(k):
            patches.append(
                xp[:, di:di + stride * Ho:stride, dj:dj + stride * Wo:stride, :])
    cols = jnp.stack(patches, axis=3)  # (N, Ho, Wo, k*k, C)
    return cols.reshape(N * Ho * Wo, k * k * C), N, Ho, Wo


# TODO(synk): moving the 3x3 shifted reads in-kernel (extra grid axis over the
# 9 taps) would avoid the XLA-side im2col expansion entirely.
def conv2d(x_nhwc, w_oihw, b, k, stride, pad, *, relu=False):
    """PyTorch-style Conv2d (OIHW weight) via im2col + tiled Pallas matmul."""
    cout, cin = w_oihw.shape[0], w_oihw.shape[1]
    cols, N, Ho, Wo = im2col(x_nhwc, k, stride, pad)
    w2d = jnp.transpose(w_oihw, (2, 3, 1, 0)).reshape(k * k * cin, cout)
    out = matmul_bias(cols, w2d, b, relu=relu)
    return out.reshape(N, Ho, Wo, cout)


def _convt_phase_weight(w_iohw):
    """Lower ConvTranspose2d(k=4, s=2, p=1) weights (Cin, Cout, 4, 4) to a
    (9*Cin, 4*Cout) matrix acting on 3x3 im2col patches.  Column block
    p = 2*r + c is the sub-pixel phase producing output pixel (2i+r, 2j+c):
      out[2i+r, 2j+c] = sum_{dh in D(r), dw in D(c)}
                        x[i+dh, j+dw] @ W[:, :, r+1-2dh, c+1-2dw]
    with D(0) = {-1, 0}, D(1) = {0, +1}."""
    cin, cout = w_iohw.shape[0], w_iohw.shape[1]
    wp = jnp.zeros((3, 3, cin, 4 * cout), jnp.float32)
    for r in (0, 1):
        for c in (0, 1):
            p = 2 * r + c
            for dh in ((-1, 0) if r == 0 else (0, 1)):
                for dw in ((-1, 0) if c == 0 else (0, 1)):
                    kh = r + 1 - 2 * dh
                    kw = c + 1 - 2 * dw
                    wp = wp.at[dh + 1, dw + 1, :, p * cout:(p + 1) * cout].set(
                        w_iohw[:, :, kh, kw])
    return wp.reshape(9 * cin, 4 * cout)


def conv_transpose_4x4_s2(x_nhwc, w_iohw, b):
    """PyTorch ConvTranspose2d(Cin, Cout, 4, stride=2, padding=1), exact."""
    N, H, W, cin = x_nhwc.shape
    cout = w_iohw.shape[1]
    cols, _, _, _ = im2col(x_nhwc, 3, 1, 1)           # (N*H*W, 9*Cin)
    wp = _convt_phase_weight(w_iohw)                  # (9*Cin, 4*Cout)
    bp = jnp.tile(b, 4)                               # bias once per phase
    nph = 4 * cout
    npad = ((nph + 127) // 128) * 128                 # lane-dense output slab
    if npad != nph:
        wp = jnp.pad(wp, ((0, 0), (0, npad - nph)))
        bp = jnp.pad(bp, (0, npad - nph))
    y = matmul_bias(cols, wp, bp)                     # (N*H*W, npad)
    y = y[:, :nph].reshape(N, H, W, 2, 2, cout)
    y = jnp.transpose(y, (0, 1, 3, 2, 4, 5)).reshape(N, 2 * H, 2 * W, cout)
    return y                                          # pixel-shuffle interleave


# ------------------------------- model forward --------------------------------

def resnet_block(x_nhwc, p):
    # x + Conv1x1(ReLU(Conv3x3(ReLU(BN(x)))))
    N, H, W, C = x_nhwc.shape
    x2d = x_nhwc.reshape(N * H * W, C)
    h2d = bn_relu(x2d, p["bn_gamma"], p["bn_beta"])
    h = conv2d(h2d.reshape(N, H, W, C), p["w3"], p["b3"], 3, 1, 1, relu=True)
    w1x1 = jnp.transpose(p["w1"], (2, 3, 1, 0)).reshape(C, C)
    out2d = matmul_bias(h.reshape(N * H * W, C), w1x1, p["b1"], residual=x2d)
    return out2d.reshape(N, H, W, C)


def decoder_forward(x_nchw, params):
    x = jnp.transpose(x_nchw, (0, 2, 3, 1))            # NCHW -> NHWC (once)
    h = resnet_block(x, params["res1"])
    h = resnet_block(h, params["res2"])
    N, H, W, C = h.shape
    h = bn_relu(h.reshape(N * H * W, C),
                params["bn1_gamma"], params["bn1_beta"]).reshape(N, H, W, C)
    h = conv_transpose_4x4_s2(h, params["wt1"], params["bt1"])   # 256->256, 2x
    N, H, W, C = h.shape
    h = bn_relu(h.reshape(N * H * W, C),
                params["bn2_gamma"], params["bn2_beta"]).reshape(N, H, W, C)
    h = conv_transpose_4x4_s2(h, params["wt2"], params["bt2"])   # 256->3, 2x
    return jnp.transpose(h, (0, 3, 1, 2))               # NHWC -> NCHW (once)


# ----------------------------- parameter creation ------------------------------

def _conv_init(key, cout, cin, k):
    k1, k2 = jax.random.split(key)
    bound = 1.0 / math.sqrt(cin * k * k)
    w = jax.random.uniform(k1, (cout, cin, k, k), jnp.float32, -bound, bound)
    b = jax.random.uniform(k2, (cout,), jnp.float32, -bound, bound)
    return w, b


def _convt_init(key, cin, cout, k):
    k1, k2 = jax.random.split(key)
    bound = 1.0 / math.sqrt(cout * k * k)  # PyTorch fan-in for ConvTranspose2d
    w = jax.random.uniform(k1, (cin, cout, k, k), jnp.float32, -bound, bound)
    b = jax.random.uniform(k2, (cout,), jnp.float32, -bound, bound)
    return w, b


def init_params(key, dim=256, out_channels=3):
    keys = jax.random.split(key, 4)

    def res_params(k):
        k1, k2 = jax.random.split(k)
        w3, b3 = _conv_init(k1, dim, dim, 3)
        wc, bc = _conv_init(k2, dim, dim, 1)
        return dict(bn_gamma=jnp.ones((dim,), jnp.float32),
                    bn_beta=jnp.zeros((dim,), jnp.float32),
                    w3=w3, b3=b3, w1=wc, b1=bc)

    wt1, bt1 = _convt_init(keys[2], dim, dim, 4)
    wt2, bt2 = _convt_init(keys[3], dim, out_channels, 4)
    return dict(
        res1=res_params(keys[0]),
        res2=res_params(keys[1]),
        bn1_gamma=jnp.ones((dim,), jnp.float32),
        bn1_beta=jnp.zeros((dim,), jnp.float32),
        wt1=wt1, bt1=bt1,
        bn2_gamma=jnp.ones((dim,), jnp.float32),
        bn2_beta=jnp.zeros((dim,), jnp.float32),
        wt2=wt2, bt2=bt2,
    )


# ------------------------------------- main ------------------------------------

if __name__ == "__main__":
    key = jax.random.PRNGKey(0)
    kx, kp = jax.random.split(key)

    # Decoder input: VQ-VAE latent with 256 channels on a small spatial grid.
    x = jax.random.normal(kx, (2, 256, 4, 4), jnp.float32)   # NCHW
    params = init_params(kp)

    fwd = jax.jit(decoder_forward)
    out = jax.block_until_ready(fwd(x, params))
    assert out.shape == (2, 3, 16, 16), out.shape
    assert out.dtype == jnp.float32
    print("KERNEL_OK")
</pallas_src>

<mosaic_0001>
module attributes {stable_mosaic.version = 11 : i64} {
  func.func @_bn_relu_kernel(%arg0: memref<32x256xf32, #tpu.memory_space<vmem>>, %arg1: memref<1x256xf32, #tpu.memory_space<vmem>>, %arg2: memref<1x256xf32, #tpu.memory_space<vmem>>, %arg3: memref<32x256xf32, #tpu.memory_space<vmem>>) attributes {dimension_semantics = [], scalar_prefetch = 0 : i64, scratch_operands = 0 : i64, tpu.core_type = #tpu.core_type<tc>} {
    %c0 = arith.constant 0 : index
    %c0_0 = arith.constant 0 : index
    %0 = vector.load %arg0[%c0, %c0_0] : memref<32x256xf32, #tpu.memory_space<vmem>>, vector<32x256xf32>
    %cst = arith.constant dense<0.000000e+00> : vector<256xf32>
    %1 = vector.multi_reduction <add>, %0, %cst [0] : vector<32x256xf32> to vector<256xf32>
    %2 = vector.shape_cast %1 : vector<256xf32> to vector<1x256xf32>
    %cst_1 = arith.constant 3.200000e+01 : f32
    %3 = vector.broadcast %cst_1 : f32 to vector<1x256xf32>
    %4 = arith.divf %2, %3 : vector<1x256xf32>
    %5 = vector.broadcast %4 : vector<1x256xf32> to vector<32x256xf32>
    %6 = arith.subf %0, %5 : vector<32x256xf32>
    %7 = arith.mulf %6, %6 : vector<32x256xf32>
    %cst_2 = arith.constant dense<0.000000e+00> : vector<256xf32>
    %8 = vector.multi_reduction <add>, %7, %cst_2 [0] : vector<32x256xf32> to vector<256xf32>
    %9 = vector.shape_cast %8 : vector<256xf32> to vector<1x256xf32>
    %cst_3 = arith.constant 3.200000e+01 : f32
    %10 = vector.broadcast %cst_3 : f32 to vector<1x256xf32>
    %11 = arith.divf %9, %10 : vector<1x256xf32>
    %cst_4 = arith.constant 9.99999974E-6 : f32
    %12 = vector.broadcast %cst_4 : f32 to vector<1x256xf32>
    %13 = arith.addf %11, %12 : vector<1x256xf32>
    %14 = math.rsqrt %13 : vector<1x256xf32>
    %15 = vector.broadcast %4 : vector<1x256xf32> to vector<32x256xf32>
    %16 = arith.subf %0, %15 : vector<32x256xf32>
    %17 = vector.broadcast %14 : vector<1x256xf32> to vector<32x256xf32>
    %18 = arith.mulf %16, %17 : vector<32x256xf32>
    %c0_5 = arith.constant 0 : index
    %c0_6 = arith.constant 0 : index
    %19 = vector.load %arg1[%c0_5, %c0_6] : memref<1x256xf32, #tpu.memory_space<vmem>>, vector<1x256xf32>
    %20 = vector.broadcast %19 : vector<1x256xf32> to vector<32x256xf32>
    %21 = arith.mulf %18, %20 : vector<32x256xf32>
    %c0_7 = arith.constant 0 : index
    %c0_8 = arith.constant 0 : index
    %22 = vector.load %arg2[%c0_7, %c0_8] : memref<1x256xf32, #tpu.memory_space<vmem>>, vector<1x256xf32>
    %23 = vector.broadcast %22 : vector<1x256xf32> to vector<32x256xf32>
    %24 = arith.addf %21, %23 : vector<32x256xf32>
    %cst_9 = arith.constant 0.000000e+00 : f32
    %25 = vector.broadcast %cst_9 : f32 to vector<32x256xf32>
    %26 = arith.maximumf %24, %25 : vector<32x256xf32>
    %c0_10 = arith.constant 0 : index
    %c0_11 = arith.constant 0 : index
    %27 = vector.load %arg3[%c0_10, %c0_11] : memref<32x256xf32, #tpu.memory_space<vmem>>, vector<32x256xf32>
    tpu.vector_store %arg3[%c0_10, %c0_11], %26 {strides = array<i32>} : memref<32x256xf32, #tpu.memory_space<vmem>>, vector<32x256xf32>,
    return
  }
}

module attributes {stable_mosaic.version = 11 : i64} {
  func.func @_matmul_kernel(%arg0: i32, %arg1: i32, %arg2: i32, %arg3: memref<32x384xbf16, #tpu.memory_space<vmem>>, %arg4: memref<384x256xbf16, #tpu.memory_space<vmem>>, %arg5: memref<1x256xf32, #tpu.memory_space<vmem>>, %arg6: memref<32x256xf32, #tpu.memory_space<vmem>>, %arg7: memref<32x256xf32, #tpu.memory_space<vmem>>) attributes {dimension_semantics = [#tpu.dimension_semantics<parallel>, #tpu.dimension_semantics<parallel>, #tpu.dimension_semantics<arbitrary>], iteration_bounds = array<i64: 1, 1, 6>, scalar_prefetch = 0 : i64, scratch_operands = 1 : i64, tpu.core_type = #tpu.core_type<tc>, window_params = [{transform_indices = @transform_0, window_bounds = array<i64: 32, 384>}, {transform_indices = @transform_1, window_bounds = array<i64: 384, 256>}, {transform_indices = @transform_2, window_bounds = array<i64: 1, 256>}, {transform_indices = @transform_3, window_bounds = array<i64: 32, 256>}]} {
    %c0_i32 = arith.constant 0 : i32
    %0 = arith.cmpi eq, %arg2, %c0_i32 : i32
    %1 = arith.extui %0 : i1 to i32
    %c0_i32_0 = arith.constant 0 : i32
    %2 = arith.cmpi ne, %1, %c0_i32_0 : i32
    scf.if %2 {
      %cst_9 = arith.constant 0.000000e+00 : f32
      %12 = vector.broadcast %cst_9 : f32 to vector<32x256xf32>
      %c0_10 = arith.constant 0 : index
      %c0_11 = arith.constant 0 : index
      %13 = vector.load %arg7[%c0_10, %c0_11] : memref<32x256xf32, #tpu.memory_space<vmem>>, vector<32x256xf32>
      tpu.vector_store %arg7[%c0_10, %c0_11], %12 {strides = array<i32>} : memref<32x256xf32, #tpu.memory_space<vmem>>, vector<32x256xf32>,
    } else {
    }
    %c0 = arith.constant 0 : index
    %c0_1 = arith.constant 0 : index
    %3 = vector.load %arg7[%c0, %c0_1] : memref<32x256xf32, #tpu.memory_space<vmem>>, vector<32x256xf32>
    %c0_2 = arith.constant 0 : index
    %c0_3 = arith.constant 0 : index
    %4 = vector.load %arg3[%c0_2, %c0_3] : memref<32x384xbf16, #tpu.memory_space<vmem>>, vector<32x384xbf16>
    %c0_4 = arith.constant 0 : index
    %c0_5 = arith.constant 0 : index
    %5 = vector.load %arg4[%c0_4, %c0_5] : memref<384x256xbf16, #tpu.memory_space<vmem>>, vector<384x256xbf16>
    %cst = arith.constant dense<0.000000e+00> : vector<32x256xf32>
    %6 = tpu.matmul %4, %5, %cst {dimension_numbers = #tpu.dot_dimension_numbers<[1], [0], [0], [1], [0, 0, 1, 1], [], []>} : vector<32x384xbf16>, vector<384x256xbf16>, vector<32x256xf32> -> vector<32x256xf32>
    %7 = arith.addf %3, %6 : vector<32x256xf32>
    %c0_6 = arith.constant 0 : index
    %c0_7 = arith.constant 0 : index
    %8 = vector.load %arg7[%c0_6, %c0_7] : memref<32x256xf32, #tpu.memory_space<vmem>>, vector<32x256xf32>
    tpu.vector_store %arg7[%c0_6, %c0_7], %7 {strides = array<i32>} : memref<32x256xf32, #tpu.memory_space<vmem>>, vector<32x256xf32>,
    %c5_i32 = arith.constant 5 : i32
    %9 = arith.cmpi eq, %arg2, %c5_i32 : i32
    %10 = arith.extui %9 : i1 to i32
    %c0_i32_8 = arith.constant 0 : i32
    %11 = arith.cmpi ne, %10, %c0_i32_8 : i32
    scf.if %11 {
      %c0_9 = arith.constant 0 : index
      %c0_10 = arith.constant 0 : index
      %12 = vector.load %arg7[%c0_9, %c0_10] : memref<32x256xf32, #tpu.memory_space<vmem>>, vector<32x256xf32>
      %c0_11 = arith.constant 0 : index
      %c0_12 = arith.constant 0 : index
      %13 = vector.load %arg5[%c0_11, %c0_12] : memref<1x256xf32, #tpu.memory_space<vmem>>, vector<1x256xf32>
      %14 = vector.broadcast %13 : vector<1x256xf32> to vector<32x256xf32>
      %15 = arith.addf %12, %14 : vector<32x256xf32>
      %cst_13 = arith.constant 0.000000e+00 : f32
      %16 = vector.broadcast %cst_13 : f32 to vector<32x256xf32>
      %17 = arith.maximumf %15, %16 : vector<32x256xf32>
      %c0_14 = arith.constant 0 : index
      %c0_15 = arith.constant 0 : index
      %18 = vector.load %arg6[%c0_14, %c0_15] : memref<32x256xf32, #tpu.memory_space<vmem>>, vector<32x256xf32>
      tpu.vector_store %arg6[%c0_14, %c0_15], %17 {strides = array<i32>} : memref<32x256xf32, #tpu.memory_space<vmem>>, vector<32x256xf32>,
    } else {
    }
    return
  }
  func.func @transform_0(%arg0: i32, %arg1: i32, %arg2: i32) -> (i32, i32) {
    %c0_i32 = arith.constant 0 : i32
    return %arg0, %arg2 : i32, i32
  }
  func.func @transform_1(%arg0: i32, %arg1: i32, %arg2: i32) -> (i32, i32) {
    %c0_i32 = arith.constant 0 : i32
    return %arg2, %arg1 : i32, i32
  }
  func.func @transform_2(%arg0: i32, %arg1: i32, %arg2: i32) -> (i32, i32) {
    %c0_i32 = arith.constant 0 : i32
    %c0_i32_0 = arith.constant 0 : i32
    return %c0_i32, %arg1 : i32, i32
  }
  func.func @transform_3(%arg0: i32, %arg1: i32, %arg2: i32) -> (i32, i32) {
    %c0_i32 = arith.constant 0 : i32
    return %arg0, %arg1 : i32, i32
  }
}

module attributes {stable_mosaic.version = 11 : i64} {
  func.func @_matmul_kernel(%arg0: i32, %arg1: i32, %arg2: i32, %arg3: memref<32x256xbf16, #tpu.memory_space<vmem>>, %arg4: memref<256x256xbf16, #tpu.memory_space<vmem>>, %arg5: memref<1x256xf32, #tpu.memory_space<vmem>>, %arg6: memref<32x256xf32, #tpu.memory_space<vmem>>, %arg7: memref<32x256xf32, #tpu.memory_space<vmem>>, %arg8: memref<32x256xf32, #tpu.memory_space<vmem>>) attributes {dimension_semantics = [#tpu.dimension_semantics<parallel>, #tpu.dimension_semantics<parallel>, #tpu.dimension_semantics<arbitrary>], iteration_bounds = array<i64: 1, 1, 1>, scalar_prefetch = 0 : i64, scratch_operands = 1 : i64, tpu.core_type = #tpu.core_type<tc>, window_params = [{transform_indices = @transform_0, window_bounds = array<i64: 32, 256>}, {transform_indices = @transform_1, window_bounds = array<i64: 256, 256>}, {transform_indices = @transform_2, window_bounds = array<i64: 1, 256>}, {transform_indices = @transform_3, window_bounds = array<i64: 32, 256>}, {transform_indices = @transform_4, window_bounds = array<i64: 32, 256>}]} {
    %c0_i32 = arith.constant 0 : i32
    %0 = arith.cmpi eq, %arg2, %c0_i32 : i32
    %1 = arith.extui %0 : i1 to i32
    %c0_i32_0 = arith.constant 0 : i32
    %2 = arith.cmpi ne, %1, %c0_i32_0 : i32
    scf.if %2 {
      %cst_10 = arith.constant 0.000000e+00 : f32
      %12 = vector.broadcast %cst_10 : f32 to vector<32x256xf32>
      %c0_11 = arith.constant 0 : index
      %c0_12 = arith.constant 0 : index
      %13 = vector.load %arg8[%c0_11, %c0_12] : memref<32x256xf32, #tpu.memory_space<vmem>>, vector<32x256xf32>
      tpu.vector_store %arg8[%c0_11, %c0_12], %12 {strides = array<i32>} : memref<32x256xf32, #tpu.memory_space<vmem>>, vector<32x256xf32>,
    } else {
    }
    %c0 = arith.constant 0 : index
    %c0_1 = arith.constant 0 : index
    %3 = vector.load %arg8[%c0, %c0_1] : memref<32x256xf32, #tpu.memory_space<vmem>>, vector<32x256xf32>
    %c0_2 = arith.constant 0 : index
    %c0_3 = arith.constant 0 : index
    %4 = vector.load %arg3[%c0_2, %c0_3] : memref<32x256xbf16, #tpu.memory_space<vmem>>, vector<32x256xbf16>
    %c0_4 = arith.constant 0 : index
    %c0_5 = arith.constant 0 : index
    %5 = vector.load %arg4[%c0_4, %c0_5] : memref<256x256xbf16, #tpu.memory_space<vmem>>, vector<256x256xbf16>
    %cst = arith.constant dense<0.000000e+00> : vector<32x256xf32>
    %6 = tpu.matmul %4, %5, %cst {dimension_numbers = #tpu.dot_dimension_numbers<[1], [0], [0], [1], [0, 0, 1, 1], [], []>} : vector<32x256xbf16>, vector<256x256xbf16>, vector<32x256xf32> -> vector<32x256xf32>
    %7 = arith.addf %3, %6 : vector<32x256xf32>
    %c0_6 = arith.constant 0 : index
    %c0_7 = arith.constant 0 : index
    %8 = vector.load %arg8[%c0_6, %c0_7] : memref<32x256xf32, #tpu.memory_space<vmem>>, vector<32x256xf32>
    tpu.vector_store %arg8[%c0_6, %c0_7], %7 {strides = array<i32>} : memref<32x256xf32, #tpu.memory_space<vmem>>, vector<32x256xf32>,
    %c0_i32_8 = arith.constant 0 : i32
    %9 = arith.cmpi eq, %arg2, %c0_i32_8 : i32
    %10 = arith.extui %9 : i1 to i32
    %c0_i32_9 = arith.constant 0 : i32
    %11 = arith.cmpi ne, %10, %c0_i32_9 : i32
    scf.if %11 {
      %c0_10 = arith.constant 0 : index
      %c0_11 = arith.constant 0 : index
      %12 = vector.load %arg8[%c0_10, %c0_11] : memref<32x256xf32, #tpu.memory_space<vmem>>, vector<32x256xf32>
      %c0_12 = arith.constant 0 : index
      %c0_13 = arith.constant 0 : index
      %13 = vector.load %arg5[%c0_12, %c0_13] : memref<1x256xf32, #tpu.memory_space<vmem>>, vector<1x256xf32>
      %14 = vector.broadcast %13 : vector<1x256xf32> to vector<32x256xf32>
      %15 = arith.addf %12, %14 : vector<32x256xf32>
      %c0_14 = arith.constant 0 : index
      %c0_15 = arith.constant 0 : index
      %16 = vector.load %arg6[%c0_14, %c0_15] : memref<32x256xf32, #tpu.memory_space<vmem>>, vector<32x256xf32>
      %17 = arith.addf %15, %16 : vector<32x256xf32>
      %c0_16 = arith.constant 0 : index
      %c0_17 = arith.constant 0 : index
      %18 = vector.load %arg7[%c0_16, %c0_17] : memref<32x256xf32, #tpu.memory_space<vmem>>, vector<32x256xf32>
      tpu.vector_store %arg7[%c0_16, %c0_17], %17 {strides = array<i32>} : memref<32x256xf32, #tpu.memory_space<vmem>>, vector<32x256xf32>,
    } else {
    }
    return
  }
  func.func @transform_0(%arg0: i32, %arg1: i32, %arg2: i32) -> (i32, i32) {
    %c0_i32 = arith.constant 0 : i32
    return %arg0, %arg2 : i32, i32
  }
  func.func @transform_1(%arg0: i32, %arg1: i32, %arg2: i32) -> (i32, i32) {
    %c0_i32 = arith.constant 0 : i32
    return %arg2, %arg1 : i32, i32
  }
  func.func @transform_2(%arg0: i32, %arg1: i32, %arg2: i32) -> (i32, i32) {
    %c0_i32 = arith.constant 0 : i32
    %c0_i32_0 = arith.constant 0 : i32
    return %c0_i32, %arg1 : i32, i32
  }
  func.func @transform_3(%arg0: i32, %arg1: i32, %arg2: i32) -> (i32, i32) {
    %c0_i32 = arith.constant 0 : i32
    return %arg0, %arg1 : i32, i32
  }
  func.func @transform_4(%arg0: i32, %arg1: i32, %arg2: i32) -> (i32, i32) {
    %c0_i32 = arith.constant 0 : i32
    return %arg0, %arg1 : i32, i32
  }
}

module attributes {stable_mosaic.version = 11 : i64} {
  func.func @_matmul_kernel(%arg0: i32, %arg1: i32, %arg2: i32, %arg3: memref<32x384xbf16, #tpu.memory_space<vmem>>, %arg4: memref<384x256xbf16, #tpu.memory_space<vmem>>, %arg5: memref<1x256xf32, #tpu.memory_space<vmem>>, %arg6: memref<32x256xf32, #tpu.memory_space<vmem>>, %arg7: memref<32x256xf32, #tpu.memory_space<vmem>>) attributes {dimension_semantics = [#tpu.dimension_semantics<parallel>, #tpu.dimension_semantics<parallel>, #tpu.dimension_semantics<arbitrary>], iteration_bounds = array<i64: 1, 4, 6>, scalar_prefetch = 0 : i64, scratch_operands = 1 : i64, tpu.core_type = #tpu.core_type<tc>, window_params = [{transform_indices = @transform_0, window_bounds = array<i64: 32, 384>}, {transform_indices = @transform_1, window_bounds = array<i64: 384, 256>}, {transform_indices = @transform_2, window_bounds = array<i64: 1, 256>}, {transform_indices = @transform_3, window_bounds = array<i64: 32, 256>}]} {
    %c0_i32 = arith.constant 0 : i32
    %0 = arith.cmpi eq, %arg2, %c0_i32 : i32
    %1 = arith.extui %0 : i1 to i32
    %c0_i32_0 = arith.constant 0 : i32
    %2 = arith.cmpi ne, %1, %c0_i32_0 : i32
    scf.if %2 {
      %cst_9 = arith.constant 0.000000e+00 : f32
      %12 = vector.broadcast %cst_9 : f32 to vector<32x256xf32>
      %c0_10 = arith.constant 0 : index
      %c0_11 = arith.constant 0 : index
      %13 = vector.load %arg7[%c0_10, %c0_11] : memref<32x256xf32, #tpu.memory_space<vmem>>, vector<32x256xf32>
      tpu.vector_store %arg7[%c0_10, %c0_11], %12 {strides = array<i32>} : memref<32x256xf32, #tpu.memory_space<vmem>>, vector<32x256xf32>,
    } else {
    }
    %c0 = arith.constant 0 : index
    %c0_1 = arith.constant 0 : index
    %3 = vector.load %arg7[%c0, %c0_1] : memref<32x256xf32, #tpu.memory_space<vmem>>, vector<32x256xf32>
    %c0_2 = arith.constant 0 : index
    %c0_3 = arith.constant 0 : index
    %4 = vector.load %arg3[%c0_2, %c0_3] : memref<32x384xbf16, #tpu.memory_space<vmem>>, vector<32x384xbf16>
    %c0_4 = arith.constant 0 : index
    %c0_5 = arith.constant 0 : index
    %5 = vector.load %arg4[%c0_4, %c0_5] : memref<384x256xbf16, #tpu.memory_space<vmem>>, vector<384x256xbf16>
    %cst = arith.constant dense<0.000000e+00> : vector<32x256xf32>
    %6 = tpu.matmul %4, %5, %cst {dimension_numbers = #tpu.dot_dimension_numbers<[1], [0], [0], [1], [0, 0, 1, 1], [], []>} : vector<32x384xbf16>, vector<384x256xbf16>, vector<32x256xf32> -> vector<32x256xf32>
    %7 = arith.addf %3, %6 : vector<32x256xf32>
    %c0_6 = arith.constant 0 : index
    %c0_7 = arith.constant 0 : index
    %8 = vector.load %arg7[%c0_6, %c0_7] : memref<32x256xf32, #tpu.memory_space<vmem>>, vector<32x256xf32>
    tpu.vector_store %arg7[%c0_6, %c0_7], %7 {strides = array<i32>} : memref<32x256xf32, #tpu.memory_space<vmem>>, vector<32x256xf32>,
    %c5_i32 = arith.constant 5 : i32
    %9 = arith.cmpi eq, %arg2, %c5_i32 : i32
    %10 = arith.extui %9 : i1 to i32
    %c0_i32_8 = arith.constant 0 : i32
    %11 = arith.cmpi ne, %10, %c0_i32_8 : i32
    scf.if %11 {
      %c0_9 = arith.constant 0 : index
      %c0_10 = arith.constant 0 : index
      %12 = vector.load %arg7[%c0_9, %c0_10] : memref<32x256xf32, #tpu.memory_space<vmem>>, vector<32x256xf32>
      %c0_11 = arith.constant 0 : index
      %c0_12 = arith.constant 0 : index
      %13 = vector.load %arg5[%c0_11, %c0_12] : memref<1x256xf32, #tpu.memory_space<vmem>>, vector<1x256xf32>
      %14 = vector.broadcast %13 : vector<1x256xf32> to vector<32x256xf32>
      %15 = arith.addf %12, %14 : vector<32x256xf32>
      %c0_13 = arith.constant 0 : index
      %c0_14 = arith.constant 0 : index
      %16 = vector.load %arg6[%c0_13, %c0_14] : memref<32x256xf32, #tpu.memory_space<vmem>>, vector<32x256xf32>
      tpu.vector_store %arg6[%c0_13, %c0_14], %15 {strides = array<i32>} : memref<32x256xf32, #tpu.memory_space<vmem>>, vector<32x256xf32>,
    } else {
    }
    return
  }
  func.func @transform_0(%arg0: i32, %arg1: i32, %arg2: i32) -> (i32, i32) {
    %c0_i32 = arith.constant 0 : i32
    return %arg0, %arg2 : i32, i32
  }
  func.func @transform_1(%arg0: i32, %arg1: i32, %arg2: i32) -> (i32, i32) {
    %c0_i32 = arith.constant 0 : i32
    return %arg2, %arg1 : i32, i32
  }
  func.func @transform_2(%arg0: i32, %arg1: i32, %arg2: i32) -> (i32, i32) {
    %c0_i32 = arith.constant 0 : i32
    %c0_i32_0 = arith.constant 0 : i32
    return %c0_i32, %arg1 : i32, i32
  }
  func.func @transform_3(%arg0: i32, %arg1: i32, %arg2: i32) -> (i32, i32) {
    %c0_i32 = arith.constant 0 : i32
    return %arg0, %arg1 : i32, i32
  }
}

module attributes {stable_mosaic.version = 11 : i64} {
  func.func @_bn_relu_kernel(%arg0: memref<128x256xf32, #tpu.memory_space<vmem>>, %arg1: memref<1x256xf32, #tpu.memory_space<vmem>>, %arg2: memref<1x256xf32, #tpu.memory_space<vmem>>, %arg3: memref<128x256xf32, #tpu.memory_space<vmem>>) attributes {dimension_semantics = [], scalar_prefetch = 0 : i64, scratch_operands = 0 : i64, tpu.core_type = #tpu.core_type<tc>} {
    %c0 = arith.constant 0 : index
    %c0_0 = arith.constant 0 : index
    %0 = vector.load %arg0[%c0, %c0_0] : memref<128x256xf32, #tpu.memory_space<vmem>>, vector<128x256xf32>
    %cst = arith.constant dense<0.000000e+00> : vector<256xf32>
    %1 = vector.multi_reduction <add>, %0, %cst [0] : vector<128x256xf32> to vector<256xf32>
    %2 = vector.shape_cast %1 : vector<256xf32> to vector<1x256xf32>
    %cst_1 = arith.constant 1.280000e+02 : f32
    %3 = vector.broadcast %cst_1 : f32 to vector<1x256xf32>
    %4 = arith.divf %2, %3 : vector<1x256xf32>
    %5 = vector.broadcast %4 : vector<1x256xf32> to vector<128x256xf32>
    %6 = arith.subf %0, %5 : vector<128x256xf32>
    %7 = arith.mulf %6, %6 : vector<128x256xf32>
    %cst_2 = arith.constant dense<0.000000e+00> : vector<256xf32>
    %8 = vector.multi_reduction <add>, %7, %cst_2 [0] : vector<128x256xf32> to vector<256xf32>
    %9 = vector.shape_cast %8 : vector<256xf32> to vector<1x256xf32>
    %cst_3 = arith.constant 1.280000e+02 : f32
    %10 = vector.broadcast %cst_3 : f32 to vector<1x256xf32>
    %11 = arith.divf %9, %10 : vector<1x256xf32>
    %cst_4 = arith.constant 9.99999974E-6 : f32
    %12 = vector.broadcast %cst_4 : f32 to vector<1x256xf32>
    %13 = arith.addf %11, %12 : vector<1x256xf32>
    %14 = math.rsqrt %13 : vector<1x256xf32>
    %15 = vector.broadcast %4 : vector<1x256xf32> to vector<128x256xf32>
    %16 = arith.subf %0, %15 : vector<128x256xf32>
    %17 = vector.broadcast %14 : vector<1x256xf32> to vector<128x256xf32>
    %18 = arith.mulf %16, %17 : vector<128x256xf32>
    %c0_5 = arith.constant 0 : index
    %c0_6 = arith.constant 0 : index
    %19 = vector.load %arg1[%c0_5, %c0_6] : memref<1x256xf32, #tpu.memory_space<vmem>>, vector<1x256xf32>
    %20 = vector.broadcast %19 : vector<1x256xf32> to vector<128x256xf32>
    %21 = arith.mulf %18, %20 : vector<128x256xf32>
    %c0_7 = arith.constant 0 : index
    %c0_8 = arith.constant 0 : index
    %22 = vector.load %arg2[%c0_7, %c0_8] : memref<1x256xf32, #tpu.memory_space<vmem>>, vector<1x256xf32>
    %23 = vector.broadcast %22 : vector<1x256xf32> to vector<128x256xf32>
    %24 = arith.addf %21, %23 : vector<128x256xf32>
    %cst_9 = arith.constant 0.000000e+00 : f32
    %25 = vector.broadcast %cst_9 : f32 to vector<128x256xf32>
    %26 = arith.maximumf %24, %25 : vector<128x256xf32>
    %c0_10 = arith.constant 0 : index
    %c0_11 = arith.constant 0 : index
    %27 = vector.load %arg3[%c0_10, %c0_11] : memref<128x256xf32, #tpu.memory_space<vmem>>, vector<128x256xf32>
    tpu.vector_store %arg3[%c0_10, %c0_11], %26 {strides = array<i32>} : memref<128x256xf32, #tpu.memory_space<vmem>>, vector<128x256xf32>,
    return
  }
}

module attributes {stable_mosaic.version = 11 : i64} {
  func.func @_matmul_kernel(%arg0: i32, %arg1: i32, %arg2: i32, %arg3: memref<128x384xbf16, #tpu.memory_space<vmem>>, %arg4: memref<384x128xbf16, #tpu.memory_space<vmem>>, %arg5: memref<1x128xf32, #tpu.memory_space<vmem>>, %arg6: memref<128x128xf32, #tpu.memory_space<vmem>>, %arg7: memref<128x128xf32, #tpu.memory_space<vmem>>) attributes {dimension_semantics = [#tpu.dimension_semantics<parallel>, #tpu.dimension_semantics<parallel>, #tpu.dimension_semantics<arbitrary>], iteration_bounds = array<i64: 1, 1, 6>, scalar_prefetch = 0 : i64, scratch_operands = 1 : i64, tpu.core_type = #tpu.core_type<tc>, window_params = [{transform_indices = @transform_0, window_bounds = array<i64: 128, 384>}, {transform_indices = @transform_1, window_bounds = array<i64: 384, 128>}, {transform_indices = @transform_2, window_bounds = array<i64: 1, 128>}, {transform_indices = @transform_3, window_bounds = array<i64: 128, 128>}]} {
    %c0_i32 = arith.constant 0 : i32
    %0 = arith.cmpi eq, %arg2, %c0_i32 : i32
    %1 = arith.extui %0 : i1 to i32
    %c0_i32_0 = arith.constant 0 : i32
    %2 = arith.cmpi ne, %1, %c0_i32_0 : i32
    scf.if %2 {
      %cst_9 = arith.constant 0.000000e+00 : f32
      %12 = vector.broadcast %cst_9 : f32 to vector<128x128xf32>
      %c0_10 = arith.constant 0 : index
      %c0_11 = arith.constant 0 : index
      %13 = vector.load %arg7[%c0_10, %c0_11] : memref<128x128xf32, #tpu.memory_space<vmem>>, vector<128x128xf32>
      tpu.vector_store %arg7[%c0_10, %c0_11], %12 {strides = array<i32>} : memref<128x128xf32, #tpu.memory_space<vmem>>, vector<128x128xf32>,
    } else {
    }
    %c0 = arith.constant 0 : index
    %c0_1 = arith.constant 0 : index
    %3 = vector.load %arg7[%c0, %c0_1] : memref<128x128xf32, #tpu.memory_space<vmem>>, vector<128x128xf32>
    %c0_2 = arith.constant 0 : index
    %c0_3 = arith.constant 0 : index
    %4 = vector.load %arg3[%c0_2, %c0_3] : memref<128x384xbf16, #tpu.memory_space<vmem>>, vector<128x384xbf16>
    %c0_4 = arith.constant 0 : index
    %c0_5 = arith.constant 0 : index
    %5 = vector.load %arg4[%c0_4, %c0_5] : memref<384x128xbf16, #tpu.memory_space<vmem>>, vector<384x128xbf16>
    %cst = arith.constant dense<0.000000e+00> : vector<128x128xf32>
    %6 = tpu.matmul %4, %5, %cst {dimension_numbers = #tpu.dot_dimension_numbers<[1], [0], [0], [1], [0, 0, 1, 1], [], []>} : vector<128x384xbf16>, vector<384x128xbf16>, vector<128x128xf32> -> vector<128x128xf32>
    %7 = arith.addf %3, %6 : vector<128x128xf32>
    %c0_6 = arith.constant 0 : index
    %c0_7 = arith.constant 0 : index
    %8 = vector.load %arg7[%c0_6, %c0_7] : memref<128x128xf32, #tpu.memory_space<vmem>>, vector<128x128xf32>
    tpu.vector_store %arg7[%c0_6, %c0_7], %7 {strides = array<i32>} : memref<128x128xf32, #tpu.memory_space<vmem>>, vector<128x128xf32>,
    %c5_i32 = arith.constant 5 : i32
    %9 = arith.cmpi eq, %arg2, %c5_i32 : i32
    %10 = arith.extui %9 : i1 to i32
    %c0_i32_8 = arith.constant 0 : i32
    %11 = arith.cmpi ne, %10, %c0_i32_8 : i32
    scf.if %11 {
      %c0_9 = arith.constant 0 : index
      %c0_10 = arith.constant 0 : index
      %12 = vector.load %arg7[%c0_9, %c0_10] : memref<128x128xf32, #tpu.memory_space<vmem>>, vector<128x128xf32>
      %c0_11 = arith.constant 0 : index
      %c0_12 = arith.constant 0 : index
      %13 = vector.load %arg5[%c0_11, %c0_12] : memref<1x128xf32, #tpu.memory_space<vmem>>, vector<1x128xf32>
      %14 = vector.broadcast %13 : vector<1x128xf32> to vector<128x128xf32>
      %15 = arith.addf %12, %14 : vector<128x128xf32>
      %c0_13 = arith.constant 0 : index
      %c0_14 = arith.constant 0 : index
      %16 = vector.load %arg6[%c0_13, %c0_14] : memref<128x128xf32, #tpu.memory_space<vmem>>, vector<128x128xf32>
      tpu.vector_store %arg6[%c0_13, %c0_14], %15 {strides = array<i32>} : memref<128x128xf32, #tpu.memory_space<vmem>>, vector<128x128xf32>,
    } else {
    }
    return
  }
  func.func @transform_0(%arg0: i32, %arg1: i32, %arg2: i32) -> (i32, i32) {
    %c0_i32 = arith.constant 0 : i32
    return %arg0, %arg2 : i32, i32
  }
  func.func @transform_1(%arg0: i32, %arg1: i32, %arg2: i32) -> (i32, i32) {
    %c0_i32 = arith.constant 0 : i32
    return %arg2, %arg1 : i32, i32
  }
  func.func @transform_2(%arg0: i32, %arg1: i32, %arg2: i32) -> (i32, i32) {
    %c0_i32 = arith.constant 0 : i32
    %c0_i32_0 = arith.constant 0 : i32
    return %c0_i32, %arg1 : i32, i32
  }
  func.func @transform_3(%arg0: i32, %arg1: i32, %arg2: i32) -> (i32, i32) {
    %c0_i32 = arith.constant 0 : i32
    return %arg0, %arg1 : i32, i32
  }
}

</mosaic_0001>

<llo_original>
// kernel: decoder_forward.10
$region0: #{decoder_forward.10}
  #allocation0 [shape = 'u32[]', space=smem, size = 0x4, offset = 0x4, fixed_abs, tag = 'smem constant byte address 0x4 - core index']
  #allocation1 [shape = 'u32[144,128]{1,0:T(1,128)}', space=vmem, size = 0x12000, scoped, tag = 'internal scratch']
  %s0 = inlined_call_operand.vmem [shape: f32[32,256], index: 0, kind: input, shape index: {}]
  %s1 = inlined_call_operand.vmem [shape: f32[1,256], index: 1, kind: input, shape index: {}]
  %s2 = inlined_call_operand.vmem [shape: f32[1,256], index: 2, kind: input, shape index: {}]
  %s3 = inlined_call_operand.vmem [shape: f32[32,256], index: 3, kind: output, shape index: {}]
  %s4 = sld [smem:[#allocation0]]
  $region22: #{decoder_forward.10} parent=0
    _
  %s6 = ssub.s32 1, %s4
  %s7 = scalar_select 0, %s6, %s4
  // Predicated region
  $region2: #{decoder_forward.10} parent=0 // pred_check
    _
  $region3: #{decoder_forward.10} parent=0 // pred_check_branch
    %9 = sbr.rel (0) target = $region5
  $region4: #{decoder_forward.10} parent=0 // pred_region
    _
  $region5: #{decoder_forward.10} parent=0 // pred_fallthru
    _
  // Predicated region
  $region6: #{decoder_forward.10} parent=0 // pred_check
    _
  $region7: #{decoder_forward.10} parent=0 // pred_check_branch
    %11 = sbr.rel (0) target = $region9
  $region8: #{decoder_forward.10} parent=0 // pred_region
    _
  $region9: #{decoder_forward.10} parent=0 // pred_fallthru
    _
  // Predicated region
  $region10: #{decoder_forward.10} parent=0 // pred_check
    _
  $region11: #{decoder_forward.10} parent=0 // pred_check_branch
    %13 = sbr.rel (0) target = $region13
  $region12: #{decoder_forward.10} parent=0 // pred_region
    _
  $region13: #{decoder_forward.10} parent=0 // pred_fallthru
    _
  %v14 = vld [vmem:[%s0] sm:$0xff]
  %v15 = vld [vmem:[%s0 + $0x8] sm:$0xff]
  %v16 = vld [vmem:[%s0 + $0x10] sm:$0xff]
  %v17 = vld [vmem:[%s0 + $0x18] sm:$0xff]
  %v18 = vld [vmem:[%s0 + $0x20] sm:$0xff]
  %v19 = vld [vmem:[%s0 + $0x28] sm:$0xff]
  %v20 = vld [vmem:[%s0 + $0x30] sm:$0xff]
  %v21 = vld [vmem:[%s0 + $0x38] sm:$0xff]
  %v22 = vadd.f32 %v14, %v16
  %v23 = vadd.f32 %v22, %v18
  %v24 = vadd.f32 %v23, %v20
  %v25 = vrot.slane %v24, 4
  %v26 = vadd.f32 %v24, %v25
  %v27 = vrot.slane %v26, 2
  %v28 = vadd.f32 %v26, %v27
  %v29 = vrot.slane %v28, 1
  %v30 = vadd.f32 %v28, %v29
  %v31 = vadd.f32 %v15, %v17
  %v32 = vadd.f32 %v31, %v19
  %v33 = vadd.f32 %v32, %v21
  %v34 = vrot.slane %v33, 4
  %v35 = vadd.f32 %v33, %v34
  %v36 = vrot.slane %v35, 2
  %v37 = vadd.f32 %v35, %v36
  %v38 = vrot.slane %v37, 1
  %v39 = vadd.f32 %v37, %v38
  %v40 = vrcp.pop 32.0
  %v41 = vmul.f32 %v30, %v40
  %v42 = vmul.f32 %v39, %v40
  %v43 = vsub.f32 %v14, %v41
  %v44 = vsub.f32 %v15, %v42
  %v45 = vsub.f32 %v16, %v41
  %v46 = vsub.f32 %v17, %v42
  %v47 = vsub.f32 %v18, %v41
  %v48 = vsub.f32 %v19, %v42
  %v49 = vsub.f32 %v20, %v41
  %v50 = vsub.f32 %v21, %v42
  %v51 = vmul.f32 %v43, %v43
  %v52 = vmul.f32 %v44, %v44
  %v53 = vmul.f32 %v45, %v45
  %v54 = vmul.f32 %v46, %v46
  %v55 = vmul.f32 %v47, %v47
  %v56 = vmul.f32 %v48, %v48
  %v57 = vmul.f32 %v49, %v49
  %v58 = vmul.f32 %v50, %v50
  %v59 = vadd.f32 %v51, %v53
  %v60 = vadd.f32 %v59, %v55
  %v61 = vadd.f32 %v60, %v57
  %v62 = vrot.slane %v61, 4
  %v63 = vadd.f32 %v61, %v62
  %v64 = vrot.slane %v63, 2
  %v65 = vadd.f32 %v63, %v64
  %v66 = vrot.slane %v65, 1
  %v67 = vadd.f32 %v65, %v66
  %v68 = vadd.f32 %v52, %v54
  %v69 = vadd.f32 %v68, %v56
  %v70 = vadd.f32 %v69, %v58
  %v71 = vrot.slane %v70, 4
  %v72 = vadd.f32 %v70, %v71
  %v73 = vrot.slane %v72, 2
  %v74 = vadd.f32 %v72, %v73
  %v75 = vrot.slane %v74, 1
  %v76 = vadd.f32 %v74, %v75
  %v77 = vmul.f32 %v67, %v40
  %v78 = vmul.f32 %v76, %v40
  %v79 = vadd.f32 %v77, 1e-05
  %v80 = vadd.f32 %v78, 1e-05
  %v81 = vrsqrt.pop %v79
  %v82 = vrsqrt.pop %v80
  %v83 = vmul.f32 %v43, %v81
  %v84 = vmul.f32 %v44, %v82
  %v85 = vmul.f32 %v45, %v81
  %v86 = vmul.f32 %v46, %v82
  %v87 = vmul.f32 %v47, %v81
  %v88 = vmul.f32 %v48, %v82
  %v89 = vmul.f32 %v49, %v81
  %v90 = vmul.f32 %v50, %v82
  %v91 = vld [vmem:[%s1] sm:$0x3]
  %v93 = vlaneseq
  %v94 = vshrl.u32 %v93, 7
  %v95 = vsub.s32 0, %v94
  %v96 = vrot.slane %v91, %v95
  %v97 = vlaneseq
  %v98 = vshrl.u32 %v97, 7
  %v99 = vsub.s32 1, %v98
  %v100 = vrot.slane %v91, %v99
  %v103 = vmul.f32 %v83, %v96
  %v104 = vmul.f32 %v84, %v100
  %v105 = vmul.f32 %v85, %v96
  %v106 = vmul.f32 %v86, %v100
  %v107 = vmul.f32 %v87, %v96
  %v108 = vmul.f32 %v88, %v100
  %v109 = vmul.f32 %v89, %v96
  %v110 = vmul.f32 %v90, %v100
  %v111 = vld [vmem:[%s2] sm:$0x3]
  %v113 = vlaneseq
  %v114 = vshrl.u32 %v113, 7
  %v115 = vsub.s32 0, %v114
  %v116 = vrot.slane %v111, %v115
  %v117 = vlaneseq
  %v118 = vshrl.u32 %v117, 7
  %v119 = vsub.s32 1, %v118
  %v120 = vrot.slane %v111, %v119
  %v123 = vadd.f32 %v103, %v116
  %v124 = vadd.f32 %v104, %v120
  %v125 = vadd.f32 %v105, %v116
  %v126 = vadd.f32 %v106, %v120
  %v127 = vadd.f32 %v107, %v116
  %v128 = vadd.f32 %v108, %v120
  %v129 = vadd.f32 %v109, %v116
  %v130 = vadd.f32 %v110, %v120
  %v131 = vmax.f32 %v123, 0.0
  %v132 = vmax.f32 %v124, 0.0
  %v133 = vmax.f32 %v125, 0.0
  %v134 = vmax.f32 %v126, 0.0
  %v135 = vmax.f32 %v127, 0.0
  %v136 = vmax.f32 %v128, 0.0
  %v137 = vmax.f32 %v129, 0.0
  %v138 = vmax.f32 %v130, 0.0
  %139 = vst [vmem:[%s3] sm:$0xff] %v131
  %140 = vst [vmem:[%s3 + $0x8] sm:$0xff] %v132
  %141 = vst [vmem:[%s3 + $0x10] sm:$0xff] %v133
  %142 = vst [vmem:[%s3 + $0x18] sm:$0xff] %v134
  %143 = vst [vmem:[%s3 + $0x20] sm:$0xff] %v135
  %144 = vst [vmem:[%s3 + $0x28] sm:$0xff] %v136
  %145 = vst [vmem:[%s3 + $0x30] sm:$0xff] %v137
  %146 = vst [vmem:[%s3 + $0x38] sm:$0xff] %v138
  // Predicated region
  $region14: #{decoder_forward.10} parent=0 // pred_check
    _
  $region15: #{decoder_forward.10} parent=0 // pred_check_branch
    %148 = sbr.rel (0) target = $region17
  $region16: #{decoder_forward.10} parent=0 // pred_region
    _
  $region17: #{decoder_forward.10} parent=0 // pred_fallthru
    _
  // Predicated region
  $region18: #{decoder_forward.10} parent=0 // pred_check
    _
  $region19: #{decoder_forward.10} parent=0 // pred_check_branch
    %150 = sbr.rel (0) target = $region21
  $region20: #{decoder_forward.10} parent=0 // pred_region
    _
  $region21: #{decoder_forward.10} parent=0 // pred_fallthru
    _

// kernel: decoder_forward.11
$region0: #{decoder_forward.11}
  #allocation0 [shape = 'u32[]', space=smem, size = 0x4, offset = 0x4, fixed_abs, tag = 'smem constant byte address 0x4 - core index']
  #allocation1 [shape = 'u32[144,128]{1,0:T(1,128)}', space=vmem, size = 0x12000, scoped, tag = 'internal scratch']
  #allocation2 [shape = 'f32[32,256]{1,0:T(8,128)}', space=vmem, size = 0x8000, scoped, tag = 'scratch operand']
  %s0 = inlined_call_operand.vmem [shape: bf16[32,2304], index: 0, kind: input, shape index: {}]
  %s1 = inlined_call_operand.vmem [shape: bf16[2304,256], index: 1, kind: input, shape index: {}]
  %s2 = inlined_call_operand.vmem [shape: f32[1,256], index: 2, kind: input, shape index: {}]
  %s3 = inlined_call_operand.vmem [shape: f32[32,256], index: 3, kind: output, shape index: {}]
  %s4 = sld [smem:[#allocation0]]
  $region79: #{decoder_forward.11} parent=0
    _
  %s6 = ssub.s32 1, %s4
  %s7 = scalar_select 0, %s6, %s4
  $region1: #{decoder_forward.11} parent=0
    #allocation3 [shape = 'u8[49152]{0}', space=vmem, size = 0xc000, scoped, tag = 'input window, operand 0']
    loop: start=0, step=1, limit=8
    $region2: #{decoder_forward.11} parent=1 // loop_pre_header
      _
    $region3: #{decoder_forward.11} parent=1 // loop_header
      %s9 = sphi 0, %s13
      %p10 = scmp.ge.s32.totalorder %s9, 8
      %s16 = sphi 0, %s35
      %s17 = sphi 0, %s31
      %s18 = sphi 0, %s27
      %s19 = sphi 0, %s16
      %s20 = sphi 0, %s17
      %s21 = sphi 0, %s18
      %s22 = sphi 0, %s19
      %s23 = sphi 0, %s20
      %s24 = sphi 0, %s21
      %s40 = sphi 0, %s42
      %s43 = sphi 0, %s40
      %s44 = sphi 0, %s43
      %s60 = sphi 0, %s44
      %s68 = sphi 0, %s70
      %s71 = sphi 0, %s68
      %s72 = sphi 0, %s71
      %s88 = sphi 0, %s72
      %s94 = sphi 0, %s96
      %s97 = sphi 0, %s94
      %s98 = sphi 0, %s97
      %s114 = sphi 0, %s98
      %s122 = sphi 0, %s124
      %s125 = sphi 0, %s122
      %s126 = sphi 0, %s125
      %s142 = sphi 0, %s126
    $region4: #{decoder_forward.11} parent=1 // loop_header_branch
      %12 = sbr.rel (%p10) target = $region8
    $region5: #{decoder_forward.11} parent=1 // loop_body
      %s14 = ssub.s32 %s9, 1
      %s15 = ssub.s32 %s9, 2
      %s25 = sadd.s32 1, %s18
      %p26 = scmp.ge.s32.totalorder %s25, 6
      %s27 = scalar_select %p26, 0, %s25
      %s28 = sadd.s32 1, %s17
      %s29 = scalar_select %p26, %s28, %s17
      %p30 = scmp.ge.s32.totalorder %s29, 1
      %s31 = scalar_select %p30, 0, %s29
      %s32 = sadd.s32 1, %s16
      %s33 = scalar_select %p30, %s32, %s16
      %p34 = scmp.ge.s32.totalorder %s33, 1
      %s35 = scalar_select %p34, 0, %s33
      %s36 = ssub.s32 %s16, %s35
      %s37 = ssub.s32 %s18, %s27
      %s38 = sor.u32 %s36, %s37
      %p39 = scmp.eq.s32.totalorder %s38, 0
      %s41 = sadd.s32 %s40, 1
      %s42 = scalar_select %p39, %s40, %s41
      %p45 = pneg %p39
      %p46 = scmp.eq.s32.totalorder %s9, 5
      %p47 = por %p45, %p46
      %p48 = scmp.ne.s32.totalorder %s40, %s43
      %p49 = scmp.eq.s32.totalorder %s9, 0
      %p50 = por %p48, %p49
      %p51 = scmp.ne.s32.totalorder %s40, %s43
      %p52 = scmp.eq.s32.totalorder %s14, 5
      %p53 = por %p51, %p52
      %p54 = scmp.ne.s32.totalorder %s43, %s44
      %p55 = scmp.eq.s32.totalorder %s14, 0
      %p56 = por %p54, %p55
      %p57 = scmp.ne.s32.totalorder %s43, %s44
      %p58 = scmp.eq.s32.totalorder %s15, 5
      %p59 = por %p57, %p58
      %p61 = scmp.ne.s32.totalorder %s44, %s60
      %p62 = scmp.eq.s32.totalorder %s15, 0
      %p63 = por %p61, %p62
      %s64 = ssub.s32 %s18, %s27
      %s65 = ssub.s32 %s17, %s31
      %s66 = sor.u32 %s64, %s65
      %p67 = scmp.eq.s32.totalorder %s66, 0
      %s69 = sadd.s32 %s68, 1
      %s70 = scalar_select %p67, %s68, %s69
      %p73 = pneg %p67
      %p74 = scmp.eq.s32.totalorder %s9, 5
      %p75 = por %p73, %p74
      %p76 = scmp.ne.s32.totalorder %s68, %s71
      %p77 = scmp.eq.s32.totalorder %s9, 0
      %p78 = por %p76, %p77
      %p79 = scmp.ne.s32.totalorder %s68, %s71
      %p80 = scmp.eq.s32.totalorder %s14, 5
      %p81 = por %p79, %p80
      %p82 = scmp.ne.s32.totalorder %s71, %s72
      %p83 = scmp.eq.s32.totalorder %s14, 0
      %p84 = por %p82, %p83
      %p85 = scmp.ne.s32.totalorder %s71, %s72
      %p86 = scmp.eq.s32.totalorder %s15, 5
      %p87 = por %p85, %p86
      %p89 = scmp.ne.s32.totalorder %s72, %s88
      %p90 = scmp.eq.s32.totalorder %s15, 0
      %p91 = por %p89, %p90
      %s92 = ssub.s32 %s17, %s31
      %p93 = scmp.eq.s32.totalorder %s92, 0
      %s95 = sadd.s32 %s94, 1
      %s96 = scalar_select %p93, %s94, %s95
      %p99 = pneg %p93
      %p100 = scmp.eq.s32.totalorder %s9, 5
      %p101 = por %p99, %p100
      %p102 = scmp.ne.s32.totalorder %s94, %s97
      %p103 = scmp.eq.s32.totalorder %s9, 0
      %p104 = por %p102, %p103
      %p105 = scmp.ne.s32.totalorder %s94, %s97
      %p106 = scmp.eq.s32.totalorder %s14, 5
      %p107 = por %p105, %p106
      %p108 = scmp.ne.s32.totalorder %s97, %s98
      %p109 = scmp.eq.s32.totalorder %s14, 0
      %p110 = por %p108, %p109
      %p111 = scmp.ne.s32.totalorder %s97, %s98
      %p112 = scmp.eq.s32.totalorder %s15, 5
      %p113 = por %p111, %p112
      %p115 = scmp.ne.s32.totalorder %s98, %s114
      %p116 = scmp.eq.s32.totalorder %s15, 0
      %p117 = por %p115, %p116
      %s118 = ssub.s32 %s16, %s35
      %s119 = ssub.s32 %s17, %s31
      %s120 = sor.u32 %s118, %s119
      %p121 = scmp.eq.s32.totalorder %s120, 0
      %s123 = sadd.s32 %s122, 1
      %s124 = scalar_select %p121, %s122, %s123
      %p127 = pneg %p121
      %p128 = scmp.eq.s32.totalorder %s9, 5
      %p129 = por %p127, %p128
      %p130 = scmp.ne.s32.totalorder %s122, %s125
      %p131 = scmp.eq.s32.totalorder %s9, 0
      %p132 = por %p130, %p131
      %p133 = scmp.ne.s32.totalorder %s122, %s125
      %p134 = scmp.eq.s32.totalorder %s14, 5
      %p135 = por %p133, %p134
      %p136 = scmp.ne.s32.totalorder %s125, %s126
      %p137 = scmp.eq.s32.totalorder %s14, 0
      %p138 = por %p136, %p137
      %p139 = scmp.ne.s32.totalorder %s125, %s126
      %p140 = scmp.eq.s32.totalorder %s15, 5
      %p141 = por %p139, %p140
      %p143 = scmp.ne.s32.totalorder %s126, %s142
      %p144 = scmp.eq.s32.totalorder %s15, 0
      %p145 = por %p143, %p144
      %p146 = scmp.le.s32.totalorder 1, %s9
      %p147 = scmp.lt.s32.totalorder %s9, 7
      %p148 = pnand %p146, %p147
      %p149 = pneg %p148
      // Predicated region
      $region9: #{decoder_forward.11} parent=5 // pred_check
        _
      $region10: #{decoder_forward.11} parent=5 // pred_check_branch
        %151 = sbr.rel (%p148) target = $region12
      $region11: #{decoder_forward.11} parent=5 // pred_region
        %s152 = ssub.s32 %s9, 1
        // Predicated region
        $region13: #{decoder_forward.11} parent=11 // pred_check
          %p153 = pneg %p110
        $region14: #{decoder_forward.11} parent=11 // pred_check_branch
          %155 = sbr.rel (%p153) target = $region16
        $region15: #{decoder_forward.11} parent=11 // pred_region
          %s156 = smul.u32 2, %s20
          %p157 = scmp.lt.s32.totalorder %s156, 1
          %s158 = scalar_select %p157, %s156, 1
          %s159 = scalar_lea.vmem %s2, %s158
          %s160 = smul.u32 2, %s20
        $region16: #{decoder_forward.11} parent=11 // pred_fallthru
          _
      $region12: #{decoder_forward.11} parent=5 // pred_fallthru
        _
      %p161 = scmp.lt.s32.totalorder %s9, 6
      // Predicated region
      $region17: #{decoder_forward.11} parent=5 // pred_check
        %p162 = pneg %p161
      $region18: #{decoder_forward.11} parent=5 // pred_check_branch
        %164 = sbr.rel (%p162) target = $region20
      $region19: #{decoder_forward.11} parent=5 // pred_region
        // Predicated region
        $region21: #{decoder_forward.11} parent=19 // pred_check
          %p165 = pneg %p50
        $region22: #{decoder_forward.11} parent=19 // pred_check_branch
          %167 = sbr.rel (%p165) target = $region24
        $region23: #{decoder_forward.11} parent=19 // pred_region
          %s168 = sand.u32 %s40, 1
          %s169 = sand.u32 %s40, 1
          %s170 = smul.addr %s169, 48
          %s171 = scalar_lea.vmem [#allocation3], %s170
          %s172 = smul.u32 4, %s16
          %s173 = smul.u32 3, %s18
          %s174 = smul.addr %s172, 18
          %s175 = sadd.s32 %s173, %s174
          %s176 = smul.addr %s175, 4
          %s177 = scalar_lea.vmem %s0, %s176
          // Predicated region
          $region25: #{decoder_forward.11} parent=23 // pred_check
            _
          $region26: #{decoder_forward.11} parent=23 // pred_check_branch
            %179 = sbr.rel (0) target = $region28
          $region27: #{decoder_forward.11} parent=23 // pred_region
            // Predicated region
            $region29: #{decoder_forward.11} parent=27 // pred_check
              _
            $region30: #{decoder_forward.11} parent=27 // pred_check_branch
              %181 = sbr.rel (0) target = $region32
            $region31: #{decoder_forward.11} parent=27 // pred_region
              %s182 = scalar_lea.vmem %s177, 8
              %s183 = scalar_lea.vmem %s171, 8 [#allocation3]
              loop: start=0, step=1, limit=1
              $region33: #{decoder_forward.11} parent=31 // loop_pre_header
                _
              $region34: #{decoder_forward.11} parent=31 // loop_header
                %s185 = sphi 0, %s189
                %p186 = scmp.ge.s32.totalorder %s185, 1
                %s190 = sphi %s177, %s177
                %s191 = sphi %s171, %s171
              $region35: #{decoder_forward.11} parent=31 // loop_header_branch
                %188 = sbr.rel (%p186) target = $region39
              $region36: #{decoder_forward.11} parent=31 // loop_body
                %v192 = vld [vmem:[%s190] sm:$0xff]
                %193 = vst [vmem:[%s191] sm:$0xff] %v192
                %v194 = vld [vmem:[%s190 + $0x48] sm:$0xff]
                %195 = vst [vmem:[%s191 + $0xc] sm:$0xff] %v194
                %v196 = vld [vmem:[%s190 + $0x90] sm:$0xff]
                %197 = vst [vmem:[%s191 + $0x18] sm:$0xff] %v196
                %v198 = vld [vmem:[%s190 + $0xd8] sm:$0xff]
                %199 = vst [vmem:[%s191 + $0x24] sm:$0xff] %v198
              $region37: #{decoder_forward.11} parent=31 // loop_footer
                %s189 = sadd.s32 1, %s185
              $region38: #{decoder_forward.11} parent=31 // loop_footer_branch
                %184 = sbr.rel target = $region34
              $region39: #{decoder_forward.11} parent=31 // loop_exit
                _
              loop: start=0, step=1, limit=1
              $region40: #{decoder_forward.11} parent=31 // loop_pre_header
                _
              $region41: #{decoder_forward.11} parent=31 // loop_header
                %s202 = sphi 0, %s206
                %p203 = scmp.ge.s32.totalorder %s202, 1
                %s207 = sphi %s182, %s182
                %s208 = sphi %s183, %s183
              $region42: #{decoder_forward.11} parent=31 // loop_header_branch
                %205 = sbr.rel (%p203) target = $region46
              $region43: #{decoder_forward.11} parent=31 // loop_body
                %v209 = vld [vmem:[%s207] sm:$0xf]
                %210 = vst [vmem:[%s208] sm:$0xf] %v209
                %v211 = vld [vmem:[%s207 + $0x48] sm:$0xf]
                %212 = vst [vmem:[%s208 + $0xc] sm:$0xf] %v211
                %v213 = vld [vmem:[%s207 + $0x90] sm:$0xf]
                %214 = vst [vmem:[%s208 + $0x18] sm:$0xf] %v213
                %v215 = vld [vmem:[%s207 + $0xd8] sm:$0xf]
                %216 = vst [vmem:[%s208 + $0x24] sm:$0xf] %v215
              $region44: #{decoder_forward.11} parent=31 // loop_footer
                %s206 = sadd.s32 1, %s202
              $region45: #{decoder_forward.11} parent=31 // loop_footer_branch
                %201 = sbr.rel target = $region41
              $region46: #{decoder_forward.11} parent=31 // loop_exit
                _
            $region32: #{decoder_forward.11} parent=27 // pred_fallthru
              _
          $region28: #{decoder_forward.11} parent=23 // pred_fallthru
            _
          %217 = vnop
        $region24: #{decoder_forward.11} parent=19 // pred_fallthru
          _
        // Predicated region
        $region47: #{decoder_forward.11} parent=19 // pred_check
          %p218 = pneg %p78
        $region48: #{decoder_forward.11} parent=19 // pred_check_branch
          %220 = sbr.rel (%p218) target = $region50
        $region49: #{decoder_forward.11} parent=19 // pred_region
          %s221 = smul.u32 48, %s18
          %s222 = smul.u32 2, %s17
          %p223 = scmp.lt.s32.totalorder %s221, 287
          %s224 = scalar_select %p223, %s221, 287
          %p225 = scmp.lt.s32.totalorder %s222, 1
          %s226 = scalar_select %p225, %s222, 1
          %s227 = smul.addr %s224, 2
          %s228 = sadd.s32 %s226, %s227
          %s229 = smul.addr %s228, 4
          %s230 = scalar_lea.vmem %s1, %s229
          %s231 = smul.u32 48, %s18
          %s232 = smul.u32 2, %s17
        $region50: #{decoder_forward.11} parent=19 // pred_fallthru
          _
      $region20: #{decoder_forward.11} parent=5 // pred_fallthru
        _
      %p233 = scmp.le.s32.totalorder 1, %s9
      %p234 = scmp.lt.s32.totalorder %s9, 7
      %p235 = pnand %p233, %p234
      %p236 = pneg %p235
      // Predicated region
      $region51: #{decoder_forward.11} parent=5 // pred_check
        _
      $region52: #{decoder_forward.11} parent=5 // pred_check_branch
        %238 = sbr.rel (%p235) target = $region54
      $region53: #{decoder_forward.11} parent=5 // pred_region
        %s239 = ssub.s32 %s9, 1
        %s240 = sand.u32 %s43, 1
        %s241 = sand.u32 %s43, 1
        %s242 = smul.addr %s241, 48
        %s243 = scalar_lea.vmem [#allocation3], %s242
        // Predicated region
        $region55: #{decoder_forward.11} parent=53 // pred_check
          %p244 = pneg %p56
        $region56: #{decoder_forward.11} parent=53 // pred_check_branch
          %246 = sbr.rel (%p244) target = $region58
        $region57: #{decoder_forward.11} parent=53 // pred_region
          _
        $region58: #{decoder_forward.11} parent=53 // pred_fallthru
          _
        %s247 = sand.u32 %s43, 1
        %s248 = sand.u32 %s43, 1
        %s249 = smul.addr %s248, 48
        %s250 = scalar_lea.vmem [#allocation3], %s249
        %p251 = pneg %p56
        %p252 = pneg %p53
        %s253 = smul.u32 48, %s21
        %s254 = smul.u32 2, %s20
        %p255 = scmp.lt.s32.totalorder %s253, 287
        %s256 = scalar_select %p255, %s253, 287
        %p257 = scmp.lt.s32.totalorder %s254, 1
        %s258 = scalar_select %p257, %s254, 1
        %s259 = smul.addr %s256, 2
        %s260 = sadd.s32 %s258, %s259
        %s261 = smul.addr %s260, 4
        %s262 = scalar_lea.vmem %s1, %s261
        %p263 = pneg %p84
        %p264 = pneg %p81
        %s265 = smul.u32 2, %s20
        %p266 = scmp.lt.s32.totalorder %s265, 1
        %s267 = scalar_select %p266, %s265, 1
        %s268 = scalar_lea.vmem %s2, %s267
        %p269 = pneg %p110
        %p270 = pneg %p107
        %p271 = pneg %p138
        %p272 = pneg %p135
        %s273 = smul.u32 4, %s19
        %s274 = smul.u32 2, %s20
        %p275 = scmp.lt.s32.totalorder %s273, 3
        %s276 = scalar_select %p275, %s273, 3
        %p277 = scmp.lt.s32.totalorder %s274, 1
        %s278 = scalar_select %p277, %s274, 1
        %s279 = smul.addr %s276, 2
        %s280 = sadd.s32 %s278, %s279
        %s281 = smul.addr %s280, 8
        %s282 = scalar_lea.vmem %s3, %s281
        %s283 = smul.u32 4, %s19
        %s284 = smul.u32 3, %s21
        %s285 = smul.u32 48, %s21
        %s286 = smul.u32 2, %s20
        %p287 = scmp.lt.s32.totalorder %s285, 287
        %s288 = scalar_select %p287, %s285, 287
        %p289 = scmp.lt.s32.totalorder %s286, 1
        %s290 = scalar_select %p289, %s286, 1
        %s291 = smul.addr %s288, 2
        %s292 = sadd.s32 %s290, %s291
        %s293 = smul.addr %s292, 4
        %s294 = scalar_lea.vmem %s1, %s293
        %s295 = smul.u32 48, %s21
        %s296 = smul.u32 2, %s20
        %s297 = smul.u32 2, %s20
        %p298 = scmp.lt.s32.totalorder %s297, 1
        %s299 = scalar_select %p298, %s297, 1
        %s300 = scalar_lea.vmem %s2, %s299
        %s301 = smul.u32 2, %s20
        %s302 = smul.u32 4, %s19
        %s303 = smul.u32 2, %s20
        %p304 = scmp.lt.s32.totalorder %s302, 3
        %s305 = scalar_select %p304, %s302, 3
        %p306 = scmp.lt.s32.totalorder %s303, 1
        %s307 = scalar_select %p306, %s303, 1
        %s308 = smul.addr %s305, 2
        %s309 = sadd.s32 %s307, %s308
        %s310 = smul.addr %s309, 8
        %s311 = scalar_lea.vmem %s3, %s310
        %s312 = smul.u32 4, %s19
        %s313 = smul.u32 2, %s20
        %p315 = scmp.eq.s32.totalorder %s21, 0
        // Predicated region
        $region59: #{decoder_forward.11} parent=53 // pred_check
          %p316 = pneg %p315
        $region60: #{decoder_forward.11} parent=53 // pred_check_branch
          %318 = sbr.rel (%p316) target = $region62
        $region61: #{decoder_forward.11} parent=53 // pred_region
          %319 = vst [vmem:[#allocation2] sm:$0xff] 0.0
          %320 = vst [vmem:[#allocation2 + $0x8] sm:$0xff] 0.0
          %321 = vst [vmem:[#allocation2 + $0x10] sm:$0xff] 0.0
          %322 = vst [vmem:[#allocation2 + $0x18] sm:$0xff] 0.0
          %323 = vst [vmem:[#allocation2 + $0x20] sm:$0xff] 0.0
          %324 = vst [vmem:[#allocation2 + $0x28] sm:$0xff] 0.0
          %325 = vst [vmem:[#allocation2 + $0x30] sm:$0xff] 0.0
          %326 = vst [vmem:[#allocation2 + $0x38] sm:$0xff] 0.0
        $region62: #{decoder_forward.11} parent=53 // pred_fallthru
          _
        %v327 = vld [vmem:[#allocation2] sm:$0xff]
        %v328 = vld [vmem:[#allocation2 + $0x8] sm:$0xff]
        %v329 = vld [vmem:[#allocation2 + $0x10] sm:$0xff]
        %v330 = vld [vmem:[#allocation2 + $0x18] sm:$0xff]
        %v331 = vld [vmem:[#allocation2 + $0x20] sm:$0xff]
        %v332 = vld [vmem:[#allocation2 + $0x28] sm:$0xff]
        %v333 = vld [vmem:[#allocation2 + $0x30] sm:$0xff]
        %v334 = vld [vmem:[#allocation2 + $0x38] sm:$0xff]
        %v335 = vld [vmem:[%s243] sm:$0xff]
        %v336 = vld [vmem:[%s243 + $0x8] sm:$0xf]
        %v337 = vld [vmem:[%s243 + $0xc] sm:$0xff]
        %v338 = vld [vmem:[%s243 + $0x14] sm:$0xf]
        %v339 = vld [vmem:[%s243 + $0x18] sm:$0xff]
        %v340 = vld [vmem:[%s243 + $0x20] sm:$0xf]
        %v341 = vld [vmem:[%s243 + $0x24] sm:$0xff]
        %v342 = vld [vmem:[%s243 + $0x2c] sm:$0xf]
        %v343 = vld [vmem:[%s294] sm:$0xff]
        %v344 = vld [vmem:[%s294 + $0x8] sm:$0xff]
        %v345 = vld [vmem:[%s294 + $0x10] sm:$0xff]
        %v346 = vld [vmem:[%s294 + $0x18] sm:$0xff]
        %v347 = vld [vmem:[%s294 + $0x20] sm:$0xff]
        %v348 = vld [vmem:[%s294 + $0x28] sm:$0xff]
        %v349 = vld [vmem:[%s294 + $0x30] sm:$0xff]
        %v350 = vld [vmem:[%s294 + $0x38] sm:$0xff]
        %v351 = vld [vmem:[%s294 + $0x40] sm:$0xff]
        %v352 = vld [vmem:[%s294 + $0x48] sm:$0xff]
        %v353 = vld [vmem:[%s294 + $0x50] sm:$0xff]
        %v354 = vld [vmem:[%s294 + $0x58] sm:$0xff]
        %v355 = vld [vmem:[%s294 + $0x60] sm:$0xff]
        %v356 = vld [vmem:[%s294 + $0x68] sm:$0xff]
        %v357 = vld [vmem:[%s294 + $0x70] sm:$0xff]
        %v358 = vld [vmem:[%s294 + $0x78] sm:$0xff]
        %v359 = vld [vmem:[%s294 + $0x80] sm:$0xff]
        %v360 = vld [vmem:[%s294 + $0x88] sm:$0xff]
        %v361 = vld [vmem:[%s294 + $0x90] sm:$0xff]
        %v362 = vld [vmem:[%s294 + $0x98] sm:$0xff]
        %v363 = vld [vmem:[%s294 + $0xa0] sm:$0xff]
        %v364 = vld [vmem:[%s294 + $0xa8] sm:$0xff]
        %v365 = vld [vmem:[%s294 + $0xb0] sm:$0xff]
        %v366 = vld [vmem:[%s294 + $0xb8] sm:$0xff]
        %v367 = vld [vmem:[%s294 + $0xc0] sm:$0xff]
        %v368 = vld [vmem:[%s294 + $0xc8] sm:$0xff]
        %v369 = vld [vmem:[%s294 + $0xd0] sm:$0xff]
        %v370 = vld [vmem:[%s294 + $0xd8] sm:$0xff]
        %v371 = vld [vmem:[%s294 + $0xe0] sm:$0xff]
        %v372 = vld [vmem:[%s294 + $0xe8] sm:$0xff]
        %v373 = vld [vmem:[%s294 + $0xf0] sm:$0xff]
        %v374 = vld [vmem:[%s294 + $0xf8] sm:$0xff]
        %v375 = vld [vmem:[%s294 + $0x100] sm:$0xff]
        %v376 = vld [vmem:[%s294 + $0x108] sm:$0xff]
        %v377 = vld [vmem:[%s294 + $0x110] sm:$0xff]
        %v378 = vld [vmem:[%s294 + $0x118] sm:$0xff]
        %v379 = vld [vmem:[%s294 + $0x120] sm:$0xff]
        %v380 = vld [vmem:[%s294 + $0x128] sm:$0xff]
        %v381 = vld [vmem:[%s294 + $0x130] sm:$0xff]
        %v382 = vld [vmem:[%s294 + $0x138] sm:$0xff]
        %v383 = vld [vmem:[%s294 + $0x140] sm:$0xff]
        %v384 = vld [vmem:[%s294 + $0x148] sm:$0xff]
        %v385 = vld [vmem:[%s294 + $0x150] sm:$0xff]
        %v386 = vld [vmem:[%s294 + $0x158] sm:$0xff]
        %v387 = vld [vmem:[%s294 + $0x160] sm:$0xff]
        %v388 = vld [vmem:[%s294 + $0x168] sm:$0xff]
        %v389 = vld [vmem:[%s294 + $0x170] sm:$0xff]
        %v390 = vld [vmem:[%s294 + $0x178] sm:$0xff]
        %v399 = vunpack.c.l.b16 %v335
        %v400 = vunpack.c.h.b16 %v335
        %v401 = vunpack.c.l.b16 %v336
        %v402 = vunpack.c.l.b16 %v337
        %v403 = vunpack.c.h.b16 %v337
        %v404 = vunpack.c.l.b16 %v338
        %v405 = vunpack.c.l.b16 %v339
        %v406 = vunpack.c.h.b16 %v339
        %v407 = vunpack.c.l.b16 %v340
        %v408 = vunpack.c.l.b16 %v341
        %v409 = vunpack.c.h.b16 %v341
        %v410 = vunpack.c.l.b16 %v342
        %v411 = vpack.c.b16 %v402, %v399
        %v412 = vpack.c.b16 %v403, %v400
        %v413 = vpack.c.b16 %v404, %v401
        %v414 = vpack.c.b16 %v408, %v405
        %v415 = vpack.c.b16 %v409, %v406
        %v416 = vpack.c.b16 %v410, %v407
        %v471 = vunpack.c.l.b16 %v343
        %v472 = vunpack.c.h.b16 %v343
        %v473 = vunpack.c.l.b16 %v344
        %v474 = vunpack.c.h.b16 %v344
        %v475 = vunpack.c.l.b16 %v345
        %v476 = vunpack.c.h.b16 %v345
        %v477 = vunpack.c.l.b16 %v346
        %v478 = vunpack.c.h.b16 %v346
        %v479 = vunpack.c.l.b16 %v347
        %v480 = vunpack.c.h.b16 %v347
        %v481 = vunpack.c.l.b16 %v348
        %v482 = vunpack.c.h.b16 %v348
        %v483 = vunpack.c.l.b16 %v349
        %v484 = vunpack.c.h.b16 %v349
        %v485 = vunpack.c.l.b16 %v350
        %v486 = vunpack.c.h.b16 %v350
        %v487 = vunpack.c.l.b16 %v351
        %v488 = vunpack.c.h.b16 %v351
        %v489 = vunpack.c.l.b16 %v352
        %v490 = vunpack.c.h.b16 %v352
        %v491 = vunpack.c.l.b16 %v353
        %v492 = vunpack.c.h.b16 %v353
        %v493 = vunpack.c.l.b16 %v354
        %v494 = vunpack.c.h.b16 %v354
        %v495 = vunpack.c.l.b16 %v355
        %v496 = vunpack.c.h.b16 %v355
        %v497 = vunpack.c.l.b16 %v356
        %v498 = vunpack.c.h.b16 %v356
        %v499 = vunpack.c.l.b16 %v357
        %v500 = vunpack.c.h.b16 %v357
        %v501 = vunpack.c.l.b16 %v358
        %v502 = vunpack.c.h.b16 %v358
        %v503 = vunpack.c.l.b16 %v359
        %v504 = vunpack.c.h.b16 %v359
        %v505 = vunpack.c.l.b16 %v360
        %v506 = vunpack.c.h.b16 %v360
        %v507 = vunpack.c.l.b16 %v361
        %v508 = vunpack.c.h.b16 %v361
        %v509 = vunpack.c.l.b16 %v362
        %v510 = vunpack.c.h.b16 %v362
        %v511 = vunpack.c.l.b16 %v363
        %v512 = vunpack.c.h.b16 %v363
        %v513 = vunpack.c.l.b16 %v364
        %v514 = vunpack.c.h.b16 %v364
        %v515 = vunpack.c.l.b16 %v365
        %v516 = vunpack.c.h.b16 %v365
        %v517 = vunpack.c.l.b16 %v366
        %v518 = vunpack.c.h.b16 %v366
        %v519 = vunpack.c.l.b16 %v367
        %v520 = vunpack.c.h.b16 %v367
        %v521 = vunpack.c.l.b16 %v368
        %v522 = vunpack.c.h.b16 %v368
        %v523 = vunpack.c.l.b16 %v369
        %v524 = vunpack.c.h.b16 %v369
        %v525 = vunpack.c.l.b16 %v370
        %v526 = vunpack.c.h.b16 %v370
        %v527 = vunpack.c.l.b16 %v371
        %v528 = vunpack.c.h.b16 %v371
        %v529 = vunpack.c.l.b16 %v372
        %v530 = vunpack.c.h.b16 %v372
        %v531 = vunpack.c.l.b16 %v373
        %v532 = vunpack.c.h.b16 %v373
        %v533 = vunpack.c.l.b16 %v374
        %v534 = vunpack.c.h.b16 %v374
        %v535 = vunpack.c.l.b16 %v375
        %v536 = vunpack.c.h.b16 %v375
        %v537 = vunpack.c.l.b16 %v376
        %v538 = vunpack.c.h.b16 %v376
        %v539 = vunpack.c.l.b16 %v377
        %v540 = vunpack.c.h.b16 %v377
        %v541 = vunpack.c.l.b16 %v378
        %v542 = vunpack.c.h.b16 %v378
        %v543 = vunpack.c.l.b16 %v379
        %v544 = vunpack.c.h.b16 %v379
        %v545 = vunpack.c.l.b16 %v380
        %v546 = vunpack.c.h.b16 %v380
        %v547 = vunpack.c.l.b16 %v381
        %v548 = vunpack.c.h.b16 %v381
        %v549 = vunpack.c.l.b16 %v382
        %v550 = vunpack.c.h.b16 %v382
        %v551 = vunpack.c.l.b16 %v383
        %v552 = vunpack.c.h.b16 %v383
        %v553 = vunpack.c.l.b16 %v384
        %v554 = vunpack.c.h.b16 %v384
        %v555 = vunpack.c.l.b16 %v385
        %v556 = vunpack.c.h.b16 %v385
        %v557 = vunpack.c.l.b16 %v386
        %v558 = vunpack.c.h.b16 %v386
        %v559 = vunpack.c.l.b16 %v387
        %v560 = vunpack.c.h.b16 %v387
        %v561 = vunpack.c.l.b16 %v388
        %v562 = vunpack.c.h.b16 %v388
        %v563 = vunpack.c.l.b16 %v389
        %v564 = vunpack.c.h.b16 %v389
        %v565 = vunpack.c.l.b16 %v390
        %v566 = vunpack.c.h.b16 %v390
        %v567 = vpack.c.b16 %v473, %v471
        %v568 = vpack.c.b16 %v474, %v472
        %v569 = vpack.c.b16 %v477, %v475
        %v570 = vpack.c.b16 %v478, %v476
        %v571 = vpack.c.b16 %v481, %v479
        %v572 = vpack.c.b16 %v482, %v480
        %v573 = vpack.c.b16 %v485, %v483
        %v574 = vpack.c.b16 %v486, %v484
        %v575 = vpack.c.b16 %v489, %v487
        %v576 = vpack.c.b16 %v490, %v488
        %v577 = vpack.c.b16 %v493, %v491
        %v578 = vpack.c.b16 %v494, %v492
        %v579 = vpack.c.b16 %v497, %v495
        %v580 = vpack.c.b16 %v498, %v496
        %v581 = vpack.c.b16 %v501, %v499
        %v582 = vpack.c.b16 %v502, %v500
        %v583 = vpack.c.b16 %v505, %v503
        %v584 = vpack.c.b16 %v506, %v504
        %v585 = vpack.c.b16 %v509, %v507
        %v586 = vpack.c.b16 %v510, %v508
        %v587 = vpack.c.b16 %v513, %v511
        %v588 = vpack.c.b16 %v514, %v512
        %v589 = vpack.c.b16 %v517, %v515
        %v590 = vpack.c.b16 %v518, %v516
        %v591 = vpack.c.b16 %v521, %v519
        %v592 = vpack.c.b16 %v522, %v520
        %v593 = vpack.c.b16 %v525, %v523
        %v594 = vpack.c.b16 %v526, %v524
        %v595 = vpack.c.b16 %v529, %v527
        %v596 = vpack.c.b16 %v530, %v528
        %v597 = vpack.c.b16 %v533, %v531
        %v598 = vpack.c.b16 %v534, %v532
        %v599 = vpack.c.b16 %v537, %v535
        %v600 = vpack.c.b16 %v538, %v536
        %v601 = vpack.c.b16 %v541, %v539
        %v602 = vpack.c.b16 %v542, %v540
        %v603 = vpack.c.b16 %v545, %v543
        %v604 = vpack.c.b16 %v546, %v544
        %v605 = vpack.c.b16 %v549, %v547
        %v606 = vpack.c.b16 %v550, %v548
        %v607 = vpack.c.b16 %v553, %v551
        %v608 = vpack.c.b16 %v554, %v552
        %v609 = vpack.c.b16 %v557, %v555
        %v610 = vpack.c.b16 %v558, %v556
        %v611 = vpack.c.b16 %v561, %v559
        %v612 = vpack.c.b16 %v562, %v560
        %v613 = vpack.c.b16 %v565, %v563
        %v614 = vpack.c.b16 %v566, %v564
        %663 = vmatprep.subr.bf16.mxu0 %v568
        %664 = vmatpush1.bf16.msra.mxu0 %v567
        %665 = vmatprep.subr.bf16.mxu0 %v570
        %666 = vmatpush1.bf16.msra.mxu0 %v569
        %667 = vmatprep.subr.bf16.mxu0 %v572
        %668 = vmatpush1.bf16.msra.mxu0 %v571
        %669 = vmatprep.subr.bf16.mxu0 %v574
        %670 = vmatpush1.bf16.msra.mxu0 %v573
        %671 = vmatprep.subr.bf16.mxu0 %v576
        %672 = vmatpush1.bf16.msra.mxu0 %v575
        %673 = vmatprep.subr.bf16.mxu0 %v578
        %674 = vmatpush1.bf16.msra.mxu0 %v577
        %675 = vmatprep.subr.bf16.mxu0 %v580
        %676 = vmatpush1.bf16.msra.mxu0 %v579
        %677 = vmatprep.subr.bf16.mxu0 %v582
        %678 = vmatpush1.bf16.msra.mxu0 %v581
        %679 = vmatprep.subr.bf16.mxu0 %v584
        %680 = vmatpush1.bf16.msra.mxu0 %v583
        %681 = vmatprep.subr.bf16.mxu0 %v586
        %682 = vmatpush1.bf16.msra.mxu0 %v585
        %683 = vmatprep.subr.bf16.mxu0 %v588
        %684 = vmatpush1.bf16.msra.mxu0 %v587
        %685 = vmatprep.subr.bf16.mxu0 %v590
        %686 = vmatpush1.bf16.msra.mxu0 %v589
        %687 = vmatprep.subr.bf16.mxu0 %v592
        %688 = vmatpush1.bf16.msra.mxu0 %v591
        %689 = vmatprep.subr.bf16.mxu0 %v594
        %690 = vmatpush1.bf16.msra.mxu0 %v593
        %691 = vmatprep.subr.bf16.mxu0 %v596
        %692 = vmatpush1.bf16.msra.mxu0 %v595
        %693 = vmatprep.subr.bf16.mxu0 %v598
        %694 = vmatpush1.bf16.msra.mxu0 %v597
        %695 = vmatprep.mubr.bf16.mxu0 %v412
        %696 = vmatmul.mubr.bf16.gmra.mrb[0].mxu0 %v411
        %v697 = vpop.f32.mrb[0].mxu0
        %v698 = vadd.f32 0.0, %v697
        %v699 = vpop.f32.mrb[0].mxu0
        %v700 = vadd.f32 0.0, %v699
        %v701 = vpop.f32.mrb[0].mxu0
        %v702 = vadd.f32 0.0, %v701
        %v703 = vpop.f32.mrb[0].mxu0
        %v704 = vadd.f32 0.0, %v703
        %705 = vmatprep.mubr.bf16.mxu0 %v415
        %706 = vmatmul.mubr.bf16.gmra.mrb[0].mxu0 %v414
        %v707 = vpop.f32.mrb[0].mxu0
        %v708 = vadd.f32 0.0, %v707
        %v709 = vpop.f32.mrb[0].mxu0
        %v710 = vadd.f32 0.0, %v709
        %v711 = vpop.f32.mrb[0].mxu0
        %v712 = vadd.f32 0.0, %v711
        %v713 = vpop.f32.mrb[0].mxu0
        %v714 = vadd.f32 0.0, %v713
        %715 = vdwg.mxu0
        %716 = vmatprep.subr.bf16.mxu0 %v600
        %717 = vmatpush1.bf16.msra.mxu0 %v599
        %718 = vmatprep.subr.bf16.mxu0 %v602
        %719 = vmatpush1.bf16.msra.mxu0 %v601
        %720 = vmatprep.subr.bf16.mxu0 %v604
        %721 = vmatpush1.bf16.msra.mxu0 %v603
        %722 = vmatprep.subr.bf16.mxu0 %v606
        %723 = vmatpush1.bf16.msra.mxu0 %v605
        %724 = vmatprep.subr.bf16.mxu0 %v608
        %725 = vmatpush1.bf16.msra.mxu0 %v607
        %726 = vmatprep.subr.bf16.mxu0 %v610
        %727 = vmatpush1.bf16.msra.mxu0 %v609
        %728 = vmatprep.subr.bf16.mxu0 %v612
        %729 = vmatpush1.bf16.msra.mxu0 %v611
        %730 = vmatprep.subr.bf16.mxu0 %v614
        %731 = vmatpush1.bf16.msra.mxu0 %v613
        %732 = vmatprep.subr.bf16.mxu0 0
        %733 = vmatpush1.bf16.msra.mxu0 0
        %734 = vmatprep.subr.bf16.mxu0 0
        %735 = vmatpush1.bf16.msra.mxu0 0
        %736 = vmatprep.subr.bf16.mxu0 0
        %737 = vmatpush1.bf16.msra.mxu0 0
        %738 = vmatprep.subr.bf16.mxu0 0
        %739 = vmatpush1.bf16.msra.mxu0 0
        %740 = vmatprep.subr.bf16.mxu0 0
        %741 = vmatpush1.bf16.msra.mxu0 0
        %742 = vmatprep.subr.bf16.mxu0 0
        %743 = vmatpush1.bf16.msra.mxu0 0
        %744 = vmatprep.subr.bf16.mxu0 0
        %745 = vmatpush1.bf16.msra.mxu0 0
        %746 = vmatprep.subr.bf16.mxu0 0
        %747 = vmatpush1.bf16.msra.mxu0 0
        %748 = vmatprep.mubr.bf16.mxu0 0
        %749 = vmatmul.mubr.bf16.gmra.mrb[0].mxu0 %v413
        %v750 = vpop.f32.mrb[0].mxu0
        %v751 = vadd.f32 %v698, %v750
        %v752 = vpop.f32.mrb[0].mxu0
        %v753 = vadd.f32 %v700, %v752
        %v754 = vpop.f32.mrb[0].mxu0
        %v755 = vadd.f32 %v702, %v754
        %v756 = vpop.f32.mrb[0].mxu0
        %v757 = vadd.f32 %v704, %v756
        %758 = vmatprep.mubr.bf16.mxu0 0
        %759 = vmatmul.mubr.bf16.gmra.mrb[0].mxu0 %v416
        %v760 = vpop.f32.mrb[0].mxu0
        %v761 = vadd.f32 %v708, %v760
        %v762 = vpop.f32.mrb[0].mxu0
        %v763 = vadd.f32 %v710, %v762
        %v764 = vpop.f32.mrb[0].mxu0
        %v765 = vadd.f32 %v712, %v764
        %v766 = vpop.f32.mrb[0].mxu0
        %v767 = vadd.f32 %v714, %v766
        %768 = vdwg.mxu0
        %v769 = vadd.f32 %v327, %v751
        %v770 = vadd.f32 %v328, %v753
        %v771 = vadd.f32 %v329, %v755
        %v772 = vadd.f32 %v330, %v757
        %v773 = vadd.f32 %v331, %v761
        %v774 = vadd.f32 %v332, %v763
        %v775 = vadd.f32 %v333, %v765
        %v776 = vadd.f32 %v334, %v767
        %777 = vst [vmem:[#allocation2] sm:$0xff] %v769
        %778 = vst [vmem:[#allocation2 + $0x8] sm:$0xff] %v770
        %779 = vst [vmem:[#allocation2 + $0x10] sm:$0xff] %v771
        %780 = vst [vmem:[#allocation2 + $0x18] sm:$0xff] %v772
        %781 = vst [vmem:[#allocation2 + $0x20] sm:$0xff] %v773
        %782 = vst [vmem:[#allocation2 + $0x28] sm:$0xff] %v774
        %783 = vst [vmem:[#allocation2 + $0x30] sm:$0xff] %v775
        %784 = vst [vmem:[#allocation2 + $0x38] sm:$0xff] %v776
        %p785 = scmp.eq.s32.totalorder %s21, 5
        // Predicated region
        $region63: #{decoder_forward.11} parent=53 // pred_check
          %p786 = pneg %p785
        $region64: #{decoder_forward.11} parent=53 // pred_check_branch
          %788 = sbr.rel (%p786) target = $region66
        $region65: #{decoder_forward.11} parent=53 // pred_region
          %v789 = vld [vmem:[#allocation2] sm:$0xff]
          %v790 = vld [vmem:[#allocation2 + $0x8] sm:$0xff]
          %v791 = vld [vmem:[#allocation2 + $0x10] sm:$0xff]
          %v792 = vld [vmem:[#allocation2 + $0x18] sm:$0xff]
          %v793 = vld [vmem:[#allocation2 + $0x20] sm:$0xff]
          %v794 = vld [vmem:[#allocation2 + $0x28] sm:$0xff]
          %v795 = vld [vmem:[#allocation2 + $0x30] sm:$0xff]
          %v796 = vld [vmem:[#allocation2 + $0x38] sm:$0xff]
          %v797 = vld [vmem:[%s300] sm:$0x3]
          %v799 = vlaneseq
          %v800 = vshrl.u32 %v799, 7
          %v801 = vsub.s32 0, %v800
          %v802 = vrot.slane %v797, %v801
          %v803 = vlaneseq
          %v804 = vshrl.u32 %v803, 7
          %v805 = vsub.s32 1, %v804
          %v806 = vrot.slane %v797, %v805
          %v809 = vadd.f32 %v789, %v802
          %v810 = vadd.f32 %v790, %v806
          %v811 = vadd.f32 %v791, %v802
          %v812 = vadd.f32 %v792, %v806
          %v813 = vadd.f32 %v793, %v802
          %v814 = vadd.f32 %v794, %v806
          %v815 = vadd.f32 %v795, %v802
          %v816 = vadd.f32 %v796, %v806
          %v817 = vmax.f32 %v809, 0.0
          %v818 = vmax.f32 %v810, 0.0
          %v819 = vmax.f32 %v811, 0.0
          %v820 = vmax.f32 %v812, 0.0
          %v821 = vmax.f32 %v813, 0.0
          %v822 = vmax.f32 %v814, 0.0
          %v823 = vmax.f32 %v815, 0.0
          %v824 = vmax.f32 %v816, 0.0
          %825 = vst [vmem:[%s311] sm:$0xff] %v817
          %826 = vst [vmem:[%s311 + $0x8] sm:$0xff] %v818
          %827 = vst [vmem:[%s311 + $0x10] sm:$0xff] %v819
          %828 = vst [vmem:[%s311 + $0x18] sm:$0xff] %v820
          %829 = vst [vmem:[%s311 + $0x20] sm:$0xff] %v821
          %830 = vst [vmem:[%s311 + $0x28] sm:$0xff] %v822
          %831 = vst [vmem:[%s311 + $0x30] sm:$0xff] %v823
          %832 = vst [vmem:[%s311 + $0x38] sm:$0xff] %v824
        $region66: #{decoder_forward.11} parent=53 // pred_fallthru
          _
        %s833 = smul.u32 4, %s19
        %s834 = smul.u32 2, %s20
        %p835 = scmp.lt.s32.totalorder %s833, 3
        %s836 = scalar_select %p835, %s833, 3
        %p837 = scmp.lt.s32.totalorder %s834, 1
        %s838 = scalar_select %p837, %s834, 1
        %s839 = smul.addr %s836, 2
        %s840 = sadd.s32 %s838, %s839
        %s841 = smul.addr %s840, 8
        %s842 = scalar_lea.vmem %s3, %s841
        // Predicated region
        $region67: #{decoder_forward.11} parent=53 // pred_check
          %p843 = pneg %p135
        $region68: #{decoder_forward.11} parent=53 // pred_check_branch
          %845 = sbr.rel (%p843) target = $region70
        $region69: #{decoder_forward.11} parent=53 // pred_region
          %s846 = smul.u32 4, %s19
          %s847 = smul.u32 2, %s20
        $region70: #{decoder_forward.11} parent=53 // pred_fallthru
          _
        // Predicated region
        $region71: #{decoder_forward.11} parent=53 // pred_check
          %p848 = pneg %p135
        $region72: #{decoder_forward.11} parent=53 // pred_check_branch
          %850 = sbr.rel (%p848) target = $region74
        $region73: #{decoder_forward.11} parent=53 // pred_region
          %s851 = smul.u32 4, %s19
          %s852 = smul.u32 2, %s20
          %p853 = scmp.lt.s32.totalorder %s851, 3
          %s854 = scalar_select %p853, %s851, 3
          %p855 = scmp.lt.s32.totalorder %s852, 1
          %s856 = scalar_select %p855, %s852, 1
          %s857 = smul.addr %s854, 2
          %s858 = sadd.s32 %s856, %s857
          %s859 = smul.addr %s858, 8
          %s860 = scalar_lea.vmem %s3, %s859
        $region74: #{decoder_forward.11} parent=53 // pred_fallthru
          _
      $region54: #{decoder_forward.11} parent=5 // pred_fallthru
        _
      %p861 = scmp.le.s32.totalorder 2, %s9
      // Predicated region
      $region75: #{decoder_forward.11} parent=5 // pred_check
        %p862 = pneg %p861
      $region76: #{decoder_forward.11} parent=5 // pred_check_branch
        %864 = sbr.rel (%p862) target = $region78
      $region77: #{decoder_forward.11} parent=5 // pred_region
        %s865 = ssub.s32 %s9, 2
      $region78: #{decoder_forward.11} parent=5 // pred_fallthru
        _
    $region6: #{decoder_forward.11} parent=1 // loop_footer
      %s13 = sadd.s32 1, %s9
    $region7: #{decoder_forward.11} parent=1 // loop_footer_branch
      %8 = sbr.rel target = $region3
    $region8: #{decoder_forward.11} parent=1 // loop_exit
      _

// kernel: decoder_forward.12
$region0: #{decoder_forward.12}
  #allocation0 [shape = 'u32[]', space=smem, size = 0x4, offset = 0x4, fixed_abs, tag = 'smem constant byte address 0x4 - core index']
  #allocation1 [shape = 'u32[144,128]{1,0:T(1,128)}', space=vmem, size = 0x12000, scoped, tag = 'internal scratch']
  #allocation2 [shape = 'f32[32,256]{1,0:T(8,128)}', space=vmem, size = 0x8000, scoped, tag = 'scratch operand']
  %s0 = inlined_call_operand.vmem [shape: bf16[32,256], index: 0, kind: input, shape index: {}]
  %s1 = inlined_call_operand.vmem [shape: bf16[256,256], index: 1, kind: input, shape index: {}]
  %s2 = inlined_call_operand.vmem [shape: f32[1,256], index: 2, kind: input, shape index: {}]
  %s3 = inlined_call_operand.vmem [shape: f32[32,256], index: 3, kind: input, shape index: {}]
  %s4 = inlined_call_operand.vmem [shape: f32[32,256], index: 4, kind: output, shape index: {}]
  %s5 = sld [smem:[#allocation0]]
  $region34: #{decoder_forward.12} parent=0
    _
  %s7 = ssub.s32 1, %s5
  %s8 = scalar_select 0, %s7, %s5
  // Predicated region
  $region2: #{decoder_forward.12} parent=0 // pred_check
    _
  $region3: #{decoder_forward.12} parent=0 // pred_check_branch
    %10 = sbr.rel (0) target = $region5
  $region4: #{decoder_forward.12} parent=0 // pred_region
    _
  $region5: #{decoder_forward.12} parent=0 // pred_fallthru
    _
  // Predicated region
  $region6: #{decoder_forward.12} parent=0 // pred_check
    _
  $region7: #{decoder_forward.12} parent=0 // pred_check_branch
    %12 = sbr.rel (0) target = $region9
  $region8: #{decoder_forward.12} parent=0 // pred_region
    _
  $region9: #{decoder_forward.12} parent=0 // pred_fallthru
    _
  // Predicated region
  $region10: #{decoder_forward.12} parent=0 // pred_check
    _
  $region11: #{decoder_forward.12} parent=0 // pred_check_branch
    %14 = sbr.rel (0) target = $region13
  $region12: #{decoder_forward.12} parent=0 // pred_region
    _
  $region13: #{decoder_forward.12} parent=0 // pred_fallthru
    _
  // Predicated region
  $region14: #{decoder_forward.12} parent=0 // pred_check
    _
  $region15: #{decoder_forward.12} parent=0 // pred_check_branch
    %16 = sbr.rel (0) target = $region17
  $region16: #{decoder_forward.12} parent=0 // pred_region
    _
  $region17: #{decoder_forward.12} parent=0 // pred_fallthru
    _
  %p17 = scmp.eq.s32.totalorder 0, 0
  // Predicated region
  $region18: #{decoder_forward.12} parent=0 // pred_check
    %p18 = pneg %p17
  $region19: #{decoder_forward.12} parent=0 // pred_check_branch
    %20 = sbr.rel (%p18) target = $region21
  $region20: #{decoder_forward.12} parent=0 // pred_region
    %21 = vst [vmem:[#allocation2] sm:$0xff] 0.0
    %22 = vst [vmem:[#allocation2 + $0x8] sm:$0xff] 0.0
    %23 = vst [vmem:[#allocation2 + $0x10] sm:$0xff] 0.0
    %24 = vst [vmem:[#allocation2 + $0x18] sm:$0xff] 0.0
    %25 = vst [vmem:[#allocation2 + $0x20] sm:$0xff] 0.0
    %26 = vst [vmem:[#allocation2 + $0x28] sm:$0xff] 0.0
    %27 = vst [vmem:[#allocation2 + $0x30] sm:$0xff] 0.0
    %28 = vst [vmem:[#allocation2 + $0x38] sm:$0xff] 0.0
  $region21: #{decoder_forward.12} parent=0 // pred_fallthru
    _
  %v29 = vld [vmem:[#allocation2] sm:$0xff]
  %v30 = vld [vmem:[#allocation2 + $0x8] sm:$0xff]
  %v31 = vld [vmem:[#allocation2 + $0x10] sm:$0xff]
  %v32 = vld [vmem:[#allocation2 + $0x18] sm:$0xff]
  %v33 = vld [vmem:[#allocation2 + $0x20] sm:$0xff]
  %v34 = vld [vmem:[#allocation2 + $0x28] sm:$0xff]
  %v35 = vld [vmem:[#allocation2 + $0x30] sm:$0xff]
  %v36 = vld [vmem:[#allocation2 + $0x38] sm:$0xff]
  %v37 = vld [vmem:[%s0] sm:$0xff]
  %v38 = vld [vmem:[%s0 + $0x8] sm:$0xff]
  %v39 = vld [vmem:[%s0 + $0x10] sm:$0xff]
  %v40 = vld [vmem:[%s0 + $0x18] sm:$0xff]
  %v41 = vld [vmem:[%s1] sm:$0xff]
  %v42 = vld [vmem:[%s1 + $0x8] sm:$0xff]
  %v43 = vld [vmem:[%s1 + $0x10] sm:$0xff]
  %v44 = vld [vmem:[%s1 + $0x18] sm:$0xff]
  %v45 = vld [vmem:[%s1 + $0x20] sm:$0xff]
  %v46 = vld [vmem:[%s1 + $0x28] sm:$0xff]
  %v47 = vld [vmem:[%s1 + $0x30] sm:$0xff]
  %v48 = vld [vmem:[%s1 + $0x38] sm:$0xff]
  %v49 = vld [vmem:[%s1 + $0x40] sm:$0xff]
  %v50 = vld [vmem:[%s1 + $0x48] sm:$0xff]
  %v51 = vld [vmem:[%s1 + $0x50] sm:$0xff]
  %v52 = vld [vmem:[%s1 + $0x58] sm:$0xff]
  %v53 = vld [vmem:[%s1 + $0x60] sm:$0xff]
  %v54 = vld [vmem:[%s1 + $0x68] sm:$0xff]
  %v55 = vld [vmem:[%s1 + $0x70] sm:$0xff]
  %v56 = vld [vmem:[%s1 + $0x78] sm:$0xff]
  %v57 = vld [vmem:[%s1 + $0x80] sm:$0xff]
  %v58 = vld [vmem:[%s1 + $0x88] sm:$0xff]
  %v59 = vld [vmem:[%s1 + $0x90] sm:$0xff]
  %v60 = vld [vmem:[%s1 + $0x98] sm:$0xff]
  %v61 = vld [vmem:[%s1 + $0xa0] sm:$0xff]
  %v62 = vld [vmem:[%s1 + $0xa8] sm:$0xff]
  %v63 = vld [vmem:[%s1 + $0xb0] sm:$0xff]
  %v64 = vld [vmem:[%s1 + $0xb8] sm:$0xff]
  %v65 = vld [vmem:[%s1 + $0xc0] sm:$0xff]
  %v66 = vld [vmem:[%s1 + $0xc8] sm:$0xff]
  %v67 = vld [vmem:[%s1 + $0xd0] sm:$0xff]
  %v68 = vld [vmem:[%s1 + $0xd8] sm:$0xff]
  %v69 = vld [vmem:[%s1 + $0xe0] sm:$0xff]
  %v70 = vld [vmem:[%s1 + $0xe8] sm:$0xff]
  %v71 = vld [vmem:[%s1 + $0xf0] sm:$0xff]
  %v72 = vld [vmem:[%s1 + $0xf8] sm:$0xff]
  %v77 = vunpack.c.l.b16 %v37
  %v78 = vunpack.c.h.b16 %v37
  %v79 = vunpack.c.l.b16 %v38
  %v80 = vunpack.c.h.b16 %v38
  %v81 = vunpack.c.l.b16 %v39
  %v82 = vunpack.c.h.b16 %v39
  %v83 = vunpack.c.l.b16 %v40
  %v84 = vunpack.c.h.b16 %v40
  %v85 = vpack.c.b16 %v79, %v77
  %v86 = vpack.c.b16 %v80, %v78
  %v87 = vpack.c.b16 %v83, %v81
  %v88 = vpack.c.b16 %v84, %v82
  %v125 = vunpack.c.l.b16 %v41
  %v126 = vunpack.c.h.b16 %v41
  %v127 = vunpack.c.l.b16 %v42
  %v128 = vunpack.c.h.b16 %v42
  %v129 = vunpack.c.l.b16 %v43
  %v130 = vunpack.c.h.b16 %v43
  %v131 = vunpack.c.l.b16 %v44
  %v132 = vunpack.c.h.b16 %v44
  %v133 = vunpack.c.l.b16 %v45
  %v134 = vunpack.c.h.b16 %v45
  %v135 = vunpack.c.l.b16 %v46
  %v136 = vunpack.c.h.b16 %v46
  %v137 = vunpack.c.l.b16 %v47
  %v138 = vunpack.c.h.b16 %v47
  %v139 = vunpack.c.l.b16 %v48
  %v140 = vunpack.c.h.b16 %v48
  %v141 = vunpack.c.l.b16 %v49
  %v142 = vunpack.c.h.b16 %v49
  %v143 = vunpack.c.l.b16 %v50
  %v144 = vunpack.c.h.b16 %v50
  %v145 = vunpack.c.l.b16 %v51
  %v146 = vunpack.c.h.b16 %v51
  %v147 = vunpack.c.l.b16 %v52
  %v148 = vunpack.c.h.b16 %v52
  %v149 = vunpack.c.l.b16 %v53
  %v150 = vunpack.c.h.b16 %v53
  %v151 = vunpack.c.l.b16 %v54
  %v152 = vunpack.c.h.b16 %v54
  %v153 = vunpack.c.l.b16 %v55
  %v154 = vunpack.c.h.b16 %v55
  %v155 = vunpack.c.l.b16 %v56
  %v156 = vunpack.c.h.b16 %v56
  %v157 = vunpack.c.l.b16 %v57
  %v158 = vunpack.c.h.b16 %v57
  %v159 = vunpack.c.l.b16 %v58
  %v160 = vunpack.c.h.b16 %v58
  %v161 = vunpack.c.l.b16 %v59
  %v162 = vunpack.c.h.b16 %v59
  %v163 = vunpack.c.l.b16 %v60
  %v164 = vunpack.c.h.b16 %v60
  %v165 = vunpack.c.l.b16 %v61
  %v166 = vunpack.c.h.b16 %v61
  %v167 = vunpack.c.l.b16 %v62
  %v168 = vunpack.c.h.b16 %v62
  %v169 = vunpack.c.l.b16 %v63
  %v170 = vunpack.c.h.b16 %v63
  %v171 = vunpack.c.l.b16 %v64
  %v172 = vunpack.c.h.b16 %v64
  %v173 = vunpack.c.l.b16 %v65
  %v174 = vunpack.c.h.b16 %v65
  %v175 = vunpack.c.l.b16 %v66
  %v176 = vunpack.c.h.b16 %v66
  %v177 = vunpack.c.l.b16 %v67
  %v178 = vunpack.c.h.b16 %v67
  %v179 = vunpack.c.l.b16 %v68
  %v180 = vunpack.c.h.b16 %v68
  %v181 = vunpack.c.l.b16 %v69
  %v182 = vunpack.c.h.b16 %v69
  %v183 = vunpack.c.l.b16 %v70
  %v184 = vunpack.c.h.b16 %v70
  %v185 = vunpack.c.l.b16 %v71
  %v186 = vunpack.c.h.b16 %v71
  %v187 = vunpack.c.l.b16 %v72
  %v188 = vunpack.c.h.b16 %v72
  %v189 = vpack.c.b16 %v127, %v125
  %v190 = vpack.c.b16 %v128, %v126
  %v191 = vpack.c.b16 %v131, %v129
  %v192 = vpack.c.b16 %v132, %v130
  %v193 = vpack.c.b16 %v135, %v133
  %v194 = vpack.c.b16 %v136, %v134
  %v195 = vpack.c.b16 %v139, %v137
  %v196 = vpack.c.b16 %v140, %v138
  %v197 = vpack.c.b16 %v143, %v141
  %v198 = vpack.c.b16 %v144, %v142
  %v199 = vpack.c.b16 %v147, %v145
  %v200 = vpack.c.b16 %v148, %v146
  %v201 = vpack.c.b16 %v151, %v149
  %v202 = vpack.c.b16 %v152, %v150
  %v203 = vpack.c.b16 %v155, %v153
  %v204 = vpack.c.b16 %v156, %v154
  %v205 = vpack.c.b16 %v159, %v157
  %v206 = vpack.c.b16 %v160, %v158
  %v207 = vpack.c.b16 %v163, %v161
  %v208 = vpack.c.b16 %v164, %v162
  %v209 = vpack.c.b16 %v167, %v165
  %v210 = vpack.c.b16 %v168, %v166
  %v211 = vpack.c.b16 %v171, %v169
  %v212 = vpack.c.b16 %v172, %v170
  %v213 = vpack.c.b16 %v175, %v173
  %v214 = vpack.c.b16 %v176, %v174
  %v215 = vpack.c.b16 %v179, %v177
  %v216 = vpack.c.b16 %v180, %v178
  %v217 = vpack.c.b16 %v183, %v181
  %v218 = vpack.c.b16 %v184, %v182
  %v219 = vpack.c.b16 %v187, %v185
  %v220 = vpack.c.b16 %v188, %v186
  %253 = vmatprep.subr.bf16.mxu0 %v190
  %254 = vmatpush1.bf16.msra.mxu0 %v189
  %255 = vmatprep.subr.bf16.mxu0 %v192
  %256 = vmatpush1.bf16.msra.mxu0 %v191
  %257 = vmatprep.subr.bf16.mxu0 %v194
  %258 = vmatpush1.bf16.msra.mxu0 %v193
  %259 = vmatprep.subr.bf16.mxu0 %v196
  %260 = vmatpush1.bf16.msra.mxu0 %v195
  %261 = vmatprep.subr.bf16.mxu0 %v198
  %262 = vmatpush1.bf16.msra.mxu0 %v197
  %263 = vmatprep.subr.bf16.mxu0 %v200
  %264 = vmatpush1.bf16.msra.mxu0 %v199
  %265 = vmatprep.subr.bf16.mxu0 %v202
  %266 = vmatpush1.bf16.msra.mxu0 %v201
  %267 = vmatprep.subr.bf16.mxu0 %v204
  %268 = vmatpush1.bf16.msra.mxu0 %v203
  %269 = vmatprep.subr.bf16.mxu0 %v206
  %270 = vmatpush1.bf16.msra.mxu0 %v205
  %271 = vmatprep.subr.bf16.mxu0 %v208
  %272 = vmatpush1.bf16.msra.mxu0 %v207
  %273 = vmatprep.subr.bf16.mxu0 %v210
  %274 = vmatpush1.bf16.msra.mxu0 %v209
  %275 = vmatprep.subr.bf16.mxu0 %v212
  %276 = vmatpush1.bf16.msra.mxu0 %v211
  %277 = vmatprep.subr.bf16.mxu0 %v214
  %278 = vmatpush1.bf16.msra.mxu0 %v213
  %279 = vmatprep.subr.bf16.mxu0 %v216
  %280 = vmatpush1.bf16.msra.mxu0 %v215
  %281 = vmatprep.subr.bf16.mxu0 %v218
  %282 = vmatpush1.bf16.msra.mxu0 %v217
  %283 = vmatprep.subr.bf16.mxu0 %v220
  %284 = vmatpush1.bf16.msra.mxu0 %v219
  %285 = vmatprep.mubr.bf16.mxu0 %v86
  %286 = vmatmul.mubr.bf16.gmra.mrb[0].mxu0 %v85
  %v287 = vpop.f32.mrb[0].mxu0
  %v288 = vadd.f32 0.0, %v287
  %v289 = vpop.f32.mrb[0].mxu0
  %v290 = vadd.f32 0.0, %v289
  %v291 = vpop.f32.mrb[0].mxu0
  %v292 = vadd.f32 0.0, %v291
  %v293 = vpop.f32.mrb[0].mxu0
  %v294 = vadd.f32 0.0, %v293
  %295 = vmatprep.mubr.bf16.mxu0 %v88
  %296 = vmatmul.mubr.bf16.gmra.mrb[0].mxu0 %v87
  %v297 = vpop.f32.mrb[0].mxu0
  %v298 = vadd.f32 0.0, %v297
  %v299 = vpop.f32.mrb[0].mxu0
  %v300 = vadd.f32 0.0, %v299
  %v301 = vpop.f32.mrb[0].mxu0
  %v302 = vadd.f32 0.0, %v301
  %v303 = vpop.f32.mrb[0].mxu0
  %v304 = vadd.f32 0.0, %v303
  %305 = vdwg.mxu0
  %v306 = vadd.f32 %v29, %v288
  %v307 = vadd.f32 %v30, %v290
  %v308 = vadd.f32 %v31, %v292
  %v309 = vadd.f32 %v32, %v294
  %v310 = vadd.f32 %v33, %v298
  %v311 = vadd.f32 %v34, %v300
  %v312 = vadd.f32 %v35, %v302
  %v313 = vadd.f32 %v36, %v304
  %314 = vst [vmem:[#allocation2] sm:$0xff] %v306
  %315 = vst [vmem:[#allocation2 + $0x8] sm:$0xff] %v307
  %316 = vst [vmem:[#allocation2 + $0x10] sm:$0xff] %v308
  %317 = vst [vmem:[#allocation2 + $0x18] sm:$0xff] %v309
  %318 = vst [vmem:[#allocation2 + $0x20] sm:$0xff] %v310
  %319 = vst [vmem:[#allocation2 + $0x28] sm:$0xff] %v311
  %320 = vst [vmem:[#allocation2 + $0x30] sm:$0xff] %v312
  %321 = vst [vmem:[#allocation2 + $0x38] sm:$0xff] %v313
  // Predicated region
  $region22: #{decoder_forward.12} parent=0 // pred_check
    %p322 = pneg %p17
  $region23: #{decoder_forward.12} parent=0 // pred_check_branch
    %324 = sbr.rel (%p322) target = $region25
  $region24: #{decoder_forward.12} parent=0 // pred_region
    %v325 = vld [vmem:[#allocation2] sm:$0xff]
    %v326 = vld [vmem:[#allocation2 + $0x8] sm:$0xff]
    %v327 = vld [vmem:[#allocation2 + $0x10] sm:$0xff]
    %v328 = vld [vmem:[#allocation2 + $0x18] sm:$0xff]
    %v329 = vld [vmem:[#allocation2 + $0x20] sm:$0xff]
    %v330 = vld [vmem:[#allocation2 + $0x28] sm:$0xff]
    %v331 = vld [vmem:[#allocation2 + $0x30] sm:$0xff]
    %v332 = vld [vmem:[#allocation2 + $0x38] sm:$0xff]
    %v333 = vld [vmem:[%s2] sm:$0x3]
    %v335 = vlaneseq
    %v336 = vshrl.u32 %v335, 7
    %v337 = vsub.s32 0, %v336
    %v338 = vrot.slane %v333, %v337
    %v339 = vlaneseq
    %v340 = vshrl.u32 %v339, 7
    %v341 = vsub.s32 1, %v340
    %v342 = vrot.slane %v333, %v341
    %v345 = vadd.f32 %v325, %v338
    %v346 = vadd.f32 %v326, %v342
    %v347 = vadd.f32 %v327, %v338
    %v348 = vadd.f32 %v328, %v342
    %v349 = vadd.f32 %v329, %v338
    %v350 = vadd.f32 %v330, %v342
    %v351 = vadd.f32 %v331, %v338
    %v352 = vadd.f32 %v332, %v342
    %v353 = vld [vmem:[%s3] sm:$0xff]
    %v354 = vld [vmem:[%s3 + $0x8] sm:$0xff]
    %v355 = vld [vmem:[%s3 + $0x10] sm:$0xff]
    %v356 = vld [vmem:[%s3 + $0x18] sm:$0xff]
    %v357 = vld [vmem:[%s3 + $0x20] sm:$0xff]
    %v358 = vld [vmem:[%s3 + $0x28] sm:$0xff]
    %v359 = vld [vmem:[%s3 + $0x30] sm:$0xff]
    %v360 = vld [vmem:[%s3 + $0x38] sm:$0xff]
    %v361 = vadd.f32 %v345, %v353
    %v362 = vadd.f32 %v346, %v354
    %v363 = vadd.f32 %v347, %v355
    %v364 = vadd.f32 %v348, %v356
    %v365 = vadd.f32 %v349, %v357
    %v366 = vadd.f32 %v350, %v358
    %v367 = vadd.f32 %v351, %v359
    %v368 = vadd.f32 %v352, %v360
    %369 = vst [vmem:[%s4] sm:$0xff] %v361
    %370 = vst [vmem:[%s4 + $0x8] sm:$0xff] %v362
    %371 = vst [vmem:[%s4 + $0x10] sm:$0xff] %v363
    %372 = vst [vmem:[%s4 + $0x18] sm:$0xff] %v364
    %373 = vst [vmem:[%s4 + $0x20] sm:$0xff] %v365
    %374 = vst [vmem:[%s4 + $0x28] sm:$0xff] %v366
    %375 = vst [vmem:[%s4 + $0x30] sm:$0xff] %v367
    %376 = vst [vmem:[%s4 + $0x38] sm:$0xff] %v368
  $region25: #{decoder_forward.12} parent=0 // pred_fallthru
    _
  // Predicated region
  $region26: #{decoder_forward.12} parent=0 // pred_check
    _
  $region27: #{decoder_forward.12} parent=0 // pred_check_branch
    %378 = sbr.rel (0) target = $region29
  $region28: #{decoder_forward.12} parent=0 // pred_region
    _
  $region29: #{decoder_forward.12} parent=0 // pred_fallthru
    _
  // Predicated region
  $region30: #{decoder_forward.12} parent=0 // pred_check
    _
  $region31: #{decoder_forward.12} parent=0 // pred_check_branch
    %380 = sbr.rel (0) target = $region33
  $region32: #{decoder_forward.12} parent=0 // pred_region
    _
  $region33: #{decoder_forward.12} parent=0 // pred_fallthru
    _

// kernel: decoder_forward.17
$region0: #{decoder_forward.17}
  #allocation0 [shape = 'u32[]', space=smem, size = 0x4, offset = 0x4, fixed_abs, tag = 'smem constant byte address 0x4 - core index']
  #allocation1 [shape = 'u32[144,128]{1,0:T(1,128)}', space=vmem, size = 0x12000, scoped, tag = 'internal scratch']
  #allocation2 [shape = 'f32[32,256]{1,0:T(8,128)}', space=vmem, size = 0x8000, scoped, tag = 'scratch operand']
  %s0 = inlined_call_operand.vmem [shape: bf16[32,2304], index: 0, kind: input, shape index: {}]
  %s1 = inlined_call_operand.vmem [shape: bf16[2304,1024], index: 1, kind: input, shape index: {}]
  %s2 = inlined_call_operand.vmem [shape: f32[1,1024], index: 2, kind: input, shape index: {}]
  %s3 = inlined_call_operand.vmem [shape: f32[32,1024], index: 3, kind: output, shape index: {}]
  %s4 = sld [smem:[#allocation0]]
  $region136: #{decoder_forward.17} parent=0
    _
  %s6 = ssub.s32 1, %s4
  %s7 = scalar_select 0, %s6, %s4
  $region1: #{decoder_forward.17} parent=0
    #allocation3 [shape = 'u8[49152]{0}', space=vmem, size = 0xc000, scoped, tag = 'input window, operand 0']
    #allocation4 [shape = 'u8[393216]{0}', space=vmem, size = 0x60000, scoped, tag = 'input window, operand 1']
    #allocation5 [shape = 'u8[65536]{0}', space=vmem, size = 0x10000, scoped, tag = 'output window, operand 0']
    loop: start=0, step=1, limit=26
    $region2: #{decoder_forward.17} parent=1 // loop_pre_header
      _
    $region3: #{decoder_forward.17} parent=1 // loop_header
      %s9 = sphi 0, %s13
      %p10 = scmp.ge.s32.totalorder %s9, 26
      %s16 = sphi 0, %s35
      %s17 = sphi 0, %s31
      %s18 = sphi 0, %s27
      %s19 = sphi 0, %s16
      %s20 = sphi 0, %s17
      %s21 = sphi 0, %s18
      %s22 = sphi 0, %s19
      %s23 = sphi 0, %s20
      %s24 = sphi 0, %s21
      %s40 = sphi 0, %s42
      %s43 = sphi 0, %s40
      %s44 = sphi 0, %s43
      %s60 = sphi 0, %s44
      %s68 = sphi 0, %s70
      %s71 = sphi 0, %s68
      %s72 = sphi 0, %s71
      %s88 = sphi 0, %s72
      %s94 = sphi 0, %s96
      %s97 = sphi 0, %s94
      %s98 = sphi 0, %s97
      %s114 = sphi 0, %s98
      %s122 = sphi 0, %s124
      %s125 = sphi 0, %s122
      %s126 = sphi 0, %s125
      %s142 = sphi 0, %s126
    $region4: #{decoder_forward.17} parent=1 // loop_header_branch
      %12 = sbr.rel (%p10) target = $region8
    $region5: #{decoder_forward.17} parent=1 // loop_body
      %s14 = ssub.s32 %s9, 1
      %s15 = ssub.s32 %s9, 2
      %s25 = sadd.s32 1, %s18
      %p26 = scmp.ge.s32.totalorder %s25, 6
      %s27 = scalar_select %p26, 0, %s25
      %s28 = sadd.s32 1, %s17
      %s29 = scalar_select %p26, %s28, %s17
      %p30 = scmp.ge.s32.totalorder %s29, 4
      %s31 = scalar_select %p30, 0, %s29
      %s32 = sadd.s32 1, %s16
      %s33 = scalar_select %p30, %s32, %s16
      %p34 = scmp.ge.s32.totalorder %s33, 1
      %s35 = scalar_select %p34, 0, %s33
      %s36 = ssub.s32 %s16, %s35
      %s37 = ssub.s32 %s18, %s27
      %s38 = sor.u32 %s36, %s37
      %p39 = scmp.eq.s32.totalorder %s38, 0
      %s41 = sadd.s32 %s40, 1
      %s42 = scalar_select %p39, %s40, %s41
      %p45 = pneg %p39
      %p46 = scmp.eq.s32.totalorder %s9, 23
      %p47 = por %p45, %p46
      %p48 = scmp.ne.s32.totalorder %s40, %s43
      %p49 = scmp.eq.s32.totalorder %s9, 0
      %p50 = por %p48, %p49
      %p51 = scmp.ne.s32.totalorder %s40, %s43
      %p52 = scmp.eq.s32.totalorder %s14, 23
      %p53 = por %p51, %p52
      %p54 = scmp.ne.s32.totalorder %s43, %s44
      %p55 = scmp.eq.s32.totalorder %s14, 0
      %p56 = por %p54, %p55
      %p57 = scmp.ne.s32.totalorder %s43, %s44
      %p58 = scmp.eq.s32.totalorder %s15, 23
      %p59 = por %p57, %p58
      %p61 = scmp.ne.s32.totalorder %s44, %s60
      %p62 = scmp.eq.s32.totalorder %s15, 0
      %p63 = por %p61, %p62
      %s64 = ssub.s32 %s18, %s27
      %s65 = ssub.s32 %s17, %s31
      %s66 = sor.u32 %s64, %s65
      %p67 = scmp.eq.s32.totalorder %s66, 0
      %s69 = sadd.s32 %s68, 1
      %s70 = scalar_select %p67, %s68, %s69
      %p73 = pneg %p67
      %p74 = scmp.eq.s32.totalorder %s9, 23
      %p75 = por %p73, %p74
      %p76 = scmp.ne.s32.totalorder %s68, %s71
      %p77 = scmp.eq.s32.totalorder %s9, 0
      %p78 = por %p76, %p77
      %p79 = scmp.ne.s32.totalorder %s68, %s71
      %p80 = scmp.eq.s32.totalorder %s14, 23
      %p81 = por %p79, %p80
      %p82 = scmp.ne.s32.totalorder %s71, %s72
      %p83 = scmp.eq.s32.totalorder %s14, 0
      %p84 = por %p82, %p83
      %p85 = scmp.ne.s32.totalorder %s71, %s72
      %p86 = scmp.eq.s32.totalorder %s15, 23
      %p87 = por %p85, %p86
      %p89 = scmp.ne.s32.totalorder %s72, %s88
      %p90 = scmp.eq.s32.totalorder %s15, 0
      %p91 = por %p89, %p90
      %s92 = ssub.s32 %s17, %s31
      %p93 = scmp.eq.s32.totalorder %s92, 0
      %s95 = sadd.s32 %s94, 1
      %s96 = scalar_select %p93, %s94, %s95
      %p99 = pneg %p93
      %p100 = scmp.eq.s32.totalorder %s9, 23
      %p101 = por %p99, %p100
      %p102 = scmp.ne.s32.totalorder %s94, %s97
      %p103 = scmp.eq.s32.totalorder %s9, 0
      %p104 = por %p102, %p103
      %p105 = scmp.ne.s32.totalorder %s94, %s97
      %p106 = scmp.eq.s32.totalorder %s14, 23
      %p107 = por %p105, %p106
      %p108 = scmp.ne.s32.totalorder %s97, %s98
      %p109 = scmp.eq.s32.totalorder %s14, 0
      %p110 = por %p108, %p109
      %p111 = scmp.ne.s32.totalorder %s97, %s98
      %p112 = scmp.eq.s32.totalorder %s15, 23
      %p113 = por %p111, %p112
      %p115 = scmp.ne.s32.totalorder %s98, %s114
      %p116 = scmp.eq.s32.totalorder %s15, 0
      %p117 = por %p115, %p116
      %s118 = ssub.s32 %s16, %s35
      %s119 = ssub.s32 %s17, %s31
      %s120 = sor.u32 %s118, %s119
      %p121 = scmp.eq.s32.totalorder %s120, 0
      %s123 = sadd.s32 %s122, 1
      %s124 = scalar_select %p121, %s122, %s123
      %p127 = pneg %p121
      %p128 = scmp.eq.s32.totalorder %s9, 23
      %p129 = por %p127, %p128
      %p130 = scmp.ne.s32.totalorder %s122, %s125
      %p131 = scmp.eq.s32.totalorder %s9, 0
      %p132 = por %p130, %p131
      %p133 = scmp.ne.s32.totalorder %s122, %s125
      %p134 = scmp.eq.s32.totalorder %s14, 23
      %p135 = por %p133, %p134
      %p136 = scmp.ne.s32.totalorder %s125, %s126
      %p137 = scmp.eq.s32.totalorder %s14, 0
      %p138 = por %p136, %p137
      %p139 = scmp.ne.s32.totalorder %s125, %s126
      %p140 = scmp.eq.s32.totalorder %s15, 23
      %p141 = por %p139, %p140
      %p143 = scmp.ne.s32.totalorder %s126, %s142
      %p144 = scmp.eq.s32.totalorder %s15, 0
      %p145 = por %p143, %p144
      %p146 = scmp.le.s32.totalorder 1, %s9
      %p147 = scmp.lt.s32.totalorder %s9, 25
      %p148 = pnand %p146, %p147
      %p149 = pneg %p148
      // Predicated region
      $region9: #{decoder_forward.17} parent=5 // pred_check
        _
      $region10: #{decoder_forward.17} parent=5 // pred_check_branch
        %151 = sbr.rel (%p148) target = $region12
      $region11: #{decoder_forward.17} parent=5 // pred_region
        %s152 = ssub.s32 %s9, 1
      $region12: #{decoder_forward.17} parent=5 // pred_fallthru
        _
      %p153 = scmp.lt.s32.totalorder %s9, 24
      // Predicated region
      $region13: #{decoder_forward.17} parent=5 // pred_check
        %p154 = pneg %p153
      $region14: #{decoder_forward.17} parent=5 // pred_check_branch
        %156 = sbr.rel (%p154) target = $region16
      $region15: #{decoder_forward.17} parent=5 // pred_region
        // Predicated region
        $region17: #{decoder_forward.17} parent=15 // pred_check
          %p157 = pneg %p50
        $region18: #{decoder_forward.17} parent=15 // pred_check_branch
          %159 = sbr.rel (%p157) target = $region20
        $region19: #{decoder_forward.17} parent=15 // pred_region
          %s160 = sand.u32 %s40, 1
          %s161 = sand.u32 %s40, 1
          %s162 = smul.addr %s161, 48
          %s163 = scalar_lea.vmem [#allocation3], %s162
          %s164 = smul.u32 4, %s16
          %s165 = smul.u32 3, %s18
          %s166 = smul.addr %s164, 18
          %s167 = sadd.s32 %s165, %s166
          %s168 = smul.addr %s167, 4
          %s169 = scalar_lea.vmem %s0, %s168
          // Predicated region
          $region21: #{decoder_forward.17} parent=19 // pred_check
            _
          $region22: #{decoder_forward.17} parent=19 // pred_check_branch
            %171 = sbr.rel (0) target = $region24
          $region23: #{decoder_forward.17} parent=19 // pred_region
            // Predicated region
            $region25: #{decoder_forward.17} parent=23 // pred_check
              _
            $region26: #{decoder_forward.17} parent=23 // pred_check_branch
              %173 = sbr.rel (0) target = $region28
            $region27: #{decoder_forward.17} parent=23 // pred_region
              %s174 = scalar_lea.vmem %s169, 8
              %s175 = scalar_lea.vmem %s163, 8 [#allocation3]
              loop: start=0, step=1, limit=1
              $region29: #{decoder_forward.17} parent=27 // loop_pre_header
                _
              $region30: #{decoder_forward.17} parent=27 // loop_header
                %s177 = sphi 0, %s181
                %p178 = scmp.ge.s32.totalorder %s177, 1
                %s182 = sphi %s169, %s169
                %s183 = sphi %s163, %s163
              $region31: #{decoder_forward.17} parent=27 // loop_header_branch
                %180 = sbr.rel (%p178) target = $region35
              $region32: #{decoder_forward.17} parent=27 // loop_body
                %v184 = vld [vmem:[%s182] sm:$0xff]
                %185 = vst [vmem:[%s183] sm:$0xff] %v184
                %v186 = vld [vmem:[%s182 + $0x48] sm:$0xff]
                %187 = vst [vmem:[%s183 + $0xc] sm:$0xff] %v186
                %v188 = vld [vmem:[%s182 + $0x90] sm:$0xff]
                %189 = vst [vmem:[%s183 + $0x18] sm:$0xff] %v188
                %v190 = vld [vmem:[%s182 + $0xd8] sm:$0xff]
                %191 = vst [vmem:[%s183 + $0x24] sm:$0xff] %v190
              $region33: #{decoder_forward.17} parent=27 // loop_footer
                %s181 = sadd.s32 1, %s177
              $region34: #{decoder_forward.17} parent=27 // loop_footer_branch
                %176 = sbr.rel target = $region30
              $region35: #{decoder_forward.17} parent=27 // loop_exit
                _
              loop: start=0, step=1, limit=1
              $region36: #{decoder_forward.17} parent=27 // loop_pre_header
                _
              $region37: #{decoder_forward.17} parent=27 // loop_header
                %s194 = sphi 0, %s198
                %p195 = scmp.ge.s32.totalorder %s194, 1
                %s199 = sphi %s174, %s174
                %s200 = sphi %s175, %s175
              $region38: #{decoder_forward.17} parent=27 // loop_header_branch
                %197 = sbr.rel (%p195) target = $region42
              $region39: #{decoder_forward.17} parent=27 // loop_body
                %v201 = vld [vmem:[%s199] sm:$0xf]
                %202 = vst [vmem:[%s200] sm:$0xf] %v201
                %v203 = vld [vmem:[%s199 + $0x48] sm:$0xf]
                %204 = vst [vmem:[%s200 + $0xc] sm:$0xf] %v203
                %v205 = vld [vmem:[%s199 + $0x90] sm:$0xf]
                %206 = vst [vmem:[%s200 + $0x18] sm:$0xf] %v205
                %v207 = vld [vmem:[%s199 + $0xd8] sm:$0xf]
                %208 = vst [vmem:[%s200 + $0x24] sm:$0xf] %v207
              $region40: #{decoder_forward.17} parent=27 // loop_footer
                %s198 = sadd.s32 1, %s194
              $region41: #{decoder_forward.17} parent=27 // loop_footer_branch
                %193 = sbr.rel target = $region37
              $region42: #{decoder_forward.17} parent=27 // loop_exit
                _
            $region28: #{decoder_forward.17} parent=23 // pred_fallthru
              _
          $region24: #{decoder_forward.17} parent=19 // pred_fallthru
            _
          %209 = vnop
        $region20: #{decoder_forward.17} parent=15 // pred_fallthru
          _
        // Predicated region
        $region43: #{decoder_forward.17} parent=15 // pred_check
          %p210 = pneg %p78
        $region44: #{decoder_forward.17} parent=15 // pred_check_branch
          %212 = sbr.rel (%p210) target = $region46
        $region45: #{decoder_forward.17} parent=15 // pred_region
          %s213 = sand.u32 %s68, 1
          %s214 = sand.u32 %s68, 1
          %s215 = smul.addr %s214, 384
          %s216 = scalar_lea.vmem [#allocation4], %s215
          %s217 = smul.u32 48, %s18
          %s218 = smul.u32 2, %s17
          %s219 = smul.addr %s217, 8
          %s220 = sadd.s32 %s218, %s219
          %s221 = smul.addr %s220, 4
          %s222 = scalar_lea.vmem %s1, %s221
          // Predicated region
          $region47: #{decoder_forward.17} parent=45 // pred_check
            _
          $region48: #{decoder_forward.17} parent=45 // pred_check_branch
            %224 = sbr.rel (0) target = $region50
          $region49: #{decoder_forward.17} parent=45 // pred_region
            // Predicated region
            $region51: #{decoder_forward.17} parent=49 // pred_check
              _
            $region52: #{decoder_forward.17} parent=49 // pred_check_branch
              %226 = sbr.rel (0) target = $region54
            $region53: #{decoder_forward.17} parent=49 // pred_region
              // Predicated region
              $region66: #{decoder_forward.17} parent=53 // pred_check
                _
              $region67: #{decoder_forward.17} parent=53 // pred_check_branch
                %335 = sbr.rel (0) target = $region69
              $region68: #{decoder_forward.17} parent=53 // pred_region
                loop: start=0, step=1, limit=1
                $region70: #{decoder_forward.17} parent=68 // loop_pre_header
                  _
                $region71: #{decoder_forward.17} parent=68 // loop_header
                  %s337 = sphi 0, %s341
                  %p338 = scmp.ge.s32.totalorder %s337, 1
                  %s342 = sphi %s222, %s222
                  %s343 = sphi %s216, %s216
                $region72: #{decoder_forward.17} parent=68 // loop_header_branch
                  %340 = sbr.rel (%p338) target = $region76
                $region73: #{decoder_forward.17} parent=68 // loop_body
                  %v344 = vld [vmem:[%s342] sm:$0xff]
                  %345 = vst [vmem:[%s343] sm:$0xff] %v344
                  %v346 = vld [vmem:[%s342 + $0x20] sm:$0xff]
                  %347 = vst [vmem:[%s343 + $0x8] sm:$0xff] %v346
                  %v348 = vld [vmem:[%s342 + $0x40] sm:$0xff]
                  %349 = vst [vmem:[%s343 + $0x10] sm:$0xff] %v348
                  %v350 = vld [vmem:[%s342 + $0x60] sm:$0xff]
                  %351 = vst [vmem:[%s343 + $0x18] sm:$0xff] %v350
                  %v352 = vld [vmem:[%s342 + $0x80] sm:$0xff]
                  %353 = vst [vmem:[%s343 + $0x20] sm:$0xff] %v352
                  %v354 = vld [vmem:[%s342 + $0xa0] sm:$0xff]
                  %355 = vst [vmem:[%s343 + $0x28] sm:$0xff] %v354
                  %v356 = vld [vmem:[%s342 + $0xc0] sm:$0xff]
                  %357 = vst [vmem:[%s343 + $0x30] sm:$0xff] %v356
                  %v358 = vld [vmem:[%s342 + $0xe0] sm:$0xff]
                  %359 = vst [vmem:[%s343 + $0x38] sm:$0xff] %v358
                  %v360 = vld [vmem:[%s342 + $0x100] sm:$0xff]
                  %361 = vst [vmem:[%s343 + $0x40] sm:$0xff] %v360
                  %v362 = vld [vmem:[%s342 + $0x120] sm:$0xff]
                  %363 = vst [vmem:[%s343 + $0x48] sm:$0xff] %v362
                  %v364 = vld [vmem:[%s342 + $0x140] sm:$0xff]
                  %365 = vst [vmem:[%s343 + $0x50] sm:$0xff] %v364
                  %v366 = vld [vmem:[%s342 + $0x160] sm:$0xff]
                  %367 = vst [vmem:[%s343 + $0x58] sm:$0xff] %v366
                  %v368 = vld [vmem:[%s342 + $0x180] sm:$0xff]
                  %369 = vst [vmem:[%s343 + $0x60] sm:$0xff] %v368
                  %v370 = vld [vmem:[%s342 + $0x1a0] sm:$0xff]
                  %371 = vst [vmem:[%s343 + $0x68] sm:$0xff] %v370
                  %v372 = vld [vmem:[%s342 + $0x1c0] sm:$0xff]
                  %373 = vst [vmem:[%s343 + $0x70] sm:$0xff] %v372
                  %v374 = vld [vmem:[%s342 + $0x1e0] sm:$0xff]
                  %375 = vst [vmem:[%s343 + $0x78] sm:$0xff] %v374
                  %v376 = vld [vmem:[%s342 + $0x200] sm:$0xff]
                  %377 = vst [vmem:[%s343 + $0x80] sm:$0xff] %v376
                  %v378 = vld [vmem:[%s342 + $0x220] sm:$0xff]
                  %379 = vst [vmem:[%s343 + $0x88] sm:$0xff] %v378
                  %v380 = vld [vmem:[%s342 + $0x240] sm:$0xff]
                  %381 = vst [vmem:[%s343 + $0x90] sm:$0xff] %v380
                  %v382 = vld [vmem:[%s342 + $0x260] sm:$0xff]
                  %383 = vst [vmem:[%s343 + $0x98] sm:$0xff] %v382
                  %v384 = vld [vmem:[%s342 + $0x280] sm:$0xff]
                  %385 = vst [vmem:[%s343 + $0xa0] sm:$0xff] %v384
                  %v386 = vld [vmem:[%s342 + $0x2a0] sm:$0xff]
                  %387 = vst [vmem:[%s343 + $0xa8] sm:$0xff] %v386
                  %v388 = vld [vmem:[%s342 + $0x2c0] sm:$0xff]
                  %389 = vst [vmem:[%s343 + $0xb0] sm:$0xff] %v388
                  %v390 = vld [vmem:[%s342 + $0x2e0] sm:$0xff]
                  %391 = vst [vmem:[%s343 + $0xb8] sm:$0xff] %v390
                  %v392 = vld [vmem:[%s342 + $0x300] sm:$0xff]
                  %393 = vst [vmem:[%s343 + $0xc0] sm:$0xff] %v392
                  %v394 = vld [vmem:[%s342 + $0x320] sm:$0xff]
                  %395 = vst [vmem:[%s343 + $0xc8] sm:$0xff] %v394
                  %v396 = vld [vmem:[%s342 + $0x340] sm:$0xff]
                  %397 = vst [vmem:[%s343 + $0xd0] sm:$0xff] %v396
                  %v398 = vld [vmem:[%s342 + $0x360] sm:$0xff]
                  %399 = vst [vmem:[%s343 + $0xd8] sm:$0xff] %v398
                  %v400 = vld [vmem:[%s342 + $0x380] sm:$0xff]
                  %401 = vst [vmem:[%s343 + $0xe0] sm:$0xff] %v400
                  %v402 = vld [vmem:[%s342 + $0x3a0] sm:$0xff]
                  %403 = vst [vmem:[%s343 + $0xe8] sm:$0xff] %v402
                  %v404 = vld [vmem:[%s342 + $0x3c0] sm:$0xff]
                  %405 = vst [vmem:[%s343 + $0xf0] sm:$0xff] %v404
                  %v406 = vld [vmem:[%s342 + $0x3e0] sm:$0xff]
                  %407 = vst [vmem:[%s343 + $0xf8] sm:$0xff] %v406
                  %v408 = vld [vmem:[%s342 + $0x400] sm:$0xff]
                  %409 = vst [vmem:[%s343 + $0x100] sm:$0xff] %v408
                  %v410 = vld [vmem:[%s342 + $0x420] sm:$0xff]
                  %411 = vst [vmem:[%s343 + $0x108] sm:$0xff] %v410
                  %v412 = vld [vmem:[%s342 + $0x440] sm:$0xff]
                  %413 = vst [vmem:[%s343 + $0x110] sm:$0xff] %v412
                  %v414 = vld [vmem:[%s342 + $0x460] sm:$0xff]
                  %415 = vst [vmem:[%s343 + $0x118] sm:$0xff] %v414
                  %v416 = vld [vmem:[%s342 + $0x480] sm:$0xff]
                  %417 = vst [vmem:[%s343 + $0x120] sm:$0xff] %v416
                  %v418 = vld [vmem:[%s342 + $0x4a0] sm:$0xff]
                  %419 = vst [vmem:[%s343 + $0x128] sm:$0xff] %v418
                  %v420 = vld [vmem:[%s342 + $0x4c0] sm:$0xff]
                  %421 = vst [vmem:[%s343 + $0x130] sm:$0xff] %v420
                  %v422 = vld [vmem:[%s342 + $0x4e0] sm:$0xff]
                  %423 = vst [vmem:[%s343 + $0x138] sm:$0xff] %v422
                  %v424 = vld [vmem:[%s342 + $0x500] sm:$0xff]
                  %425 = vst [vmem:[%s343 + $0x140] sm:$0xff] %v424
                  %v426 = vld [vmem:[%s342 + $0x520] sm:$0xff]
                  %427 = vst [vmem:[%s343 + $0x148] sm:$0xff] %v426
                  %v428 = vld [vmem:[%s342 + $0x540] sm:$0xff]
                  %429 = vst [vmem:[%s343 + $0x150] sm:$0xff] %v428
                  %v430 = vld [vmem:[%s342 + $0x560] sm:$0xff]
                  %431 = vst [vmem:[%s343 + $0x158] sm:$0xff] %v430
                  %v432 = vld [vmem:[%s342 + $0x580] sm:$0xff]
                  %433 = vst [vmem:[%s343 + $0x160] sm:$0xff] %v432
                  %v434 = vld [vmem:[%s342 + $0x5a0] sm:$0xff]
                  %435 = vst [vmem:[%s343 + $0x168] sm:$0xff] %v434
                  %v436 = vld [vmem:[%s342 + $0x5c0] sm:$0xff]
                  %437 = vst [vmem:[%s343 + $0x170] sm:$0xff] %v436
                  %v438 = vld [vmem:[%s342 + $0x5e0] sm:$0xff]
                  %439 = vst [vmem:[%s343 + $0x178] sm:$0xff] %v438
                $region74: #{decoder_forward.17} parent=68 // loop_footer
                  %s341 = sadd.s32 1, %s337
                $region75: #{decoder_forward.17} parent=68 // loop_footer_branch
                  %336 = sbr.rel target = $region71
                $region76: #{decoder_forward.17} parent=68 // loop_exit
                  _
              $region69: #{decoder_forward.17} parent=53 // pred_fallthru
                _
              // Predicated region
              $region77: #{decoder_forward.17} parent=53 // pred_check
                _
              $region78: #{decoder_forward.17} parent=53 // pred_check_branch
                %441 = sbr.rel target = $region80
              $region79: #{decoder_forward.17} parent=53 // pred_region
                _
              $region80: #{decoder_forward.17} parent=53 // pred_fallthru
                _
            $region54: #{decoder_forward.17} parent=49 // pred_fallthru
              _
            // Predicated region
            $region55: #{decoder_forward.17} parent=49 // pred_check
              _
            $region56: #{decoder_forward.17} parent=49 // pred_check_branch
              %228 = sbr.rel target = $region58
            $region57: #{decoder_forward.17} parent=49 // pred_region
              loop: start=0, step=1, limit=1
              $region59: #{decoder_forward.17} parent=57 // loop_pre_header
                _
              $region60: #{decoder_forward.17} parent=57 // loop_header
                %s231 = sphi 0, %s235
                %p232 = scmp.ge.s32.totalorder %s231, 1
                %s236 = sphi %s222, %s222
                %s237 = sphi %s216, %s216
              $region61: #{decoder_forward.17} parent=57 // loop_header_branch
                %234 = sbr.rel (%p232) target = $region65
              $region62: #{decoder_forward.17} parent=57 // loop_body
                %v238 = vld [vmem:[%s236] sm:$0xff]
                %239 = vst [vmem:[%s237] sm:$0xff] %v238
                %v240 = vld [vmem:[%s236 + $0x20] sm:$0xff]
                %241 = vst [vmem:[%s237 + $0x8] sm:$0xff] %v240
                %v242 = vld [vmem:[%s236 + $0x40] sm:$0xff]
                %243 = vst [vmem:[%s237 + $0x10] sm:$0xff] %v242
                %v244 = vld [vmem:[%s236 + $0x60] sm:$0xff]
                %245 = vst [vmem:[%s237 + $0x18] sm:$0xff] %v244
                %v246 = vld [vmem:[%s236 + $0x80] sm:$0xff]
                %247 = vst [vmem:[%s237 + $0x20] sm:$0xff] %v246
                %v248 = vld [vmem:[%s236 + $0xa0] sm:$0xff]
                %249 = vst [vmem:[%s237 + $0x28] sm:$0xff] %v248
                %v250 = vld [vmem:[%s236 + $0xc0] sm:$0xff]
                %251 = vst [vmem:[%s237 + $0x30] sm:$0xff] %v250
                %v252 = vld [vmem:[%s236 + $0xe0] sm:$0xff]
                %253 = vst [vmem:[%s237 + $0x38] sm:$0xff] %v252
                %v254 = vld [vmem:[%s236 + $0x100] sm:$0xff]
                %255 = vst [vmem:[%s237 + $0x40] sm:$0xff] %v254
                %v256 = vld [vmem:[%s236 + $0x120] sm:$0xff]
                %257 = vst [vmem:[%s237 + $0x48] sm:$0xff] %v256
                %v258 = vld [vmem:[%s236 + $0x140] sm:$0xff]
                %259 = vst [vmem:[%s237 + $0x50] sm:$0xff] %v258
                %v260 = vld [vmem:[%s236 + $0x160] sm:$0xff]
                %261 = vst [vmem:[%s237 + $0x58] sm:$0xff] %v260
                %v262 = vld [vmem:[%s236 + $0x180] sm:$0xff]
                %263 = vst [vmem:[%s237 + $0x60] sm:$0xff] %v262
                %v264 = vld [vmem:[%s236 + $0x1a0] sm:$0xff]
                %265 = vst [vmem:[%s237 + $0x68] sm:$0xff] %v264
                %v266 = vld [vmem:[%s236 + $0x1c0] sm:$0xff]
                %267 = vst [vmem:[%s237 + $0x70] sm:$0xff] %v266
                %v268 = vld [vmem:[%s236 + $0x1e0] sm:$0xff]
                %269 = vst [vmem:[%s237 + $0x78] sm:$0xff] %v268
                %v270 = vld [vmem:[%s236 + $0x200] sm:$0xff]
                %271 = vst [vmem:[%s237 + $0x80] sm:$0xff] %v270
                %v272 = vld [vmem:[%s236 + $0x220] sm:$0xff]
                %273 = vst [vmem:[%s237 + $0x88] sm:$0xff] %v272
                %v274 = vld [vmem:[%s236 + $0x240] sm:$0xff]
                %275 = vst [vmem:[%s237 + $0x90] sm:$0xff] %v274
                %v276 = vld [vmem:[%s236 + $0x260] sm:$0xff]
                %277 = vst [vmem:[%s237 + $0x98] sm:$0xff] %v276
                %v278 = vld [vmem:[%s236 + $0x280] sm:$0xff]
                %279 = vst [vmem:[%s237 + $0xa0] sm:$0xff] %v278
                %v280 = vld [vmem:[%s236 + $0x2a0] sm:$0xff]
                %281 = vst [vmem:[%s237 + $0xa8] sm:$0xff] %v280
                %v282 = vld [vmem:[%s236 + $0x2c0] sm:$0xff]
                %283 = vst [vmem:[%s237 + $0xb0] sm:$0xff] %v282
                %v284 = vld [vmem:[%s236 + $0x2e0] sm:$0xff]
                %285 = vst [vmem:[%s237 + $0xb8] sm:$0xff] %v284
                %v286 = vld [vmem:[%s236 + $0x300] sm:$0xff]
                %287 = vst [vmem:[%s237 + $0xc0] sm:$0xff] %v286
                %v288 = vld [vmem:[%s236 + $0x320] sm:$0xff]
                %289 = vst [vmem:[%s237 + $0xc8] sm:$0xff] %v288
                %v290 = vld [vmem:[%s236 + $0x340] sm:$0xff]
                %291 = vst [vmem:[%s237 + $0xd0] sm:$0xff] %v290
                %v292 = vld [vmem:[%s236 + $0x360] sm:$0xff]
                %293 = vst [vmem:[%s237 + $0xd8] sm:$0xff] %v292
                %v294 = vld [vmem:[%s236 + $0x380] sm:$0xff]
                %295 = vst [vmem:[%s237 + $0xe0] sm:$0xff] %v294
                %v296 = vld [vmem:[%s236 + $0x3a0] sm:$0xff]
                %297 = vst [vmem:[%s237 + $0xe8] sm:$0xff] %v296
                %v298 = vld [vmem:[%s236 + $0x3c0] sm:$0xff]
                %299 = vst [vmem:[%s237 + $0xf0] sm:$0xff] %v298
                %v300 = vld [vmem:[%s236 + $0x3e0] sm:$0xff]
                %301 = vst [vmem:[%s237 + $0xf8] sm:$0xff] %v300
                %v302 = vld [vmem:[%s236 + $0x400] sm:$0xff]
                %303 = vst [vmem:[%s237 + $0x100] sm:$0xff] %v302
                %v304 = vld [vmem:[%s236 + $0x420] sm:$0xff]
                %305 = vst [vmem:[%s237 + $0x108] sm:$0xff] %v304
                %v306 = vld [vmem:[%s236 + $0x440] sm:$0xff]
                %307 = vst [vmem:[%s237 + $0x110] sm:$0xff] %v306
                %v308 = vld [vmem:[%s236 + $0x460] sm:$0xff]
                %309 = vst [vmem:[%s237 + $0x118] sm:$0xff] %v308
                %v310 = vld [vmem:[%s236 + $0x480] sm:$0xff]
                %311 = vst [vmem:[%s237 + $0x120] sm:$0xff] %v310
                %v312 = vld [vmem:[%s236 + $0x4a0] sm:$0xff]
                %313 = vst [vmem:[%s237 + $0x128] sm:$0xff] %v312
                %v314 = vld [vmem:[%s236 + $0x4c0] sm:$0xff]
                %315 = vst [vmem:[%s237 + $0x130] sm:$0xff] %v314
                %v316 = vld [vmem:[%s236 + $0x4e0] sm:$0xff]
                %317 = vst [vmem:[%s237 + $0x138] sm:$0xff] %v316
                %v318 = vld [vmem:[%s236 + $0x500] sm:$0xff]
                %319 = vst [vmem:[%s237 + $0x140] sm:$0xff] %v318
                %v320 = vld [vmem:[%s236 + $0x520] sm:$0xff]
                %321 = vst [vmem:[%s237 + $0x148] sm:$0xff] %v320
                %v322 = vld [vmem:[%s236 + $0x540] sm:$0xff]
                %323 = vst [vmem:[%s237 + $0x150] sm:$0xff] %v322
                %v324 = vld [vmem:[%s236 + $0x560] sm:$0xff]
                %325 = vst [vmem:[%s237 + $0x158] sm:$0xff] %v324
                %v326 = vld [vmem:[%s236 + $0x580] sm:$0xff]
                %327 = vst [vmem:[%s237 + $0x160] sm:$0xff] %v326
                %v328 = vld [vmem:[%s236 + $0x5a0] sm:$0xff]
                %329 = vst [vmem:[%s237 + $0x168] sm:$0xff] %v328
                %v330 = vld [vmem:[%s236 + $0x5c0] sm:$0xff]
                %331 = vst [vmem:[%s237 + $0x170] sm:$0xff] %v330
                %v332 = vld [vmem:[%s236 + $0x5e0] sm:$0xff]
                %333 = vst [vmem:[%s237 + $0x178] sm:$0xff] %v332
              $region63: #{decoder_forward.17} parent=57 // loop_footer
                %s235 = sadd.s32 1, %s231
              $region64: #{decoder_forward.17} parent=57 // loop_footer_branch
                %230 = sbr.rel target = $region60
              $region65: #{decoder_forward.17} parent=57 // loop_exit
                _
            $region58: #{decoder_forward.17} parent=49 // pred_fallthru
              _
          $region50: #{decoder_forward.17} parent=45 // pred_fallthru
            _
          %442 = vnop
        $region46: #{decoder_forward.17} parent=15 // pred_fallthru
          _
        // Predicated region
        $region81: #{decoder_forward.17} parent=15 // pred_check
          %p443 = pneg %p104
        $region82: #{decoder_forward.17} parent=15 // pred_check_branch
          %445 = sbr.rel (%p443) target = $region84
        $region83: #{decoder_forward.17} parent=15 // pred_region
          %s446 = smul.u32 2, %s17
          %p447 = scmp.lt.s32.totalorder %s446, 7
          %s448 = scalar_select %p447, %s446, 7
          %s449 = scalar_lea.vmem %s2, %s448
          %s450 = smul.u32 2, %s17
        $region84: #{decoder_forward.17} parent=15 // pred_fallthru
          _
      $region16: #{decoder_forward.17} parent=5 // pred_fallthru
        _
      %p451 = scmp.le.s32.totalorder 1, %s9
      %p452 = scmp.lt.s32.totalorder %s9, 25
      %p453 = pnand %p451, %p452
      %p454 = pneg %p453
      // Predicated region
      $region85: #{decoder_forward.17} parent=5 // pred_check
        _
      $region86: #{decoder_forward.17} parent=5 // pred_check_branch
        %456 = sbr.rel (%p453) target = $region88
      $region87: #{decoder_forward.17} parent=5 // pred_region
        %s457 = ssub.s32 %s9, 1
        %s458 = sand.u32 %s43, 1
        %s459 = sand.u32 %s43, 1
        %s460 = smul.addr %s459, 48
        %s461 = scalar_lea.vmem [#allocation3], %s460
        // Predicated region
        $region89: #{decoder_forward.17} parent=87 // pred_check
          %p462 = pneg %p56
        $region90: #{decoder_forward.17} parent=87 // pred_check_branch
          %464 = sbr.rel (%p462) target = $region92
        $region91: #{decoder_forward.17} parent=87 // pred_region
          _
        $region92: #{decoder_forward.17} parent=87 // pred_fallthru
          _
        %s465 = sand.u32 %s71, 1
        %s466 = sand.u32 %s71, 1
        %s467 = smul.addr %s466, 384
        %s468 = scalar_lea.vmem [#allocation4], %s467
        // Predicated region
        $region93: #{decoder_forward.17} parent=87 // pred_check
          %p469 = pneg %p84
        $region94: #{decoder_forward.17} parent=87 // pred_check_branch
          %471 = sbr.rel (%p469) target = $region96
        $region95: #{decoder_forward.17} parent=87 // pred_region
          _
        $region96: #{decoder_forward.17} parent=87 // pred_fallthru
          _
        %s472 = sand.u32 %s43, 1
        %s473 = sand.u32 %s43, 1
        %s474 = smul.addr %s473, 48
        %s475 = scalar_lea.vmem [#allocation3], %s474
        %p476 = pneg %p56
        %p477 = pneg %p53
        %s478 = sand.u32 %s71, 1
        %s479 = sand.u32 %s71, 1
        %s480 = smul.addr %s479, 384
        %s481 = scalar_lea.vmem [#allocation4], %s480
        %p482 = pneg %p84
        %p483 = pneg %p81
        %s484 = smul.u32 2, %s20
        %p485 = scmp.lt.s32.totalorder %s484, 7
        %s486 = scalar_select %p485, %s484, 7
        %s487 = scalar_lea.vmem %s2, %s486
        %p488 = pneg %p110
        %p489 = pneg %p107
        %p490 = pneg %p138
        %p491 = pneg %p135
        %s492 = sand.u32 %s125, 1
        %s493 = sand.u32 %s125, 1
        %s494 = smul.addr %s493, 64
        %s495 = scalar_lea.vmem [#allocation5], %s494
        %s496 = smul.u32 4, %s19
        %s497 = smul.u32 3, %s21
        %s498 = smul.u32 48, %s21
        %s499 = smul.u32 2, %s20
        %s500 = smul.u32 2, %s20
        %p501 = scmp.lt.s32.totalorder %s500, 7
        %s502 = scalar_select %p501, %s500, 7
        %s503 = scalar_lea.vmem %s2, %s502
        %s504 = smul.u32 2, %s20
        %s505 = smul.u32 4, %s19
        %s506 = smul.u32 2, %s20
        %p508 = scmp.eq.s32.totalorder %s21, 0
        // Predicated region
        $region97: #{decoder_forward.17} parent=87 // pred_check
          %p509 = pneg %p508
        $region98: #{decoder_forward.17} parent=87 // pred_check_branch
          %511 = sbr.rel (%p509) target = $region100
        $region99: #{decoder_forward.17} parent=87 // pred_region
          %512 = vst [vmem:[#allocation2] sm:$0xff] 0.0
          %513 = vst [vmem:[#allocation2 + $0x8] sm:$0xff] 0.0
          %514 = vst [vmem:[#allocation2 + $0x10] sm:$0xff] 0.0
          %515 = vst [vmem:[#allocation2 + $0x18] sm:$0xff] 0.0
          %516 = vst [vmem:[#allocation2 + $0x20] sm:$0xff] 0.0
          %517 = vst [vmem:[#allocation2 + $0x28] sm:$0xff] 0.0
          %518 = vst [vmem:[#allocation2 + $0x30] sm:$0xff] 0.0
          %519 = vst [vmem:[#allocation2 + $0x38] sm:$0xff] 0.0
        $region100: #{decoder_forward.17} parent=87 // pred_fallthru
          _
        %v520 = vld [vmem:[#allocation2] sm:$0xff]
        %v521 = vld [vmem:[#allocation2 + $0x8] sm:$0xff]
        %v522 = vld [vmem:[#allocation2 + $0x10] sm:$0xff]
        %v523 = vld [vmem:[#allocation2 + $0x18] sm:$0xff]
        %v524 = vld [vmem:[#allocation2 + $0x20] sm:$0xff]
        %v525 = vld [vmem:[#allocation2 + $0x28] sm:$0xff]
        %v526 = vld [vmem:[#allocation2 + $0x30] sm:$0xff]
        %v527 = vld [vmem:[#allocation2 + $0x38] sm:$0xff]
        %v528 = vld [vmem:[%s461] sm:$0xff]
        %v529 = vld [vmem:[%s461 + $0x8] sm:$0xf]
        %v530 = vld [vmem:[%s461 + $0xc] sm:$0xff]
        %v531 = vld [vmem:[%s461 + $0x14] sm:$0xf]
        %v532 = vld [vmem:[%s461 + $0x18] sm:$0xff]
        %v533 = vld [vmem:[%s461 + $0x20] sm:$0xf]
        %v534 = vld [vmem:[%s461 + $0x24] sm:$0xff]
        %v535 = vld [vmem:[%s461 + $0x2c] sm:$0xf]
        %v536 = vld [vmem:[%s468] sm:$0xff]
        %v537 = vld [vmem:[%s468 + $0x8] sm:$0xff]
        %v538 = vld [vmem:[%s468 + $0x10] sm:$0xff]
        %v539 = vld [vmem:[%s468 + $0x18] sm:$0xff]
        %v540 = vld [vmem:[%s468 + $0x20] sm:$0xff]
        %v541 = vld [vmem:[%s468 + $0x28] sm:$0xff]
        %v542 = vld [vmem:[%s468 + $0x30] sm:$0xff]
        %v543 = vld [vmem:[%s468 + $0x38] sm:$0xff]
        %v544 = vld [vmem:[%s468 + $0x40] sm:$0xff]
        %v545 = vld [vmem:[%s468 + $0x48] sm:$0xff]
        %v546 = vld [vmem:[%s468 + $0x50] sm:$0xff]
        %v547 = vld [vmem:[%s468 + $0x58] sm:$0xff]
        %v548 = vld [vmem:[%s468 + $0x60] sm:$0xff]
        %v549 = vld [vmem:[%s468 + $0x68] sm:$0xff]
        %v550 = vld [vmem:[%s468 + $0x70] sm:$0xff]
        %v551 = vld [vmem:[%s468 + $0x78] sm:$0xff]
        %v552 = vld [vmem:[%s468 + $0x80] sm:$0xff]
        %v553 = vld [vmem:[%s468 + $0x88] sm:$0xff]
        %v554 = vld [vmem:[%s468 + $0x90] sm:$0xff]
        %v555 = vld [vmem:[%s468 + $0x98] sm:$0xff]
        %v556 = vld [vmem:[%s468 + $0xa0] sm:$0xff]
        %v557 = vld [vmem:[%s468 + $0xa8] sm:$0xff]
        %v558 = vld [vmem:[%s468 + $0xb0] sm:$0xff]
        %v559 = vld [vmem:[%s468 + $0xb8] sm:$0xff]
        %v560 = vld [vmem:[%s468 + $0xc0] sm:$0xff]
        %v561 = vld [vmem:[%s468 + $0xc8] sm:$0xff]
        %v562 = vld [vmem:[%s468 + $0xd0] sm:$0xff]
        %v563 = vld [vmem:[%s468 + $0xd8] sm:$0xff]
        %v564 = vld [vmem:[%s468 + $0xe0] sm:$0xff]
        %v565 = vld [vmem:[%s468 + $0xe8] sm:$0xff]
        %v566 = vld [vmem:[%s468 + $0xf0] sm:$0xff]
        %v567 = vld [vmem:[%s468 + $0xf8] sm:$0xff]
        %v568 = vld [vmem:[%s468 + $0x100] sm:$0xff]
        %v569 = vld [vmem:[%s468 + $0x108] sm:$0xff]
        %v570 = vld [vmem:[%s468 + $0x110] sm:$0xff]
        %v571 = vld [vmem:[%s468 + $0x118] sm:$0xff]
        %v572 = vld [vmem:[%s468 + $0x120] sm:$0xff]
        %v573 = vld [vmem:[%s468 + $0x128] sm:$0xff]
        %v574 = vld [vmem:[%s468 + $0x130] sm:$0xff]
        %v575 = vld [vmem:[%s468 + $0x138] sm:$0xff]
        %v576 = vld [vmem:[%s468 + $0x140] sm:$0xff]
        %v577 = vld [vmem:[%s468 + $0x148] sm:$0xff]
        %v578 = vld [vmem:[%s468 + $0x150] sm:$0xff]
        %v579 = vld [vmem:[%s468 + $0x158] sm:$0xff]
        %v580 = vld [vmem:[%s468 + $0x160] sm:$0xff]
        %v581 = vld [vmem:[%s468 + $0x168] sm:$0xff]
        %v582 = vld [vmem:[%s468 + $0x170] sm:$0xff]
        %v583 = vld [vmem:[%s468 + $0x178] sm:$0xff]
        %v592 = vunpack.c.l.b16 %v528
        %v593 = vunpack.c.h.b16 %v528
        %v594 = vunpack.c.l.b16 %v529
        %v595 = vunpack.c.l.b16 %v530
        %v596 = vunpack.c.h.b16 %v530
        %v597 = vunpack.c.l.b16 %v531
        %v598 = vunpack.c.l.b16 %v532
        %v599 = vunpack.c.h.b16 %v532
        %v600 = vunpack.c.l.b16 %v533
        %v601 = vunpack.c.l.b16 %v534
        %v602 = vunpack.c.h.b16 %v534
        %v603 = vunpack.c.l.b16 %v535
        %v604 = vpack.c.b16 %v595, %v592
        %v605 = vpack.c.b16 %v596, %v593
        %v606 = vpack.c.b16 %v597, %v594
        %v607 = vpack.c.b16 %v601, %v598
        %v608 = vpack.c.b16 %v602, %v599
        %v609 = vpack.c.b16 %v603, %v600
        %v664 = vunpack.c.l.b16 %v536
        %v665 = vunpack.c.h.b16 %v536
        %v666 = vunpack.c.l.b16 %v537
        %v667 = vunpack.c.h.b16 %v537
        %v668 = vunpack.c.l.b16 %v538
        %v669 = vunpack.c.h.b16 %v538
        %v670 = vunpack.c.l.b16 %v539
        %v671 = vunpack.c.h.b16 %v539
        %v672 = vunpack.c.l.b16 %v540
        %v673 = vunpack.c.h.b16 %v540
        %v674 = vunpack.c.l.b16 %v541
        %v675 = vunpack.c.h.b16 %v541
        %v676 = vunpack.c.l.b16 %v542
        %v677 = vunpack.c.h.b16 %v542
        %v678 = vunpack.c.l.b16 %v543
        %v679 = vunpack.c.h.b16 %v543
        %v680 = vunpack.c.l.b16 %v544
        %v681 = vunpack.c.h.b16 %v544
        %v682 = vunpack.c.l.b16 %v545
        %v683 = vunpack.c.h.b16 %v545
        %v684 = vunpack.c.l.b16 %v546
        %v685 = vunpack.c.h.b16 %v546
        %v686 = vunpack.c.l.b16 %v547
        %v687 = vunpack.c.h.b16 %v547
        %v688 = vunpack.c.l.b16 %v548
        %v689 = vunpack.c.h.b16 %v548
        %v690 = vunpack.c.l.b16 %v549
        %v691 = vunpack.c.h.b16 %v549
        %v692 = vunpack.c.l.b16 %v550
        %v693 = vunpack.c.h.b16 %v550
        %v694 = vunpack.c.l.b16 %v551
        %v695 = vunpack.c.h.b16 %v551
        %v696 = vunpack.c.l.b16 %v552
        %v697 = vunpack.c.h.b16 %v552
        %v698 = vunpack.c.l.b16 %v553
        %v699 = vunpack.c.h.b16 %v553
        %v700 = vunpack.c.l.b16 %v554
        %v701 = vunpack.c.h.b16 %v554
        %v702 = vunpack.c.l.b16 %v555
        %v703 = vunpack.c.h.b16 %v555
        %v704 = vunpack.c.l.b16 %v556
        %v705 = vunpack.c.h.b16 %v556
        %v706 = vunpack.c.l.b16 %v557
        %v707 = vunpack.c.h.b16 %v557
        %v708 = vunpack.c.l.b16 %v558
        %v709 = vunpack.c.h.b16 %v558
        %v710 = vunpack.c.l.b16 %v559
        %v711 = vunpack.c.h.b16 %v559
        %v712 = vunpack.c.l.b16 %v560
        %v713 = vunpack.c.h.b16 %v560
        %v714 = vunpack.c.l.b16 %v561
        %v715 = vunpack.c.h.b16 %v561
        %v716 = vunpack.c.l.b16 %v562
        %v717 = vunpack.c.h.b16 %v562
        %v718 = vunpack.c.l.b16 %v563
        %v719 = vunpack.c.h.b16 %v563
        %v720 = vunpack.c.l.b16 %v564
        %v721 = vunpack.c.h.b16 %v564
        %v722 = vunpack.c.l.b16 %v565
        %v723 = vunpack.c.h.b16 %v565
        %v724 = vunpack.c.l.b16 %v566
        %v725 = vunpack.c.h.b16 %v566
        %v726 = vunpack.c.l.b16 %v567
        %v727 = vunpack.c.h.b16 %v567
        %v728 = vunpack.c.l.b16 %v568
        %v729 = vunpack.c.h.b16 %v568
        %v730 = vunpack.c.l.b16 %v569
        %v731 = vunpack.c.h.b16 %v569
        %v732 = vunpack.c.l.b16 %v570
        %v733 = vunpack.c.h.b16 %v570
        %v734 = vunpack.c.l.b16 %v571
        %v735 = vunpack.c.h.b16 %v571
        %v736 = vunpack.c.l.b16 %v572
        %v737 = vunpack.c.h.b16 %v572
        %v738 = vunpack.c.l.b16 %v573
        %v739 = vunpack.c.h.b16 %v573
        %v740 = vunpack.c.l.b16 %v574
        %v741 = vunpack.c.h.b16 %v574
        %v742 = vunpack.c.l.b16 %v575
        %v743 = vunpack.c.h.b16 %v575
        %v744 = vunpack.c.l.b16 %v576
        %v745 = vunpack.c.h.b16 %v576
        %v746 = vunpack.c.l.b16 %v577
        %v747 = vunpack.c.h.b16 %v577
        %v748 = vunpack.c.l.b16 %v578
        %v749 = vunpack.c.h.b16 %v578
        %v750 = vunpack.c.l.b16 %v579
        %v751 = vunpack.c.h.b16 %v579
        %v752 = vunpack.c.l.b16 %v580
        %v753 = vunpack.c.h.b16 %v580
        %v754 = vunpack.c.l.b16 %v581
        %v755 = vunpack.c.h.b16 %v581
        %v756 = vunpack.c.l.b16 %v582
        %v757 = vunpack.c.h.b16 %v582
        %v758 = vunpack.c.l.b16 %v583
        %v759 = vunpack.c.h.b16 %v583
        %v760 = vpack.c.b16 %v666, %v664
        %v761 = vpack.c.b16 %v667, %v665
        %v762 = vpack.c.b16 %v670, %v668
        %v763 = vpack.c.b16 %v671, %v669
        %v764 = vpack.c.b16 %v674, %v672
        %v765 = vpack.c.b16 %v675, %v673
        %v766 = vpack.c.b16 %v678, %v676
        %v767 = vpack.c.b16 %v679, %v677
        %v768 = vpack.c.b16 %v682, %v680
        %v769 = vpack.c.b16 %v683, %v681
        %v770 = vpack.c.b16 %v686, %v684
        %v771 = vpack.c.b16 %v687, %v685
        %v772 = vpack.c.b16 %v690, %v688
        %v773 = vpack.c.b16 %v691, %v689
        %v774 = vpack.c.b16 %v694, %v692
        %v775 = vpack.c.b16 %v695, %v693
        %v776 = vpack.c.b16 %v698, %v696
        %v777 = vpack.c.b16 %v699, %v697
        %v778 = vpack.c.b16 %v702, %v700
        %v779 = vpack.c.b16 %v703, %v701
        %v780 = vpack.c.b16 %v706, %v704
        %v781 = vpack.c.b16 %v707, %v705
        %v782 = vpack.c.b16 %v710, %v708
        %v783 = vpack.c.b16 %v711, %v709
        %v784 = vpack.c.b16 %v714, %v712
        %v785 = vpack.c.b16 %v715, %v713
        %v786 = vpack.c.b16 %v718, %v716
        %v787 = vpack.c.b16 %v719, %v717
        %v788 = vpack.c.b16 %v722, %v720
        %v789 = vpack.c.b16 %v723, %v721
        %v790 = vpack.c.b16 %v726, %v724
        %v791 = vpack.c.b16 %v727, %v725
        %v792 = vpack.c.b16 %v730, %v728
        %v793 = vpack.c.b16 %v731, %v729
        %v794 = vpack.c.b16 %v734, %v732
        %v795 = vpack.c.b16 %v735, %v733
        %v796 = vpack.c.b16 %v738, %v736
        %v797 = vpack.c.b16 %v739, %v737
        %v798 = vpack.c.b16 %v742, %v740
        %v799 = vpack.c.b16 %v743, %v741
        %v800 = vpack.c.b16 %v746, %v744
        %v801 = vpack.c.b16 %v747, %v745
        %v802 = vpack.c.b16 %v750, %v748
        %v803 = vpack.c.b16 %v751, %v749
        %v804 = vpack.c.b16 %v754, %v752
        %v805 = vpack.c.b16 %v755, %v753
        %v806 = vpack.c.b16 %v758, %v756
        %v807 = vpack.c.b16 %v759, %v757
        %856 = vmatprep.subr.bf16.mxu0 %v761
        %857 = vmatpush1.bf16.msra.mxu0 %v760
        %858 = vmatprep.subr.bf16.mxu0 %v763
        %859 = vmatpush1.bf16.msra.mxu0 %v762
        %860 = vmatprep.subr.bf16.mxu0 %v765
        %861 = vmatpush1.bf16.msra.mxu0 %v764
        %862 = vmatprep.subr.bf16.mxu0 %v767
        %863 = vmatpush1.bf16.msra.mxu0 %v766
        %864 = vmatprep.subr.bf16.mxu0 %v769
        %865 = vmatpush1.bf16.msra.mxu0 %v768
        %866 = vmatprep.subr.bf16.mxu0 %v771
        %867 = vmatpush1.bf16.msra.mxu0 %v770
        %868 = vmatprep.subr.bf16.mxu0 %v773
        %869 = vmatpush1.bf16.msra.mxu0 %v772
        %870 = vmatprep.subr.bf16.mxu0 %v775
        %871 = vmatpush1.bf16.msra.mxu0 %v774
        %872 = vmatprep.subr.bf16.mxu0 %v777
        %873 = vmatpush1.bf16.msra.mxu0 %v776
        %874 = vmatprep.subr.bf16.mxu0 %v779
        %875 = vmatpush1.bf16.msra.mxu0 %v778
        %876 = vmatprep.subr.bf16.mxu0 %v781
        %877 = vmatpush1.bf16.msra.mxu0 %v780
        %878 = vmatprep.subr.bf16.mxu0 %v783
        %879 = vmatpush1.bf16.msra.mxu0 %v782
        %880 = vmatprep.subr.bf16.mxu0 %v785
        %881 = vmatpush1.bf16.msra.mxu0 %v784
        %882 = vmatprep.subr.bf16.mxu0 %v787
        %883 = vmatpush1.bf16.msra.mxu0 %v786
        %884 = vmatprep.subr.bf16.mxu0 %v789
        %885 = vmatpush1.bf16.msra.mxu0 %v788
        %886 = vmatprep.subr.bf16.mxu0 %v791
        %887 = vmatpush1.bf16.msra.mxu0 %v790
        %888 = vmatprep.mubr.bf16.mxu0 %v605
        %889 = vmatmul.mubr.bf16.gmra.mrb[0].mxu0 %v604
        %v890 = vpop.f32.mrb[0].mxu0
        %v891 = vadd.f32 0.0, %v890
        %v892 = vpop.f32.mrb[0].mxu0
        %v893 = vadd.f32 0.0, %v892
        %v894 = vpop.f32.mrb[0].mxu0
        %v895 = vadd.f32 0.0, %v894
        %v896 = vpop.f32.mrb[0].mxu0
        %v897 = vadd.f32 0.0, %v896
        %898 = vmatprep.mubr.bf16.mxu0 %v608
        %899 = vmatmul.mubr.bf16.gmra.mrb[0].mxu0 %v607
        %v900 = vpop.f32.mrb[0].mxu0
        %v901 = vadd.f32 0.0, %v900
        %v902 = vpop.f32.mrb[0].mxu0
        %v903 = vadd.f32 0.0, %v902
        %v904 = vpop.f32.mrb[0].mxu0
        %v905 = vadd.f32 0.0, %v904
        %v906 = vpop.f32.mrb[0].mxu0
        %v907 = vadd.f32 0.0, %v906
        %908 = vdwg.mxu0
        %909 = vmatprep.subr.bf16.mxu0 %v793
        %910 = vmatpush1.bf16.msra.mxu0 %v792
        %911 = vmatprep.subr.bf16.mxu0 %v795
        %912 = vmatpush1.bf16.msra.mxu0 %v794
        %913 = vmatprep.subr.bf16.mxu0 %v797
        %914 = vmatpush1.bf16.msra.mxu0 %v796
        %915 = vmatprep.subr.bf16.mxu0 %v799
        %916 = vmatpush1.bf16.msra.mxu0 %v798
        %917 = vmatprep.subr.bf16.mxu0 %v801
        %918 = vmatpush1.bf16.msra.mxu0 %v800
        %919 = vmatprep.subr.bf16.mxu0 %v803
        %920 = vmatpush1.bf16.msra.mxu0 %v802
        %921 = vmatprep.subr.bf16.mxu0 %v805
        %922 = vmatpush1.bf16.msra.mxu0 %v804
        %923 = vmatprep.subr.bf16.mxu0 %v807
        %924 = vmatpush1.bf16.msra.mxu0 %v806
        %925 = vmatprep.subr.bf16.mxu0 0
        %926 = vmatpush1.bf16.msra.mxu0 0
        %927 = vmatprep.subr.bf16.mxu0 0
        %928 = vmatpush1.bf16.msra.mxu0 0
        %929 = vmatprep.subr.bf16.mxu0 0
        %930 = vmatpush1.bf16.msra.mxu0 0
        %931 = vmatprep.subr.bf16.mxu0 0
        %932 = vmatpush1.bf16.msra.mxu0 0
        %933 = vmatprep.subr.bf16.mxu0 0
        %934 = vmatpush1.bf16.msra.mxu0 0
        %935 = vmatprep.subr.bf16.mxu0 0
        %936 = vmatpush1.bf16.msra.mxu0 0
        %937 = vmatprep.subr.bf16.mxu0 0
        %938 = vmatpush1.bf16.msra.mxu0 0
        %939 = vmatprep.subr.bf16.mxu0 0
        %940 = vmatpush1.bf16.msra.mxu0 0
        %941 = vmatprep.mubr.bf16.mxu0 0
        %942 = vmatmul.mubr.bf16.gmra.mrb[0].mxu0 %v606
        %v943 = vpop.f32.mrb[0].mxu0
        %v944 = vadd.f32 %v891, %v943
        %v945 = vpop.f32.mrb[0].mxu0
        %v946 = vadd.f32 %v893, %v945
        %v947 = vpop.f32.mrb[0].mxu0
        %v948 = vadd.f32 %v895, %v947
        %v949 = vpop.f32.mrb[0].mxu0
        %v950 = vadd.f32 %v897, %v949
        %951 = vmatprep.mubr.bf16.mxu0 0
        %952 = vmatmul.mubr.bf16.gmra.mrb[0].mxu0 %v609
        %v953 = vpop.f32.mrb[0].mxu0
        %v954 = vadd.f32 %v901, %v953
        %v955 = vpop.f32.mrb[0].mxu0
        %v956 = vadd.f32 %v903, %v955
        %v957 = vpop.f32.mrb[0].mxu0
        %v958 = vadd.f32 %v905, %v957
        %v959 = vpop.f32.mrb[0].mxu0
        %v960 = vadd.f32 %v907, %v959
        %961 = vdwg.mxu0
        %v962 = vadd.f32 %v520, %v944
        %v963 = vadd.f32 %v521, %v946
        %v964 = vadd.f32 %v522, %v948
        %v965 = vadd.f32 %v523, %v950
        %v966 = vadd.f32 %v524, %v954
        %v967 = vadd.f32 %v525, %v956
        %v968 = vadd.f32 %v526, %v958
        %v969 = vadd.f32 %v527, %v960
        %970 = vst [vmem:[#allocation2] sm:$0xff] %v962
        %971 = vst [vmem:[#allocation2 + $0x8] sm:$0xff] %v963
        %972 = vst [vmem:[#allocation2 + $0x10] sm:$0xff] %v964
        %973 = vst [vmem:[#allocation2 + $0x18] sm:$0xff] %v965
        %974 = vst [vmem:[#allocation2 + $0x20] sm:$0xff] %v966
        %975 = vst [vmem:[#allocation2 + $0x28] sm:$0xff] %v967
        %976 = vst [vmem:[#allocation2 + $0x30] sm:$0xff] %v968
        %977 = vst [vmem:[#allocation2 + $0x38] sm:$0xff] %v969
        %p978 = scmp.eq.s32.totalorder %s21, 5
        // Predicated region
        $region101: #{decoder_forward.17} parent=87 // pred_check
          %p979 = pneg %p978
        $region102: #{decoder_forward.17} parent=87 // pred_check_branch
          %981 = sbr.rel (%p979) target = $region104
        $region103: #{decoder_forward.17} parent=87 // pred_region
          %v982 = vld [vmem:[#allocation2] sm:$0xff]
          %v983 = vld [vmem:[#allocation2 + $0x8] sm:$0xff]
          %v984 = vld [vmem:[#allocation2 + $0x10] sm:$0xff]
          %v985 = vld [vmem:[#allocation2 + $0x18] sm:$0xff]
          %v986 = vld [vmem:[#allocation2 + $0x20] sm:$0xff]
          %v987 = vld [vmem:[#allocation2 + $0x28] sm:$0xff]
          %v988 = vld [vmem:[#allocation2 + $0x30] sm:$0xff]
          %v989 = vld [vmem:[#allocation2 + $0x38] sm:$0xff]
          %v990 = vld [vmem:[%s503] sm:$0x3]
          %v992 = vlaneseq
          %v993 = vshrl.u32 %v992, 7
          %v994 = vsub.s32 0, %v993
          %v995 = vrot.slane %v990, %v994
          %v996 = vlaneseq
          %v997 = vshrl.u32 %v996, 7
          %v998 = vsub.s32 1, %v997
          %v999 = vrot.slane %v990, %v998
          %v1002 = vadd.f32 %v982, %v995
          %v1003 = vadd.f32 %v983, %v999
          %v1004 = vadd.f32 %v984, %v995
          %v1005 = vadd.f32 %v985, %v999
          %v1006 = vadd.f32 %v986, %v995
          %v1007 = vadd.f32 %v987, %v999
          %v1008 = vadd.f32 %v988, %v995
          %v1009 = vadd.f32 %v989, %v999
          %1010 = vst [vmem:[%s495] sm:$0xff] %v1002
          %1011 = vst [vmem:[%s495 + $0x8] sm:$0xff] %v1003
          %1012 = vst [vmem:[%s495 + $0x10] sm:$0xff] %v1004
          %1013 = vst [vmem:[%s495 + $0x18] sm:$0xff] %v1005
          %1014 = vst [vmem:[%s495 + $0x20] sm:$0xff] %v1006
          %1015 = vst [vmem:[%s495 + $0x28] sm:$0xff] %v1007
          %1016 = vst [vmem:[%s495 + $0x30] sm:$0xff] %v1008
          %1017 = vst [vmem:[%s495 + $0x38] sm:$0xff] %v1009
        $region104: #{decoder_forward.17} parent=87 // pred_fallthru
          _
        %s1018 = sand.u32 %s125, 1
        %s1019 = sand.u32 %s125, 1
        %s1020 = smul.addr %s1019, 64
        %s1021 = scalar_lea.vmem [#allocation5], %s1020
        // Predicated region
        $region105: #{decoder_forward.17} parent=87 // pred_check
          %p1022 = pneg %p135
        $region106: #{decoder_forward.17} parent=87 // pred_check_branch
          %1024 = sbr.rel (%p1022) target = $region108
        $region107: #{decoder_forward.17} parent=87 // pred_region
          %s1025 = smul.u32 4, %s19
          %s1026 = smul.u32 2, %s20
          %s1027 = smul.addr %s1025, 8
          %s1028 = sadd.s32 %s1026, %s1027
          %s1029 = smul.addr %s1028, 8
          %s1030 = scalar_lea.vmem %s3, %s1029
          // Predicated region
          $region109: #{decoder_forward.17} parent=107 // pred_check
            _
          $region110: #{decoder_forward.17} parent=107 // pred_check_branch
            %1032 = sbr.rel (0) target = $region112
          $region111: #{decoder_forward.17} parent=107 // pred_region
            // Predicated region
            $region113: #{decoder_forward.17} parent=111 // pred_check
              _
            $region114: #{decoder_forward.17} parent=111 // pred_check_branch
              %1034 = sbr.rel (0) target = $region116
            $region115: #{decoder_forward.17} parent=111 // pred_region
              loop: start=0, step=1, limit=1
              $region117: #{decoder_forward.17} parent=115 // loop_pre_header
                _
              $region118: #{decoder_forward.17} parent=115 // loop_header
                %s1036 = sphi 0, %s1040
                %p1037 = scmp.ge.s32.totalorder %s1036, 1
                %s1041 = sphi %s1021, %s1021
                %s1042 = sphi %s1030, %s1030
              $region119: #{decoder_forward.17} parent=115 // loop_header_branch
                %1039 = sbr.rel (%p1037) target = $region123
              $region120: #{decoder_forward.17} parent=115 // loop_body
                %v1043 = vld [vmem:[%s1041] sm:$0xff]
                %1044 = vst [vmem:[%s1042] sm:$0xff] %v1043
                %v1045 = vld [vmem:[%s1041 + $0x8] sm:$0xff]
                %1046 = vst [vmem:[%s1042 + $0x8] sm:$0xff] %v1045
                %v1047 = vld [vmem:[%s1041 + $0x10] sm:$0xff]
                %1048 = vst [vmem:[%s1042 + $0x40] sm:$0xff] %v1047
                %v1049 = vld [vmem:[%s1041 + $0x18] sm:$0xff]
                %1050 = vst [vmem:[%s1042 + $0x48] sm:$0xff] %v1049
                %v1051 = vld [vmem:[%s1041 + $0x20] sm:$0xff]
                %1052 = vst [vmem:[%s1042 + $0x80] sm:$0xff] %v1051
                %v1053 = vld [vmem:[%s1041 + $0x28] sm:$0xff]
                %1054 = vst [vmem:[%s1042 + $0x88] sm:$0xff] %v1053
                %v1055 = vld [vmem:[%s1041 + $0x30] sm:$0xff]
                %1056 = vst [vmem:[%s1042 + $0xc0] sm:$0xff] %v1055
                %v1057 = vld [vmem:[%s1041 + $0x38] sm:$0xff]
                %1058 = vst [vmem:[%s1042 + $0xc8] sm:$0xff] %v1057
              $region121: #{decoder_forward.17} parent=115 // loop_footer
                %s1040 = sadd.s32 1, %s1036
              $region122: #{decoder_forward.17} parent=115 // loop_footer_branch
                %1035 = sbr.rel target = $region118
              $region123: #{decoder_forward.17} parent=115 // loop_exit
                _
            $region116: #{decoder_forward.17} parent=111 // pred_fallthru
              _
            // Predicated region
            $region124: #{decoder_forward.17} parent=111 // pred_check
              _
            $region125: #{decoder_forward.17} parent=111 // pred_check_branch
              %1060 = sbr.rel target = $region127
            $region126: #{decoder_forward.17} parent=111 // pred_region
              _
            $region127: #{decoder_forward.17} parent=111 // pred_fallthru
              _
          $region112: #{decoder_forward.17} parent=107 // pred_fallthru
            _
          %1061 = vnop
        $region108: #{decoder_forward.17} parent=87 // pred_fallthru
          _
      $region88: #{decoder_forward.17} parent=5 // pred_fallthru
        _
      %p1062 = scmp.le.s32.totalorder 2, %s9
      // Predicated region
      $region128: #{decoder_forward.17} parent=5 // pred_check
        %p1063 = pneg %p1062
      $region129: #{decoder_forward.17} parent=5 // pred_check_branch
        %1065 = sbr.rel (%p1063) target = $region131
      $region130: #{decoder_forward.17} parent=5 // pred_region
        %s1066 = ssub.s32 %s9, 2
        // Predicated region
        $region132: #{decoder_forward.17} parent=130 // pred_check
          %p1067 = pneg %p141
        $region133: #{decoder_forward.17} parent=130 // pred_check_branch
          %1069 = sbr.rel (%p1067) target = $region135
        $region134: #{decoder_forward.17} parent=130 // pred_region
          %s1070 = sand.u32 %s126, 1
          %s1071 = sand.u32 %s126, 1
          %s1072 = smul.addr %s1071, 64
          %s1073 = scalar_lea.vmem [#allocation5], %s1072
        $region135: #{decoder_forward.17} parent=130 // pred_fallthru
          _
      $region131: #{decoder_forward.17} parent=5 // pred_fallthru
        _
    $region6: #{decoder_forward.17} parent=1 // loop_footer
      %s13 = sadd.s32 1, %s9
    $region7: #{decoder_forward.17} parent=1 // loop_footer_branch
      %8 = sbr.rel target = $region3
    $region8: #{decoder_forward.17} parent=1 // loop_exit
      _

// kernel: decoder_forward.18
$region0: #{decoder_forward.18}
  #allocation0 [shape = 'u32[]', space=smem, size = 0x4, offset = 0x4, fixed_abs, tag = 'smem constant byte address 0x4 - core index']
  #allocation1 [shape = 'u32[144,128]{1,0:T(1,128)}', space=vmem, size = 0x12000, scoped, tag = 'internal scratch']
  %s0 = inlined_call_operand.vmem [shape: f32[128,256], index: 0, kind: input, shape index: {}]
  %s1 = inlined_call_operand.vmem [shape: f32[1,256], index: 1, kind: input, shape index: {}]
  %s2 = inlined_call_operand.vmem [shape: f32[1,256], index: 2, kind: input, shape index: {}]
  %s3 = inlined_call_operand.vmem [shape: f32[128,256], index: 3, kind: output, shape index: {}]
  %s4 = sld [smem:[#allocation0]]
  $region22: #{decoder_forward.18} parent=0
    _
  %s6 = ssub.s32 1, %s4
  %s7 = scalar_select 0, %s6, %s4
  // Predicated region
  $region2: #{decoder_forward.18} parent=0 // pred_check
    _
  $region3: #{decoder_forward.18} parent=0 // pred_check_branch
    %9 = sbr.rel (0) target = $region5
  $region4: #{decoder_forward.18} parent=0 // pred_region
    _
  $region5: #{decoder_forward.18} parent=0 // pred_fallthru
    _
  // Predicated region
  $region6: #{decoder_forward.18} parent=0 // pred_check
    _
  $region7: #{decoder_forward.18} parent=0 // pred_check_branch
    %11 = sbr.rel (0) target = $region9
  $region8: #{decoder_forward.18} parent=0 // pred_region
    _
  $region9: #{decoder_forward.18} parent=0 // pred_fallthru
    _
  // Predicated region
  $region10: #{decoder_forward.18} parent=0 // pred_check
    _
  $region11: #{decoder_forward.18} parent=0 // pred_check_branch
    %13 = sbr.rel (0) target = $region13
  $region12: #{decoder_forward.18} parent=0 // pred_region
    _
  $region13: #{decoder_forward.18} parent=0 // pred_fallthru
    _
  %v14 = vld [vmem:[%s0] sm:$0xff]
  %v15 = vld [vmem:[%s0 + $0x8] sm:$0xff]
  %v16 = vld [vmem:[%s0 + $0x10] sm:$0xff]
  %v17 = vld [vmem:[%s0 + $0x18] sm:$0xff]
  %v18 = vld [vmem:[%s0 + $0x20] sm:$0xff]
  %v19 = vld [vmem:[%s0 + $0x28] sm:$0xff]
  %v20 = vld [vmem:[%s0 + $0x30] sm:$0xff]
  %v21 = vld [vmem:[%s0 + $0x38] sm:$0xff]
  %v22 = vld [vmem:[%s0 + $0x40] sm:$0xff]
  %v23 = vld [vmem:[%s0 + $0x48] sm:$0xff]
  %v24 = vld [vmem:[%s0 + $0x50] sm:$0xff]
  %v25 = vld [vmem:[%s0 + $0x58] sm:$0xff]
  %v26 = vld [vmem:[%s0 + $0x60] sm:$0xff]
  %v27 = vld [vmem:[%s0 + $0x68] sm:$0xff]
  %v28 = vld [vmem:[%s0 + $0x70] sm:$0xff]
  %v29 = vld [vmem:[%s0 + $0x78] sm:$0xff]
  %v30 = vld [vmem:[%s0 + $0x80] sm:$0xff]
  %v31 = vld [vmem:[%s0 + $0x88] sm:$0xff]
  %v32 = vld [vmem:[%s0 + $0x90] sm:$0xff]
  %v33 = vld [vmem:[%s0 + $0x98] sm:$0xff]
  %v34 = vld [vmem:[%s0 + $0xa0] sm:$0xff]
  %v35 = vld [vmem:[%s0 + $0xa8] sm:$0xff]
  %v36 = vld [vmem:[%s0 + $0xb0] sm:$0xff]
  %v37 = vld [vmem:[%s0 + $0xb8] sm:$0xff]
  %v38 = vld [vmem:[%s0 + $0xc0] sm:$0xff]
  %v39 = vld [vmem:[%s0 + $0xc8] sm:$0xff]
  %v40 = vld [vmem:[%s0 + $0xd0] sm:$0xff]
  %v41 = vld [vmem:[%s0 + $0xd8] sm:$0xff]
  %v42 = vld [vmem:[%s0 + $0xe0] sm:$0xff]
  %v43 = vld [vmem:[%s0 + $0xe8] sm:$0xff]
  %v44 = vld [vmem:[%s0 + $0xf0] sm:$0xff]
  %v45 = vld [vmem:[%s0 + $0xf8] sm:$0xff]
  %v46 = vadd.f32 %v14, %v16
  %v47 = vadd.f32 %v46, %v18
  %v48 = vadd.f32 %v47, %v20
  %v49 = vadd.f32 %v48, %v22
  %v50 = vadd.f32 %v49, %v24
  %v51 = vadd.f32 %v50, %v26
  %v52 = vadd.f32 %v51, %v28
  %v53 = vadd.f32 %v52, %v30
  %v54 = vadd.f32 %v53, %v32
  %v55 = vadd.f32 %v54, %v34
  %v56 = vadd.f32 %v55, %v36
  %v57 = vadd.f32 %v56, %v38
  %v58 = vadd.f32 %v57, %v40
  %v59 = vadd.f32 %v58, %v42
  %v60 = vadd.f32 %v59, %v44
  %v61 = vrot.slane %v60, 4
  %v62 = vadd.f32 %v60, %v61
  %v63 = vrot.slane %v62, 2
  %v64 = vadd.f32 %v62, %v63
  %v65 = vrot.slane %v64, 1
  %v66 = vadd.f32 %v64, %v65
  %v67 = vadd.f32 %v15, %v17
  %v68 = vadd.f32 %v67, %v19
  %v69 = vadd.f32 %v68, %v21
  %v70 = vadd.f32 %v69, %v23
  %v71 = vadd.f32 %v70, %v25
  %v72 = vadd.f32 %v71, %v27
  %v73 = vadd.f32 %v72, %v29
  %v74 = vadd.f32 %v73, %v31
  %v75 = vadd.f32 %v74, %v33
  %v76 = vadd.f32 %v75, %v35
  %v77 = vadd.f32 %v76, %v37
  %v78 = vadd.f32 %v77, %v39
  %v79 = vadd.f32 %v78, %v41
  %v80 = vadd.f32 %v79, %v43
  %v81 = vadd.f32 %v80, %v45
  %v82 = vrot.slane %v81, 4
  %v83 = vadd.f32 %v81, %v82
  %v84 = vrot.slane %v83, 2
  %v85 = vadd.f32 %v83, %v84
  %v86 = vrot.slane %v85, 1
  %v87 = vadd.f32 %v85, %v86
  %v88 = vrcp.pop 128.0
  %v89 = vmul.f32 %v66, %v88
  %v90 = vmul.f32 %v87, %v88
  %v91 = vsub.f32 %v14, %v89
  %v92 = vsub.f32 %v15, %v90
  %v93 = vsub.f32 %v16, %v89
  %v94 = vsub.f32 %v17, %v90
  %v95 = vsub.f32 %v18, %v89
  %v96 = vsub.f32 %v19, %v90
  %v97 = vsub.f32 %v20, %v89
  %v98 = vsub.f32 %v21, %v90
  %v99 = vsub.f32 %v22, %v89
  %v100 = vsub.f32 %v23, %v90
  %v101 = vsub.f32 %v24, %v89
  %v102 = vsub.f32 %v25, %v90
  %v103 = vsub.f32 %v26, %v89
  %v104 = vsub.f32 %v27, %v90
  %v105 = vsub.f32 %v28, %v89
  %v106 = vsub.f32 %v29, %v90
  %v107 = vsub.f32 %v30, %v89
  %v108 = vsub.f32 %v31, %v90
  %v109 = vsub.f32 %v32, %v89
  %v110 = vsub.f32 %v33, %v90
  %v111 = vsub.f32 %v34, %v89
  %v112 = vsub.f32 %v35, %v90
  %v113 = vsub.f32 %v36, %v89
  %v114 = vsub.f32 %v37, %v90
  %v115 = vsub.f32 %v38, %v89
  %v116 = vsub.f32 %v39, %v90
  %v117 = vsub.f32 %v40, %v89
  %v118 = vsub.f32 %v41, %v90
  %v119 = vsub.f32 %v42, %v89
  %v120 = vsub.f32 %v43, %v90
  %v121 = vsub.f32 %v44, %v89
  %v122 = vsub.f32 %v45, %v90
  %v123 = vmul.f32 %v91, %v91
  %v124 = vmul.f32 %v92, %v92
  %v125 = vmul.f32 %v93, %v93
  %v126 = vmul.f32 %v94, %v94
  %v127 = vmul.f32 %v95, %v95
  %v128 = vmul.f32 %v96, %v96
  %v129 = vmul.f32 %v97, %v97
  %v130 = vmul.f32 %v98, %v98
  %v131 = vmul.f32 %v99, %v99
  %v132 = vmul.f32 %v100, %v100
  %v133 = vmul.f32 %v101, %v101
  %v134 = vmul.f32 %v102, %v102
  %v135 = vmul.f32 %v103, %v103
  %v136 = vmul.f32 %v104, %v104
  %v137 = vmul.f32 %v105, %v105
  %v138 = vmul.f32 %v106, %v106
  %v139 = vmul.f32 %v107, %v107
  %v140 = vmul.f32 %v108, %v108
  %v141 = vmul.f32 %v109, %v109
  %v142 = vmul.f32 %v110, %v110
  %v143 = vmul.f32 %v111, %v111
  %v144 = vmul.f32 %v112, %v112
  %v145 = vmul.f32 %v113, %v113
  %v146 = vmul.f32 %v114, %v114
  %v147 = vmul.f32 %v115, %v115
  %v148 = vmul.f32 %v116, %v116
  %v149 = vmul.f32 %v117, %v117
  %v150 = vmul.f32 %v118, %v118
  %v151 = vmul.f32 %v119, %v119
  %v152 = vmul.f32 %v120, %v120
  %v153 = vmul.f32 %v121, %v121
  %v154 = vmul.f32 %v122, %v122
  %v155 = vadd.f32 %v123, %v125
  %v156 = vadd.f32 %v155, %v127
  %v157 = vadd.f32 %v156, %v129
  %v158 = vadd.f32 %v157, %v131
  %v159 = vadd.f32 %v158, %v133
  %v160 = vadd.f32 %v159, %v135
  %v161 = vadd.f32 %v160, %v137
  %v162 = vadd.f32 %v161, %v139
  %v163 = vadd.f32 %v162, %v141
  %v164 = vadd.f32 %v163, %v143
  %v165 = vadd.f32 %v164, %v145
  %v166 = vadd.f32 %v165, %v147
  %v167 = vadd.f32 %v166, %v149
  %v168 = vadd.f32 %v167, %v151
  %v169 = vadd.f32 %v168, %v153
  %v170 = vrot.slane %v169, 4
  %v171 = vadd.f32 %v169, %v170
  %v172 = vrot.slane %v171, 2
  %v173 = vadd.f32 %v171, %v172
  %v174 = vrot.slane %v173, 1
  %v175 = vadd.f32 %v173, %v174
  %v176 = vadd.f32 %v124, %v126
  %v177 = vadd.f32 %v176, %v128
  %v178 = vadd.f32 %v177, %v130
  %v179 = vadd.f32 %v178, %v132
  %v180 = vadd.f32 %v179, %v134
  %v181 = vadd.f32 %v180, %v136
  %v182 = vadd.f32 %v181, %v138
  %v183 = vadd.f32 %v182, %v140
  %v184 = vadd.f32 %v183, %v142
  %v185 = vadd.f32 %v184, %v144
  %v186 = vadd.f32 %v185, %v146
  %v187 = vadd.f32 %v186, %v148
  %v188 = vadd.f32 %v187, %v150
  %v189 = vadd.f32 %v188, %v152
  %v190 = vadd.f32 %v189, %v154
  %v191 = vrot.slane %v190, 4
  %v192 = vadd.f32 %v190, %v191
  %v193 = vrot.slane %v192, 2
  %v194 = vadd.f32 %v192, %v193
  %v195 = vrot.slane %v194, 1
  %v196 = vadd.f32 %v194, %v195
  %v197 = vmul.f32 %v175, %v88
  %v198 = vmul.f32 %v196, %v88
  %v199 = vadd.f32 %v197, 1e-05
  %v200 = vadd.f32 %v198, 1e-05
  %v201 = vrsqrt.pop %v199
  %v202 = vrsqrt.pop %v200
  %v203 = vmul.f32 %v91, %v201
  %v204 = vmul.f32 %v92, %v202
  %v205 = vmul.f32 %v93, %v201
  %v206 = vmul.f32 %v94, %v202
  %v207 = vmul.f32 %v95, %v201
  %v208 = vmul.f32 %v96, %v202
  %v209 = vmul.f32 %v97, %v201
  %v210 = vmul.f32 %v98, %v202
  %v211 = vmul.f32 %v99, %v201
  %v212 = vmul.f32 %v100, %v202
  %v213 = vmul.f32 %v101, %v201
  %v214 = vmul.f32 %v102, %v202
  %v215 = vmul.f32 %v103, %v201
  %v216 = vmul.f32 %v104, %v202
  %v217 = vmul.f32 %v105, %v201
  %v218 = vmul.f32 %v106, %v202
  %v219 = vmul.f32 %v107, %v201
  %v220 = vmul.f32 %v108, %v202
  %v221 = vmul.f32 %v109, %v201
  %v222 = vmul.f32 %v110, %v202
  %v223 = vmul.f32 %v111, %v201
  %v224 = vmul.f32 %v112, %v202
  %v225 = vmul.f32 %v113, %v201
  %v226 = vmul.f32 %v114, %v202
  %v227 = vmul.f32 %v115, %v201
  %v228 = vmul.f32 %v116, %v202
  %v229 = vmul.f32 %v117, %v201
  %v230 = vmul.f32 %v118, %v202
  %v231 = vmul.f32 %v119, %v201
  %v232 = vmul.f32 %v120, %v202
  %v233 = vmul.f32 %v121, %v201
  %v234 = vmul.f32 %v122, %v202
  %v235 = vld [vmem:[%s1] sm:$0x3]
  %v237 = vlaneseq
  %v238 = vshrl.u32 %v237, 7
  %v239 = vsub.s32 0, %v238
  %v240 = vrot.slane %v235, %v239
  %v241 = vlaneseq
  %v242 = vshrl.u32 %v241, 7
  %v243 = vsub.s32 1, %v242
  %v244 = vrot.slane %v235, %v243
  %v247 = vmul.f32 %v203, %v240
  %v248 = vmul.f32 %v204, %v244
  %v249 = vmul.f32 %v205, %v240
  %v250 = vmul.f32 %v206, %v244
  %v251 = vmul.f32 %v207, %v240
  %v252 = vmul.f32 %v208, %v244
  %v253 = vmul.f32 %v209, %v240
  %v254 = vmul.f32 %v210, %v244
  %v255 = vmul.f32 %v211, %v240
  %v256 = vmul.f32 %v212, %v244
  %v257 = vmul.f32 %v213, %v240
  %v258 = vmul.f32 %v214, %v244
  %v259 = vmul.f32 %v215, %v240
  %v260 = vmul.f32 %v216, %v244
  %v261 = vmul.f32 %v217, %v240
  %v262 = vmul.f32 %v218, %v244
  %v263 = vmul.f32 %v219, %v240
  %v264 = vmul.f32 %v220, %v244
  %v265 = vmul.f32 %v221, %v240
  %v266 = vmul.f32 %v222, %v244
  %v267 = vmul.f32 %v223, %v240
  %v268 = vmul.f32 %v224, %v244
  %v269 = vmul.f32 %v225, %v240
  %v270 = vmul.f32 %v226, %v244
  %v271 = vmul.f32 %v227, %v240
  %v272 = vmul.f32 %v228, %v244
  %v273 = vmul.f32 %v229, %v240
  %v274 = vmul.f32 %v230, %v244
  %v275 = vmul.f32 %v231, %v240
  %v276 = vmul.f32 %v232, %v244
  %v277 = vmul.f32 %v233, %v240
  %v278 = vmul.f32 %v234, %v244
  %v279 = vld [vmem:[%s2] sm:$0x3]
  %v281 = vlaneseq
  %v282 = vshrl.u32 %v281, 7
  %v283 = vsub.s32 0, %v282
  %v284 = vrot.slane %v279, %v283
  %v285 = vlaneseq
  %v286 = vshrl.u32 %v285, 7
  %v287 = vsub.s32 1, %v286
  %v288 = vrot.slane %v279, %v287
  %v291 = vadd.f32 %v247, %v284
  %v292 = vadd.f32 %v248, %v288
  %v293 = vadd.f32 %v249, %v284
  %v294 = vadd.f32 %v250, %v288
  %v295 = vadd.f32 %v251, %v284
  %v296 = vadd.f32 %v252, %v288
  %v297 = vadd.f32 %v253, %v284
  %v298 = vadd.f32 %v254, %v288
  %v299 = vadd.f32 %v255, %v284
  %v300 = vadd.f32 %v256, %v288
  %v301 = vadd.f32 %v257, %v284
  %v302 = vadd.f32 %v258, %v288
  %v303 = vadd.f32 %v259, %v284
  %v304 = vadd.f32 %v260, %v288
  %v305 = vadd.f32 %v261, %v284
  %v306 = vadd.f32 %v262, %v288
  %v307 = vadd.f32 %v263, %v284
  %v308 = vadd.f32 %v264, %v288
  %v309 = vadd.f32 %v265, %v284
  %v310 = vadd.f32 %v266, %v288
  %v311 = vadd.f32 %v267, %v284
  %v312 = vadd.f32 %v268, %v288
  %v313 = vadd.f32 %v269, %v284
  %v314 = vadd.f32 %v270, %v288
  %v315 = vadd.f32 %v271, %v284
  %v316 = vadd.f32 %v272, %v288
  %v317 = vadd.f32 %v273, %v284
  %v318 = vadd.f32 %v274, %v288
  %v319 = vadd.f32 %v275, %v284
  %v320 = vadd.f32 %v276, %v288
  %v321 = vadd.f32 %v277, %v284
  %v322 = vadd.f32 %v278, %v288
  %v323 = vmax.f32 %v291, 0.0
  %v324 = vmax.f32 %v292, 0.0
  %v325 = vmax.f32 %v293, 0.0
  %v326 = vmax.f32 %v294, 0.0
  %v327 = vmax.f32 %v295, 0.0
  %v328 = vmax.f32 %v296, 0.0
  %v329 = vmax.f32 %v297, 0.0
  %v330 = vmax.f32 %v298, 0.0
  %v331 = vmax.f32 %v299, 0.0
  %v332 = vmax.f32 %v300, 0.0
  %v333 = vmax.f32 %v301, 0.0
  %v334 = vmax.f32 %v302, 0.0
  %v335 = vmax.f32 %v303, 0.0
  %v336 = vmax.f32 %v304, 0.0
  %v337 = vmax.f32 %v305, 0.0
  %v338 = vmax.f32 %v306, 0.0
  %v339 = vmax.f32 %v307, 0.0
  %v340 = vmax.f32 %v308, 0.0
  %v341 = vmax.f32 %v309, 0.0
  %v342 = vmax.f32 %v310, 0.0
  %v343 = vmax.f32 %v311, 0.0
  %v344 = vmax.f32 %v312, 0.0
  %v345 = vmax.f32 %v313, 0.0
  %v346 = vmax.f32 %v314, 0.0
  %v347 = vmax.f32 %v315, 0.0
  %v348 = vmax.f32 %v316, 0.0
  %v349 = vmax.f32 %v317, 0.0
  %v350 = vmax.f32 %v318, 0.0
  %v351 = vmax.f32 %v319, 0.0
  %v352 = vmax.f32 %v320, 0.0
  %v353 = vmax.f32 %v321, 0.0
  %v354 = vmax.f32 %v322, 0.0
  %355 = vst [vmem:[%s3] sm:$0xff] %v323
  %356 = vst [vmem:[%s3 + $0x8] sm:$0xff] %v324
  %357 = vst [vmem:[%s3 + $0x10] sm:$0xff] %v325
  %358 = vst [vmem:[%s3 + $0x18] sm:$0xff] %v326
  %359 = vst [vmem:[%s3 + $0x20] sm:$0xff] %v327
  %360 = vst [vmem:[%s3 + $0x28] sm:$0xff] %v328
  %361 = vst [vmem:[%s3 + $0x30] sm:$0xff] %v329
  %362 = vst [vmem:[%s3 + $0x38] sm:$0xff] %v330
  %363 = vst [vmem:[%s3 + $0x40] sm:$0xff] %v331
  %364 = vst [vmem:[%s3 + $0x48] sm:$0xff] %v332
  %365 = vst [vmem:[%s3 + $0x50] sm:$0xff] %v333
  %366 = vst [vmem:[%s3 + $0x58] sm:$0xff] %v334
  %367 = vst [vmem:[%s3 + $0x60] sm:$0xff] %v335
  %368 = vst [vmem:[%s3 + $0x68] sm:$0xff] %v336
  %369 = vst [vmem:[%s3 + $0x70] sm:$0xff] %v337
  %370 = vst [vmem:[%s3 + $0x78] sm:$0xff] %v338
  %371 = vst [vmem:[%s3 + $0x80] sm:$0xff] %v339
  %372 = vst [vmem:[%s3 + $0x88] sm:$0xff] %v340
  %373 = vst [vmem:[%s3 + $0x90] sm:$0xff] %v341
  %374 = vst [vmem:[%s3 + $0x98] sm:$0xff] %v342
  %375 = vst [vmem:[%s3 + $0xa0] sm:$0xff] %v343
  %376 = vst [vmem:[%s3 + $0xa8] sm:$0xff] %v344
  %377 = vst [vmem:[%s3 + $0xb0] sm:$0xff] %v345
  %378 = vst [vmem:[%s3 + $0xb8] sm:$0xff] %v346
  %379 = vst [vmem:[%s3 + $0xc0] sm:$0xff] %v347
  %380 = vst [vmem:[%s3 + $0xc8] sm:$0xff] %v348
  %381 = vst [vmem:[%s3 + $0xd0] sm:$0xff] %v349
  %382 = vst [vmem:[%s3 + $0xd8] sm:$0xff] %v350
  %383 = vst [vmem:[%s3 + $0xe0] sm:$0xff] %v351
  %384 = vst [vmem:[%s3 + $0xe8] sm:$0xff] %v352
  %385 = vst [vmem:[%s3 + $0xf0] sm:$0xff] %v353
  %386 = vst [vmem:[%s3 + $0xf8] sm:$0xff] %v354
  // Predicated region
  $region14: #{decoder_forward.18} parent=0 // pred_check
    _
  $region15: #{decoder_forward.18} parent=0 // pred_check_branch
    %388 = sbr.rel (0) target = $region17
  $region16: #{decoder_forward.18} parent=0 // pred_region
    _
  $region17: #{decoder_forward.18} parent=0 // pred_fallthru
    _
  // Predicated region
  $region18: #{decoder_forward.18} parent=0 // pred_check
    _
  $region19: #{decoder_forward.18} parent=0 // pred_check_branch
    %390 = sbr.rel (0) target = $region21
  $region20: #{decoder_forward.18} parent=0 // pred_region
    _
  $region21: #{decoder_forward.18} parent=0 // pred_fallthru
    _

// kernel: tile.18
$region0: #{tile.18}
  #allocation0 [shape = 's32[1]{0}', space=sflag, size = 0x4, scoped, tag = 'scoped memory for tile.18']
  %s0 = inlined_call_operand.vmem [shape: f32[3], index: 0, kind: input, shape index: {}]
  %s1 = inlined_call_operand.vmem [shape: f32[4,3], index: 1, kind: output, shape index: {}]
  // Predicated region
  $region2: #{tile.18} parent=0 // pred_check
    _
  $region3: #{tile.18} parent=0 // pred_check_branch
    %3 = sbr.rel (0) target = $region5
  $region4: #{tile.18} parent=0 // pred_region
    _
  $region5: #{tile.18} parent=0 // pred_fallthru
    _
  %v4 = vld [vmem:[%s0] ss:$0 sm:$0xff]
  %5 = vst [vmem:[%s1] sm:$0xf] %v4

// kernel: tile.19
$region0: #{tile.19}
  %s0 = inlined_call_operand.vmem [shape: f32[4,3], index: 0, kind: input, shape index: {}]
  %s1 = inlined_call_operand.vmem [shape: f32[12], index: 1, kind: output, shape index: {}]
  $region1: #{tile.19} parent=0
    #allocation0 [shape = 'u8[4096]{0}', space=vmem, size = 0x1000, scoped, tag = 'scoped mem for output reshape']
    #allocation1 [shape = 'u8[4096]{0}', space=vmem, size = 0x1000, scoped, tag = 'scoped mem for input reshape']
    %s3 = sshllo.u32 0, 4
    %v4 = vld [vmem:[%s0] sm:%s3]
    %5 = vst [vmem:[#allocation1] sm:%s3] %v4
    %v6 = vld [vmem:[#allocation1] sm:$0x1]
    %vm7 = vcmask 23552
    %8 = vst.msk [vmem:[#allocation0] sm:$0x1] %vm7, %v6
    %s9 = scalar_lea.vmem [#allocation1], 3
    %v10 = vld [vmem:[%s9] sm:$0x1]
    %11 = vrot.lane.b32.xlu0 %v10, 9
    %v12 = vpop.permute.xlu0 %11
    %vm13 = vcmask 97352
    %14 = vst.msk [vmem:[#allocation0] sm:$0x1] %vm13, %v12
    %s15 = scalar_lea.vmem [#allocation1], 2
    %v16 = vld [vmem:[%s15] sm:$0x1]
    %17 = vrot.lane.b32.xlu0 %v16, 6
    %v18 = vpop.permute.xlu0 %17
    %vm19 = vcmask 72752
    %20 = vst.msk [vmem:[#allocation0] sm:$0x1] %vm19, %v18
    %s21 = scalar_lea.vmem [#allocation1], 1
    %v22 = vld [vmem:[%s21] sm:$0x1]
    %23 = vrot.lane.b32.xlu0 %v22, 3
    %v24 = vpop.permute.xlu0 %23
    %vm25 = vcmask 48152
    %26 = vst.msk [vmem:[#allocation0] sm:$0x1] %vm25, %v24
    %s28 = sshllo.u32 0, 1
    %v30 = vld [vmem:[#allocation0] sm:%s28]
    %s31 = sshllo.u32 0, 1
    %32 = vst [vmem:[%s1] sm:%s31] %v30

// kernel: decoder_forward.19
$region0: #{decoder_forward.19}
  #allocation0 [shape = 'u32[]', space=smem, size = 0x4, offset = 0x4, fixed_abs, tag = 'smem constant byte address 0x4 - core index']
  #allocation1 [shape = 'u32[144,128]{1,0:T(1,128)}', space=vmem, size = 0x12000, scoped, tag = 'internal scratch']
  #allocation2 [shape = 'f32[128,128]{1,0:T(8,128)}', space=vmem, size = 0x10000, scoped, tag = 'scratch operand']
  %s0 = inlined_call_operand.vmem [shape: bf16[128,2304], index: 0, kind: input, shape index: {}]
  %s1 = inlined_call_operand.vmem [shape: bf16[2304,128], index: 1, kind: input, shape index: {}]
  %s2 = inlined_call_operand.vmem [shape: f32[1,128], index: 2, kind: input, shape index: {}]
  %s3 = inlined_call_operand.vmem [shape: f32[128,128], index: 3, kind: output, shape index: {}]
  %s4 = sld [smem:[#allocation0]]
  $region79: #{decoder_forward.19} parent=0
    _
  %s6 = ssub.s32 1, %s4
  %s7 = scalar_select 0, %s6, %s4
  $region1: #{decoder_forward.19} parent=0
    #allocation3 [shape = 'u8[196608]{0}', space=vmem, size = 0x30000, scoped, tag = 'input window, operand 0']
    loop: start=0, step=1, limit=8
    $region2: #{decoder_forward.19} parent=1 // loop_pre_header
      _
    $region3: #{decoder_forward.19} parent=1 // loop_header
      %s9 = sphi 0, %s13
      %p10 = scmp.ge.s32.totalorder %s9, 8
      %s16 = sphi 0, %s35
      %s17 = sphi 0, %s31
      %s18 = sphi 0, %s27
      %s19 = sphi 0, %s16
      %s20 = sphi 0, %s17
      %s21 = sphi 0, %s18
      %s22 = sphi 0, %s19
      %s23 = sphi 0, %s20
      %s24 = sphi 0, %s21
      %s40 = sphi 0, %s42
      %s43 = sphi 0, %s40
      %s44 = sphi 0, %s43
      %s60 = sphi 0, %s44
      %s68 = sphi 0, %s70
      %s71 = sphi 0, %s68
      %s72 = sphi 0, %s71
      %s88 = sphi 0, %s72
      %s94 = sphi 0, %s96
      %s97 = sphi 0, %s94
      %s98 = sphi 0, %s97
      %s114 = sphi 0, %s98
      %s122 = sphi 0, %s124
      %s125 = sphi 0, %s122
      %s126 = sphi 0, %s125
      %s142 = sphi 0, %s126
    $region4: #{decoder_forward.19} parent=1 // loop_header_branch
      %12 = sbr.rel (%p10) target = $region8
    $region5: #{decoder_forward.19} parent=1 // loop_body
      %s14 = ssub.s32 %s9, 1
      %s15 = ssub.s32 %s9, 2
      %s25 = sadd.s32 1, %s18
      %p26 = scmp.ge.s32.totalorder %s25, 6
      %s27 = scalar_select %p26, 0, %s25
      %s28 = sadd.s32 1, %s17
      %s29 = scalar_select %p26, %s28, %s17
      %p30 = scmp.ge.s32.totalorder %s29, 1
      %s31 = scalar_select %p30, 0, %s29
      %s32 = sadd.s32 1, %s16
      %s33 = scalar_select %p30, %s32, %s16
      %p34 = scmp.ge.s32.totalorder %s33, 1
      %s35 = scalar_select %p34, 0, %s33
      %s36 = ssub.s32 %s16, %s35
      %s37 = ssub.s32 %s18, %s27
      %s38 = sor.u32 %s36, %s37
      %p39 = scmp.eq.s32.totalorder %s38, 0
      %s41 = sadd.s32 %s40, 1
      %s42 = scalar_select %p39, %s40, %s41
      %p45 = pneg %p39
      %p46 = scmp.eq.s32.totalorder %s9, 5
      %p47 = por %p45, %p46
      %p48 = scmp.ne.s32.totalorder %s40, %s43
      %p49 = scmp.eq.s32.totalorder %s9, 0
      %p50 = por %p48, %p49
      %p51 = scmp.ne.s32.totalorder %s40, %s43
      %p52 = scmp.eq.s32.totalorder %s14, 5
      %p53 = por %p51, %p52
      %p54 = scmp.ne.s32.totalorder %s43, %s44
      %p55 = scmp.eq.s32.totalorder %s14, 0
      %p56 = por %p54, %p55
      %p57 = scmp.ne.s32.totalorder %s43, %s44
      %p58 = scmp.eq.s32.totalorder %s15, 5
      %p59 = por %p57, %p58
      %p61 = scmp.ne.s32.totalorder %s44, %s60
      %p62 = scmp.eq.s32.totalorder %s15, 0
      %p63 = por %p61, %p62
      %s64 = ssub.s32 %s18, %s27
      %s65 = ssub.s32 %s17, %s31
      %s66 = sor.u32 %s64, %s65
      %p67 = scmp.eq.s32.totalorder %s66, 0
      %s69 = sadd.s32 %s68, 1
      %s70 = scalar_select %p67, %s68, %s69
      %p73 = pneg %p67
      %p74 = scmp.eq.s32.totalorder %s9, 5
      %p75 = por %p73, %p74
      %p76 = scmp.ne.s32.totalorder %s68, %s71
      %p77 = scmp.eq.s32.totalorder %s9, 0
      %p78 = por %p76, %p77
      %p79 = scmp.ne.s32.totalorder %s68, %s71
      %p80 = scmp.eq.s32.totalorder %s14, 5
      %p81 = por %p79, %p80
      %p82 = scmp.ne.s32.totalorder %s71, %s72
      %p83 = scmp.eq.s32.totalorder %s14, 0
      %p84 = por %p82, %p83
      %p85 = scmp.ne.s32.totalorder %s71, %s72
      %p86 = scmp.eq.s32.totalorder %s15, 5
      %p87 = por %p85, %p86
      %p89 = scmp.ne.s32.totalorder %s72, %s88
      %p90 = scmp.eq.s32.totalorder %s15, 0
      %p91 = por %p89, %p90
      %s92 = ssub.s32 %s17, %s31
      %p93 = scmp.eq.s32.totalorder %s92, 0
      %s95 = sadd.s32 %s94, 1
      %s96 = scalar_select %p93, %s94, %s95
      %p99 = pneg %p93
      %p100 = scmp.eq.s32.totalorder %s9, 5
      %p101 = por %p99, %p100
      %p102 = scmp.ne.s32.totalorder %s94, %s97
      %p103 = scmp.eq.s32.totalorder %s9, 0
      %p104 = por %p102, %p103
      %p105 = scmp.ne.s32.totalorder %s94, %s97
      %p106 = scmp.eq.s32.totalorder %s14, 5
      %p107 = por %p105, %p106
      %p108 = scmp.ne.s32.totalorder %s97, %s98
      %p109 = scmp.eq.s32.totalorder %s14, 0
      %p110 = por %p108, %p109
      %p111 = scmp.ne.s32.totalorder %s97, %s98
      %p112 = scmp.eq.s32.totalorder %s15, 5
      %p113 = por %p111, %p112
      %p115 = scmp.ne.s32.totalorder %s98, %s114
      %p116 = scmp.eq.s32.totalorder %s15, 0
      %p117 = por %p115, %p116
      %s118 = ssub.s32 %s16, %s35
      %s119 = ssub.s32 %s17, %s31
      %s120 = sor.u32 %s118, %s119
      %p121 = scmp.eq.s32.totalorder %s120, 0
      %s123 = sadd.s32 %s122, 1
      %s124 = scalar_select %p121, %s122, %s123
      %p127 = pneg %p121
      %p128 = scmp.eq.s32.totalorder %s9, 5
      %p129 = por %p127, %p128
      %p130 = scmp.ne.s32.totalorder %s122, %s125
      %p131 = scmp.eq.s32.totalorder %s9, 0
      %p132 = por %p130, %p131
      %p133 = scmp.ne.s32.totalorder %s122, %s125
      %p134 = scmp.eq.s32.totalorder %s14, 5
      %p135 = por %p133, %p134
      %p136 = scmp.ne.s32.totalorder %s125, %s126
      %p137 = scmp.eq.s32.totalorder %s14, 0
      %p138 = por %p136, %p137
      %p139 = scmp.ne.s32.totalorder %s125, %s126
      %p140 = scmp.eq.s32.totalorder %s15, 5
      %p141 = por %p139, %p140
      %p143 = scmp.ne.s32.totalorder %s126, %s142
      %p144 = scmp.eq.s32.totalorder %s15, 0
      %p145 = por %p143, %p144
      %p146 = scmp.le.s32.totalorder 1, %s9
      %p147 = scmp.lt.s32.totalorder %s9, 7
      %p148 = pnand %p146, %p147
      %p149 = pneg %p148
      // Predicated region
      $region9: #{decoder_forward.19} parent=5 // pred_check
        _
      $region10: #{decoder_forward.19} parent=5 // pred_check_branch
        %151 = sbr.rel (%p148) target = $region12
      $region11: #{decoder_forward.19} parent=5 // pred_region
        %s152 = ssub.s32 %s9, 1
        // Predicated region
        $region13: #{decoder_forward.19} parent=11 // pred_check
          %p153 = pneg %p110
        $region14: #{decoder_forward.19} parent=11 // pred_check_branch
          %155 = sbr.rel (%p153) target = $region16
        $region15: #{decoder_forward.19} parent=11 // pred_region
          %p156 = scmp.lt.s32.totalorder %s20, 0
          %s157 = scalar_select %p156, %s20, 0
          %s158 = scalar_lea.vmem %s2, %s157
        $region16: #{decoder_forward.19} parent=11 // pred_fallthru
          _
      $region12: #{decoder_forward.19} parent=5 // pred_fallthru
        _
      %p159 = scmp.lt.s32.totalorder %s9, 6
      // Predicated region
      $region17: #{decoder_forward.19} parent=5 // pred_check
        %p160 = pneg %p159
      $region18: #{decoder_forward.19} parent=5 // pred_check_branch
        %162 = sbr.rel (%p160) target = $region20
      $region19: #{decoder_forward.19} parent=5 // pred_region
        // Predicated region
        $region21: #{decoder_forward.19} parent=19 // pred_check
          %p163 = pneg %p50
        $region22: #{decoder_forward.19} parent=19 // pred_check_branch
          %165 = sbr.rel (%p163) target = $region24
        $region23: #{decoder_forward.19} parent=19 // pred_region
          %s166 = sand.u32 %s40, 1
          %s167 = sand.u32 %s40, 1
          %s168 = smul.addr %s167, 192
          %s169 = scalar_lea.vmem [#allocation3], %s168
          %s170 = smul.u32 16, %s16
          %s171 = smul.u32 3, %s18
          %s172 = smul.addr %s170, 18
          %s173 = sadd.s32 %s171, %s172
          %s174 = smul.addr %s173, 4
          %s175 = scalar_lea.vmem %s0, %s174
          // Predicated region
          $region25: #{decoder_forward.19} parent=23 // pred_check
            _
          $region26: #{decoder_forward.19} parent=23 // pred_check_branch
            %177 = sbr.rel (0) target = $region28
          $region27: #{decoder_forward.19} parent=23 // pred_region
            // Predicated region
            $region29: #{decoder_forward.19} parent=27 // pred_check
              _
            $region30: #{decoder_forward.19} parent=27 // pred_check_branch
              %179 = sbr.rel (0) target = $region32
            $region31: #{decoder_forward.19} parent=27 // pred_region
              %s180 = scalar_lea.vmem %s175, 8
              %s181 = scalar_lea.vmem %s169, 8 [#allocation3]
              loop: start=0, step=1, limit=1
              $region33: #{decoder_forward.19} parent=31 // loop_pre_header
                _
              $region34: #{decoder_forward.19} parent=31 // loop_header
                %s183 = sphi 0, %s187
                %p184 = scmp.ge.s32.totalorder %s183, 1
                %s188 = sphi %s175, %s175
                %s189 = sphi %s169, %s169
              $region35: #{decoder_forward.19} parent=31 // loop_header_branch
                %186 = sbr.rel (%p184) target = $region39
              $region36: #{decoder_forward.19} parent=31 // loop_body
                %v190 = vld [vmem:[%s188] sm:$0xff]
                %191 = vst [vmem:[%s189] sm:$0xff] %v190
                %v192 = vld [vmem:[%s188 + $0x48] sm:$0xff]
                %193 = vst [vmem:[%s189 + $0xc] sm:$0xff] %v192
                %v194 = vld [vmem:[%s188 + $0x90] sm:$0xff]
                %195 = vst [vmem:[%s189 + $0x18] sm:$0xff] %v194
                %v196 = vld [vmem:[%s188 + $0xd8] sm:$0xff]
                %197 = vst [vmem:[%s189 + $0x24] sm:$0xff] %v196
                %v198 = vld [vmem:[%s188 + $0x120] sm:$0xff]
                %199 = vst [vmem:[%s189 + $0x30] sm:$0xff] %v198
                %v200 = vld [vmem:[%s188 + $0x168] sm:$0xff]
                %201 = vst [vmem:[%s189 + $0x3c] sm:$0xff] %v200
                %v202 = vld [vmem:[%s188 + $0x1b0] sm:$0xff]
                %203 = vst [vmem:[%s189 + $0x48] sm:$0xff] %v202
                %v204 = vld [vmem:[%s188 + $0x1f8] sm:$0xff]
                %205 = vst [vmem:[%s189 + $0x54] sm:$0xff] %v204
                %v206 = vld [vmem:[%s188 + $0x240] sm:$0xff]
                %207 = vst [vmem:[%s189 + $0x60] sm:$0xff] %v206
                %v208 = vld [vmem:[%s188 + $0x288] sm:$0xff]
                %209 = vst [vmem:[%s189 + $0x6c] sm:$0xff] %v208
                %v210 = vld [vmem:[%s188 + $0x2d0] sm:$0xff]
                %211 = vst [vmem:[%s189 + $0x78] sm:$0xff] %v210
                %v212 = vld [vmem:[%s188 + $0x318] sm:$0xff]
                %213 = vst [vmem:[%s189 + $0x84] sm:$0xff] %v212
                %v214 = vld [vmem:[%s188 + $0x360] sm:$0xff]
                %215 = vst [vmem:[%s189 + $0x90] sm:$0xff] %v214
                %v216 = vld [vmem:[%s188 + $0x3a8] sm:$0xff]
                %217 = vst [vmem:[%s189 + $0x9c] sm:$0xff] %v216
                %v218 = vld [vmem:[%s188 + $0x3f0] sm:$0xff]
                %219 = vst [vmem:[%s189 + $0xa8] sm:$0xff] %v218
                %v220 = vld [vmem:[%s188 + $0x438] sm:$0xff]
                %221 = vst [vmem:[%s189 + $0xb4] sm:$0xff] %v220
              $region37: #{decoder_forward.19} parent=31 // loop_footer
                %s187 = sadd.s32 1, %s183
              $region38: #{decoder_forward.19} parent=31 // loop_footer_branch
                %182 = sbr.rel target = $region34
              $region39: #{decoder_forward.19} parent=31 // loop_exit
                _
              loop: start=0, step=1, limit=1
              $region40: #{decoder_forward.19} parent=31 // loop_pre_header
                _
              $region41: #{decoder_forward.19} parent=31 // loop_header
                %s224 = sphi 0, %s228
                %p225 = scmp.ge.s32.totalorder %s224, 1
                %s229 = sphi %s180, %s180
                %s230 = sphi %s181, %s181
              $region42: #{decoder_forward.19} parent=31 // loop_header_branch
                %227 = sbr.rel (%p225) target = $region46
              $region43: #{decoder_forward.19} parent=31 // loop_body
                %v231 = vld [vmem:[%s229] sm:$0xf]
                %232 = vst [vmem:[%s230] sm:$0xf] %v231
                %v233 = vld [vmem:[%s229 + $0x48] sm:$0xf]
                %234 = vst [vmem:[%s230 + $0xc] sm:$0xf] %v233
                %v235 = vld [vmem:[%s229 + $0x90] sm:$0xf]
                %236 = vst [vmem:[%s230 + $0x18] sm:$0xf] %v235
                %v237 = vld [vmem:[%s229 + $0xd8] sm:$0xf]
                %238 = vst [vmem:[%s230 + $0x24] sm:$0xf] %v237
                %v239 = vld [vmem:[%s229 + $0x120] sm:$0xf]
                %240 = vst [vmem:[%s230 + $0x30] sm:$0xf] %v239
                %v241 = vld [vmem:[%s229 + $0x168] sm:$0xf]
                %242 = vst [vmem:[%s230 + $0x3c] sm:$0xf] %v241
                %v243 = vld [vmem:[%s229 + $0x1b0] sm:$0xf]
                %244 = vst [vmem:[%s230 + $0x48] sm:$0xf] %v243
                %v245 = vld [vmem:[%s229 + $0x1f8] sm:$0xf]
                %246 = vst [vmem:[%s230 + $0x54] sm:$0xf] %v245
                %v247 = vld [vmem:[%s229 + $0x240] sm:$0xf]
                %248 = vst [vmem:[%s230 + $0x60] sm:$0xf] %v247
                %v249 = vld [vmem:[%s229 + $0x288] sm:$0xf]
                %250 = vst [vmem:[%s230 + $0x6c] sm:$0xf] %v249
                %v251 = vld [vmem:[%s229 + $0x2d0] sm:$0xf]
                %252 = vst [vmem:[%s230 + $0x78] sm:$0xf] %v251
                %v253 = vld [vmem:[%s229 + $0x318] sm:$0xf]
                %254 = vst [vmem:[%s230 + $0x84] sm:$0xf] %v253
                %v255 = vld [vmem:[%s229 + $0x360] sm:$0xf]
                %256 = vst [vmem:[%s230 + $0x90] sm:$0xf] %v255
                %v257 = vld [vmem:[%s229 + $0x3a8] sm:$0xf]
                %258 = vst [vmem:[%s230 + $0x9c] sm:$0xf] %v257
                %v259 = vld [vmem:[%s229 + $0x3f0] sm:$0xf]
                %260 = vst [vmem:[%s230 + $0xa8] sm:$0xf] %v259
                %v261 = vld [vmem:[%s229 + $0x438] sm:$0xf]
                %262 = vst [vmem:[%s230 + $0xb4] sm:$0xf] %v261
              $region44: #{decoder_forward.19} parent=31 // loop_footer
                %s228 = sadd.s32 1, %s224
              $region45: #{decoder_forward.19} parent=31 // loop_footer_branch
                %223 = sbr.rel target = $region41
              $region46: #{decoder_forward.19} parent=31 // loop_exit
                _
            $region32: #{decoder_forward.19} parent=27 // pred_fallthru
              _
          $region28: #{decoder_forward.19} parent=23 // pred_fallthru
            _
          %263 = vnop
        $region24: #{decoder_forward.19} parent=19 // pred_fallthru
          _
        // Predicated region
        $region47: #{decoder_forward.19} parent=19 // pred_check
          %p264 = pneg %p78
        $region48: #{decoder_forward.19} parent=19 // pred_check_branch
          %266 = sbr.rel (%p264) target = $region50
        $region49: #{decoder_forward.19} parent=19 // pred_region
          %s267 = smul.u32 48, %s18
          %p268 = scmp.lt.s32.totalorder %s267, 287
          %s269 = scalar_select %p268, %s267, 287
          %p270 = scmp.lt.s32.totalorder %s17, 0
          %s271 = scalar_select %p270, %s17, 0
          %s272 = sadd.s32 %s271, %s269
          %s273 = smul.addr %s272, 4
          %s274 = scalar_lea.vmem %s1, %s273
          %s275 = smul.u32 48, %s18
        $region50: #{decoder_forward.19} parent=19 // pred_fallthru
          _
      $region20: #{decoder_forward.19} parent=5 // pred_fallthru
        _
      %p276 = scmp.le.s32.totalorder 1, %s9
      %p277 = scmp.lt.s32.totalorder %s9, 7
      %p278 = pnand %p276, %p277
      %p279 = pneg %p278
      // Predicated region
      $region51: #{decoder_forward.19} parent=5 // pred_check
        _
      $region52: #{decoder_forward.19} parent=5 // pred_check_branch
        %281 = sbr.rel (%p278) target = $region54
      $region53: #{decoder_forward.19} parent=5 // pred_region
        %s282 = ssub.s32 %s9, 1
        %s283 = sand.u32 %s43, 1
        %s284 = sand.u32 %s43, 1
        %s285 = smul.addr %s284, 192
        %s286 = scalar_lea.vmem [#allocation3], %s285
        // Predicated region
        $region55: #{decoder_forward.19} parent=53 // pred_check
          %p287 = pneg %p56
        $region56: #{decoder_forward.19} parent=53 // pred_check_branch
          %289 = sbr.rel (%p287) target = $region58
        $region57: #{decoder_forward.19} parent=53 // pred_region
          _
        $region58: #{decoder_forward.19} parent=53 // pred_fallthru
          _
        %s290 = sand.u32 %s43, 1
        %s291 = sand.u32 %s43, 1
        %s292 = smul.addr %s291, 192
        %s293 = scalar_lea.vmem [#allocation3], %s292
        %p294 = pneg %p56
        %p295 = pneg %p53
        %s296 = smul.u32 48, %s21
        %p297 = scmp.lt.s32.totalorder %s296, 287
        %s298 = scalar_select %p297, %s296, 287
        %p299 = scmp.lt.s32.totalorder %s20, 0
        %s300 = scalar_select %p299, %s20, 0
        %s301 = sadd.s32 %s300, %s298
        %s302 = smul.addr %s301, 4
        %s303 = scalar_lea.vmem %s1, %s302
        %p304 = pneg %p84
        %p305 = pneg %p81
        %p306 = scmp.lt.s32.totalorder %s20, 0
        %s307 = scalar_select %p306, %s20, 0
        %s308 = scalar_lea.vmem %s2, %s307
        %p309 = pneg %p110
        %p310 = pneg %p107
        %p311 = pneg %p138
        %p312 = pneg %p135
        %s313 = smul.u32 16, %s19
        %p314 = scmp.lt.s32.totalorder %s313, 15
        %s315 = scalar_select %p314, %s313, 15
        %p316 = scmp.lt.s32.totalorder %s20, 0
        %s317 = scalar_select %p316, %s20, 0
        %s318 = sadd.s32 %s317, %s315
        %s319 = smul.addr %s318, 8
        %s320 = scalar_lea.vmem %s3, %s319
        %s321 = smul.u32 16, %s19
        %s322 = smul.u32 3, %s21
        %s323 = smul.u32 48, %s21
        %p324 = scmp.lt.s32.totalorder %s323, 287
        %s325 = scalar_select %p324, %s323, 287
        %p326 = scmp.lt.s32.totalorder %s20, 0
        %s327 = scalar_select %p326, %s20, 0
        %s328 = sadd.s32 %s327, %s325
        %s329 = smul.addr %s328, 4
        %s330 = scalar_lea.vmem %s1, %s329
        %s331 = smul.u32 48, %s21
        %p332 = scmp.lt.s32.totalorder %s20, 0
        %s333 = scalar_select %p332, %s20, 0
        %s334 = scalar_lea.vmem %s2, %s333
        %s335 = smul.u32 16, %s19
        %p336 = scmp.lt.s32.totalorder %s335, 15
        %s337 = scalar_select %p336, %s335, 15
        %p338 = scmp.lt.s32.totalorder %s20, 0
        %s339 = scalar_select %p338, %s20, 0
        %s340 = sadd.s32 %s339, %s337
        %s341 = smul.addr %s340, 8
        %s342 = scalar_lea.vmem %s3, %s341
        %s343 = smul.u32 16, %s19
        %p345 = scmp.eq.s32.totalorder %s21, 0
        // Predicated region
        $region59: #{decoder_forward.19} parent=53 // pred_check
          %p346 = pneg %p345
        $region60: #{decoder_forward.19} parent=53 // pred_check_branch
          %348 = sbr.rel (%p346) target = $region62
        $region61: #{decoder_forward.19} parent=53 // pred_region
          %349 = vst [vmem:[#allocation2] sm:$0xff] 0.0
          %350 = vst [vmem:[#allocation2 + $0x8] sm:$0xff] 0.0
          %351 = vst [vmem:[#allocation2 + $0x10] sm:$0xff] 0.0
          %352 = vst [vmem:[#allocation2 + $0x18] sm:$0xff] 0.0
          %353 = vst [vmem:[#allocation2 + $0x20] sm:$0xff] 0.0
          %354 = vst [vmem:[#allocation2 + $0x28] sm:$0xff] 0.0
          %355 = vst [vmem:[#allocation2 + $0x30] sm:$0xff] 0.0
          %356 = vst [vmem:[#allocation2 + $0x38] sm:$0xff] 0.0
          %357 = vst [vmem:[#allocation2 + $0x40] sm:$0xff] 0.0
          %358 = vst [vmem:[#allocation2 + $0x48] sm:$0xff] 0.0
          %359 = vst [vmem:[#allocation2 + $0x50] sm:$0xff] 0.0
          %360 = vst [vmem:[#allocation2 + $0x58] sm:$0xff] 0.0
          %361 = vst [vmem:[#allocation2 + $0x60] sm:$0xff] 0.0
          %362 = vst [vmem:[#allocation2 + $0x68] sm:$0xff] 0.0
          %363 = vst [vmem:[#allocation2 + $0x70] sm:$0xff] 0.0
          %364 = vst [vmem:[#allocation2 + $0x78] sm:$0xff] 0.0
        $region62: #{decoder_forward.19} parent=53 // pred_fallthru
          _
        %v365 = vld [vmem:[#allocation2] sm:$0xff]
        %v366 = vld [vmem:[#allocation2 + $0x8] sm:$0xff]
        %v367 = vld [vmem:[#allocation2 + $0x10] sm:$0xff]
        %v368 = vld [vmem:[#allocation2 + $0x18] sm:$0xff]
        %v369 = vld [vmem:[#allocation2 + $0x20] sm:$0xff]
        %v370 = vld [vmem:[#allocation2 + $0x28] sm:$0xff]
        %v371 = vld [vmem:[#allocation2 + $0x30] sm:$0xff]
        %v372 = vld [vmem:[#allocation2 + $0x38] sm:$0xff]
        %v373 = vld [vmem:[#allocation2 + $0x40] sm:$0xff]
        %v374 = vld [vmem:[#allocation2 + $0x48] sm:$0xff]
        %v375 = vld [vmem:[#allocation2 + $0x50] sm:$0xff]
        %v376 = vld [vmem:[#allocation2 + $0x58] sm:$0xff]
        %v377 = vld [vmem:[#allocation2 + $0x60] sm:$0xff]
        %v378 = vld [vmem:[#allocation2 + $0x68] sm:$0xff]
        %v379 = vld [vmem:[#allocation2 + $0x70] sm:$0xff]
        %v380 = vld [vmem:[#allocation2 + $0x78] sm:$0xff]
        %v381 = vld [vmem:[%s286] sm:$0xff]
        %v382 = vld [vmem:[%s286 + $0x8] sm:$0xf]
        %v383 = vld [vmem:[%s286 + $0xc] sm:$0xff]
        %v384 = vld [vmem:[%s286 + $0x14] sm:$0xf]
        %v385 = vld [vmem:[%s286 + $0x18] sm:$0xff]
        %v386 = vld [vmem:[%s286 + $0x20] sm:$0xf]
        %v387 = vld [vmem:[%s286 + $0x24] sm:$0xff]
        %v388 = vld [vmem:[%s286 + $0x2c] sm:$0xf]
        %v389 = vld [vmem:[%s286 + $0x30] sm:$0xff]
        %v390 = vld [vmem:[%s286 + $0x38] sm:$0xf]
        %v391 = vld [vmem:[%s286 + $0x3c] sm:$0xff]
        %v392 = vld [vmem:[%s286 + $0x44] sm:$0xf]
        %v393 = vld [vmem:[%s286 + $0x48] sm:$0xff]
        %v394 = vld [vmem:[%s286 + $0x50] sm:$0xf]
        %v395 = vld [vmem:[%s286 + $0x54] sm:$0xff]
        %v396 = vld [vmem:[%s286 + $0x5c] sm:$0xf]
        %v397 = vld [vmem:[%s286 + $0x60] sm:$0xff]
        %v398 = vld [vmem:[%s286 + $0x68] sm:$0xf]
        %v399 = vld [vmem:[%s286 + $0x6c] sm:$0xff]
        %v400 = vld [vmem:[%s286 + $0x74] sm:$0xf]
        %v401 = vld [vmem:[%s286 + $0x78] sm:$0xff]
        %v402 = vld [vmem:[%s286 + $0x80] sm:$0xf]
        %v403 = vld [vmem:[%s286 + $0x84] sm:$0xff]
        %v404 = vld [vmem:[%s286 + $0x8c] sm:$0xf]
        %v405 = vld [vmem:[%s286 + $0x90] sm:$0xff]
        %v406 = vld [vmem:[%s286 + $0x98] sm:$0xf]
        %v407 = vld [vmem:[%s286 + $0x9c] sm:$0xff]
        %v408 = vld [vmem:[%s286 + $0xa4] sm:$0xf]
        %v409 = vld [vmem:[%s286 + $0xa8] sm:$0xff]
        %v410 = vld [vmem:[%s286 + $0xb0] sm:$0xf]
        %v411 = vld [vmem:[%s286 + $0xb4] sm:$0xff]
        %v412 = vld [vmem:[%s286 + $0xbc] sm:$0xf]
        %v413 = vld [vmem:[%s330] sm:$0xf]
        %v414 = vld [vmem:[%s330 + $0x4] sm:$0xf]
        %v415 = vld [vmem:[%s330 + $0x8] sm:$0xf]
        %v416 = vld [vmem:[%s330 + $0xc] sm:$0xf]
        %v417 = vld [vmem:[%s330 + $0x10] sm:$0xf]
        %v418 = vld [vmem:[%s330 + $0x14] sm:$0xf]
        %v419 = vld [vmem:[%s330 + $0x18] sm:$0xf]
        %v420 = vld [vmem:[%s330 + $0x1c] sm:$0xf]
        %v421 = vld [vmem:[%s330 + $0x20] sm:$0xf]
        %v422 = vld [vmem:[%s330 + $0x24] sm:$0xf]
        %v423 = vld [vmem:[%s330 + $0x28] sm:$0xf]
        %v424 = vld [vmem:[%s330 + $0x2c] sm:$0xf]
        %v425 = vld [vmem:[%s330 + $0x30] sm:$0xf]
        %v426 = vld [vmem:[%s330 + $0x34] sm:$0xf]
        %v427 = vld [vmem:[%s330 + $0x38] sm:$0xf]
        %v428 = vld [vmem:[%s330 + $0x3c] sm:$0xf]
        %v429 = vld [vmem:[%s330 + $0x40] sm:$0xf]
        %v430 = vld [vmem:[%s330 + $0x44] sm:$0xf]
        %v431 = vld [vmem:[%s330 + $0x48] sm:$0xf]
        %v432 = vld [vmem:[%s330 + $0x4c] sm:$0xf]
        %v433 = vld [vmem:[%s330 + $0x50] sm:$0xf]
        %v434 = vld [vmem:[%s330 + $0x54] sm:$0xf]
        %v435 = vld [vmem:[%s330 + $0x58] sm:$0xf]
        %v436 = vld [vmem:[%s330 + $0x5c] sm:$0xf]
        %v437 = vld [vmem:[%s330 + $0x60] sm:$0xf]
        %v438 = vld [vmem:[%s330 + $0x64] sm:$0xf]
        %v439 = vld [vmem:[%s330 + $0x68] sm:$0xf]
        %v440 = vld [vmem:[%s330 + $0x6c] sm:$0xf]
        %v441 = vld [vmem:[%s330 + $0x70] sm:$0xf]
        %v442 = vld [vmem:[%s330 + $0x74] sm:$0xf]
        %v443 = vld [vmem:[%s330 + $0x78] sm:$0xf]
        %v444 = vld [vmem:[%s330 + $0x7c] sm:$0xf]
        %v445 = vld [vmem:[%s330 + $0x80] sm:$0xf]
        %v446 = vld [vmem:[%s330 + $0x84] sm:$0xf]
        %v447 = vld [vmem:[%s330 + $0x88] sm:$0xf]
        %v448 = vld [vmem:[%s330 + $0x8c] sm:$0xf]
        %v449 = vld [vmem:[%s330 + $0x90] sm:$0xf]
        %v450 = vld [vmem:[%s330 + $0x94] sm:$0xf]
        %v451 = vld [vmem:[%s330 + $0x98] sm:$0xf]
        %v452 = vld [vmem:[%s330 + $0x9c] sm:$0xf]
        %v453 = vld [vmem:[%s330 + $0xa0] sm:$0xf]
        %v454 = vld [vmem:[%s330 + $0xa4] sm:$0xf]
        %v455 = vld [vmem:[%s330 + $0xa8] sm:$0xf]
        %v456 = vld [vmem:[%s330 + $0xac] sm:$0xf]
        %v457 = vld [vmem:[%s330 + $0xb0] sm:$0xf]
        %v458 = vld [vmem:[%s330 + $0xb4] sm:$0xf]
        %v459 = vld [vmem:[%s330 + $0xb8] sm:$0xf]
        %v460 = vld [vmem:[%s330 + $0xbc] sm:$0xf]
        %v493 = vunpack.c.l.b16 %v381
        %v494 = vunpack.c.h.b16 %v381
        %v495 = vunpack.c.l.b16 %v382
        %v496 = vunpack.c.l.b16 %v383
        %v497 = vunpack.c.h.b16 %v383
        %v498 = vunpack.c.l.b16 %v384
        %v499 = vunpack.c.l.b16 %v385
        %v500 = vunpack.c.h.b16 %v385
        %v501 = vunpack.c.l.b16 %v386
        %v502 = vunpack.c.l.b16 %v387
        %v503 = vunpack.c.h.b16 %v387
        %v504 = vunpack.c.l.b16 %v388
        %v505 = vunpack.c.l.b16 %v389
        %v506 = vunpack.c.h.b16 %v389
        %v507 = vunpack.c.l.b16 %v390
        %v508 = vunpack.c.l.b16 %v391
        %v509 = vunpack.c.h.b16 %v391
        %v510 = vunpack.c.l.b16 %v392
        %v511 = vunpack.c.l.b16 %v393
        %v512 = vunpack.c.h.b16 %v393
        %v513 = vunpack.c.l.b16 %v394
        %v514 = vunpack.c.l.b16 %v395
        %v515 = vunpack.c.h.b16 %v395
        %v516 = vunpack.c.l.b16 %v396
        %v517 = vunpack.c.l.b16 %v397
        %v518 = vunpack.c.h.b16 %v397
        %v519 = vunpack.c.l.b16 %v398
        %v520 = vunpack.c.l.b16 %v399
        %v521 = vunpack.c.h.b16 %v399
        %v522 = vunpack.c.l.b16 %v400
        %v523 = vunpack.c.l.b16 %v401
        %v524 = vunpack.c.h.b16 %v401
        %v525 = vunpack.c.l.b16 %v402
        %v526 = vunpack.c.l.b16 %v403
        %v527 = vunpack.c.h.b16 %v403
        %v528 = vunpack.c.l.b16 %v404
        %v529 = vunpack.c.l.b16 %v405
        %v530 = vunpack.c.h.b16 %v405
        %v531 = vunpack.c.l.b16 %v406
        %v532 = vunpack.c.l.b16 %v407
        %v533 = vunpack.c.h.b16 %v407
        %v534 = vunpack.c.l.b16 %v408
        %v535 = vunpack.c.l.b16 %v409
        %v536 = vunpack.c.h.b16 %v409
        %v537 = vunpack.c.l.b16 %v410
        %v538 = vunpack.c.l.b16 %v411
        %v539 = vunpack.c.h.b16 %v411
        %v540 = vunpack.c.l.b16 %v412
        %v541 = vpack.c.b16 %v496, %v493
        %v542 = vpack.c.b16 %v497, %v494
        %v543 = vpack.c.b16 %v498, %v495
        %v544 = vpack.c.b16 %v502, %v499
        %v545 = vpack.c.b16 %v503, %v500
        %v546 = vpack.c.b16 %v504, %v501
        %v547 = vpack.c.b16 %v508, %v505
        %v548 = vpack.c.b16 %v509, %v506
        %v549 = vpack.c.b16 %v510, %v507
        %v550 = vpack.c.b16 %v514, %v511
        %v551 = vpack.c.b16 %v515, %v512
        %v552 = vpack.c.b16 %v516, %v513
        %v553 = vpack.c.b16 %v520, %v517
        %v554 = vpack.c.b16 %v521, %v518
        %v555 = vpack.c.b16 %v522, %v519
        %v556 = vpack.c.b16 %v526, %v523
        %v557 = vpack.c.b16 %v527, %v524
        %v558 = vpack.c.b16 %v528, %v525
        %v559 = vpack.c.b16 %v532, %v529
        %v560 = vpack.c.b16 %v533, %v530
        %v561 = vpack.c.b16 %v534, %v531
        %v562 = vpack.c.b16 %v538, %v535
        %v563 = vpack.c.b16 %v539, %v536
        %v564 = vpack.c.b16 %v540, %v537
        %v637 = vunpack.c.l.b16 %v413
        %v638 = vunpack.c.l.b16 %v414
        %v639 = vunpack.c.l.b16 %v415
        %v640 = vunpack.c.l.b16 %v416
        %v641 = vunpack.c.l.b16 %v417
        %v642 = vunpack.c.l.b16 %v418
        %v643 = vunpack.c.l.b16 %v419
        %v644 = vunpack.c.l.b16 %v420
        %v645 = vunpack.c.l.b16 %v421
        %v646 = vunpack.c.l.b16 %v422
        %v647 = vunpack.c.l.b16 %v423
        %v648 = vunpack.c.l.b16 %v424
        %v649 = vunpack.c.l.b16 %v425
        %v650 = vunpack.c.l.b16 %v426
        %v651 = vunpack.c.l.b16 %v427
        %v652 = vunpack.c.l.b16 %v428
        %v653 = vunpack.c.l.b16 %v429
        %v654 = vunpack.c.l.b16 %v430
        %v655 = vunpack.c.l.b16 %v431
        %v656 = vunpack.c.l.b16 %v432
        %v657 = vunpack.c.l.b16 %v433
        %v658 = vunpack.c.l.b16 %v434
        %v659 = vunpack.c.l.b16 %v435
        %v660 = vunpack.c.l.b16 %v436
        %v661 = vunpack.c.l.b16 %v437
        %v662 = vunpack.c.l.b16 %v438
        %v663 = vunpack.c.l.b16 %v439
        %v664 = vunpack.c.l.b16 %v440
        %v665 = vunpack.c.l.b16 %v441
        %v666 = vunpack.c.l.b16 %v442
        %v667 = vunpack.c.l.b16 %v443
        %v668 = vunpack.c.l.b16 %v444
        %v669 = vunpack.c.l.b16 %v445
        %v670 = vunpack.c.l.b16 %v446
        %v671 = vunpack.c.l.b16 %v447
        %v672 = vunpack.c.l.b16 %v448
        %v673 = vunpack.c.l.b16 %v449
        %v674 = vunpack.c.l.b16 %v450
        %v675 = vunpack.c.l.b16 %v451
        %v676 = vunpack.c.l.b16 %v452
        %v677 = vunpack.c.l.b16 %v453
        %v678 = vunpack.c.l.b16 %v454
        %v679 = vunpack.c.l.b16 %v455
        %v680 = vunpack.c.l.b16 %v456
        %v681 = vunpack.c.l.b16 %v457
        %v682 = vunpack.c.l.b16 %v458
        %v683 = vunpack.c.l.b16 %v459
        %v684 = vunpack.c.l.b16 %v460
        %v685 = vpack.c.b16 %v638, %v637
        %v686 = vpack.c.b16 %v640, %v639
        %v687 = vpack.c.b16 %v642, %v641
        %v688 = vpack.c.b16 %v644, %v643
        %v689 = vpack.c.b16 %v646, %v645
        %v690 = vpack.c.b16 %v648, %v647
        %v691 = vpack.c.b16 %v650, %v649
        %v692 = vpack.c.b16 %v652, %v651
        %v693 = vpack.c.b16 %v654, %v653
        %v694 = vpack.c.b16 %v656, %v655
        %v695 = vpack.c.b16 %v658, %v657
        %v696 = vpack.c.b16 %v660, %v659
        %v697 = vpack.c.b16 %v662, %v661
        %v698 = vpack.c.b16 %v664, %v663
        %v699 = vpack.c.b16 %v666, %v665
        %v700 = vpack.c.b16 %v668, %v667
        %v701 = vpack.c.b16 %v670, %v669
        %v702 = vpack.c.b16 %v672, %v671
        %v703 = vpack.c.b16 %v674, %v673
        %v704 = vpack.c.b16 %v676, %v675
        %v705 = vpack.c.b16 %v678, %v677
        %v706 = vpack.c.b16 %v680, %v679
        %v707 = vpack.c.b16 %v682, %v681
        %v708 = vpack.c.b16 %v684, %v683
        %733 = vmatprep.subr.bf16.mxu0 0
        %734 = vmatpush1.bf16.msra.mxu0 %v685
        %735 = vmatprep.subr.bf16.mxu0 0
        %736 = vmatpush1.bf16.msra.mxu0 %v686
        %737 = vmatprep.subr.bf16.mxu0 0
        %738 = vmatpush1.bf16.msra.mxu0 %v687
        %739 = vmatprep.subr.bf16.mxu0 0
        %740 = vmatpush1.bf16.msra.mxu0 %v688
        %741 = vmatprep.subr.bf16.mxu0 0
        %742 = vmatpush1.bf16.msra.mxu0 %v689
        %743 = vmatprep.subr.bf16.mxu0 0
        %744 = vmatpush1.bf16.msra.mxu0 %v690
        %745 = vmatprep.subr.bf16.mxu0 0
        %746 = vmatpush1.bf16.msra.mxu0 %v691
        %747 = vmatprep.subr.bf16.mxu0 0
        %748 = vmatpush1.bf16.msra.mxu0 %v692
        %749 = vmatprep.subr.bf16.mxu0 0
        %750 = vmatpush1.bf16.msra.mxu0 %v693
        %751 = vmatprep.subr.bf16.mxu0 0
        %752 = vmatpush1.bf16.msra.mxu0 %v694
        %753 = vmatprep.subr.bf16.mxu0 0
        %754 = vmatpush1.bf16.msra.mxu0 %v695
        %755 = vmatprep.subr.bf16.mxu0 0
        %756 = vmatpush1.bf16.msra.mxu0 %v696
        %757 = vmatprep.subr.bf16.mxu0 0
        %758 = vmatpush1.bf16.msra.mxu0 %v697
        %759 = vmatprep.subr.bf16.mxu0 0
        %760 = vmatpush1.bf16.msra.mxu0 %v698
        %761 = vmatprep.subr.bf16.mxu0 0
        %762 = vmatpush1.bf16.msra.mxu0 %v699
        %763 = vmatprep.subr.bf16.mxu0 0
        %764 = vmatpush1.bf16.msra.mxu0 %v700
        %765 = vmatprep.mubr.bf16.mxu0 %v542
        %766 = vmatmul.mubr.bf16.gmra.mrb[0].mxu0 %v541
        %v767 = vpop.f32.mrb[0].mxu0
        %v768 = vadd.f32 0.0, %v767
        %v769 = vpop.f32.mrb[0].mxu0
        %v770 = vpop.f32.mrb[0].mxu0
        %v771 = vadd.f32 0.0, %v770
        %v772 = vpop.f32.mrb[0].mxu0
        %773 = vmatprep.mubr.bf16.mxu0 %v545
        %774 = vmatmul.mubr.bf16.gmra.mrb[0].mxu0 %v544
        %v775 = vpop.f32.mrb[0].mxu0
        %v776 = vadd.f32 0.0, %v775
        %v777 = vpop.f32.mrb[0].mxu0
        %v778 = vpop.f32.mrb[0].mxu0
        %v779 = vadd.f32 0.0, %v778
        %v780 = vpop.f32.mrb[0].mxu0
        %781 = vmatprep.mubr.bf16.mxu0 %v548
        %782 = vmatmul.mubr.bf16.gmra.mrb[0].mxu0 %v547
        %v783 = vpop.f32.mrb[0].mxu0
        %v784 = vadd.f32 0.0, %v783
        %v785 = vpop.f32.mrb[0].mxu0
        %v786 = vpop.f32.mrb[0].mxu0
        %v787 = vadd.f32 0.0, %v786
        %v788 = vpop.f32.mrb[0].mxu0
        %789 = vmatprep.mubr.bf16.mxu0 %v551
        %790 = vmatmul.mubr.bf16.gmra.mrb[0].mxu0 %v550
        %v791 = vpop.f32.mrb[0].mxu0
        %v792 = vadd.f32 0.0, %v791
        %v793 = vpop.f32.mrb[0].mxu0
        %v794 = vpop.f32.mrb[0].mxu0
        %v795 = vadd.f32 0.0, %v794
        %v796 = vpop.f32.mrb[0].mxu0
        %797 = vmatprep.mubr.bf16.mxu0 %v554
        %798 = vmatmul.mubr.bf16.gmra.mrb[0].mxu0 %v553
        %v799 = vpop.f32.mrb[0].mxu0
        %v800 = vadd.f32 0.0, %v799
        %v801 = vpop.f32.mrb[0].mxu0
        %v802 = vpop.f32.mrb[0].mxu0
        %v803 = vadd.f32 0.0, %v802
        %v804 = vpop.f32.mrb[0].mxu0
        %805 = vmatprep.mubr.bf16.mxu0 %v557
        %806 = vmatmul.mubr.bf16.gmra.mrb[0].mxu0 %v556
        %v807 = vpop.f32.mrb[0].mxu0
        %v808 = vadd.f32 0.0, %v807
        %v809 = vpop.f32.mrb[0].mxu0
        %v810 = vpop.f32.mrb[0].mxu0
        %v811 = vadd.f32 0.0, %v810
        %v812 = vpop.f32.mrb[0].mxu0
        %813 = vmatprep.mubr.bf16.mxu0 %v560
        %814 = vmatmul.mubr.bf16.gmra.mrb[0].mxu0 %v559
        %v815 = vpop.f32.mrb[0].mxu0
        %v816 = vadd.f32 0.0, %v815
        %v817 = vpop.f32.mrb[0].mxu0
        %v818 = vpop.f32.mrb[0].mxu0
        %v819 = vadd.f32 0.0, %v818
        %v820 = vpop.f32.mrb[0].mxu0
        %821 = vmatprep.mubr.bf16.mxu0 %v563
        %822 = vmatmul.mubr.bf16.gmra.mrb[0].mxu0 %v562
        %v823 = vpop.f32.mrb[0].mxu0
        %v824 = vadd.f32 0.0, %v823
        %v825 = vpop.f32.mrb[0].mxu0
        %v826 = vpop.f32.mrb[0].mxu0
        %v827 = vadd.f32 0.0, %v826
        %v828 = vpop.f32.mrb[0].mxu0
        %829 = vdwg.mxu0
        %830 = vmatprep.subr.bf16.mxu0 0
        %831 = vmatpush1.bf16.msra.mxu0 %v701
        %832 = vmatprep.subr.bf16.mxu0 0
        %833 = vmatpush1.bf16.msra.mxu0 %v702
        %834 = vmatprep.subr.bf16.mxu0 0
        %835 = vmatpush1.bf16.msra.mxu0 %v703
        %836 = vmatprep.subr.bf16.mxu0 0
        %837 = vmatpush1.bf16.msra.mxu0 %v704
        %838 = vmatprep.subr.bf16.mxu0 0
        %839 = vmatpush1.bf16.msra.mxu0 %v705
        %840 = vmatprep.subr.bf16.mxu0 0
        %841 = vmatpush1.bf16.msra.mxu0 %v706
        %842 = vmatprep.subr.bf16.mxu0 0
        %843 = vmatpush1.bf16.msra.mxu0 %v707
        %844 = vmatprep.subr.bf16.mxu0 0
        %845 = vmatpush1.bf16.msra.mxu0 %v708
        %846 = vmatprep.subr.bf16.mxu0 0
        %847 = vmatpush1.bf16.msra.mxu0 0
        %848 = vmatprep.subr.bf16.mxu0 0
        %849 = vmatpush1.bf16.msra.mxu0 0
        %850 = vmatprep.subr.bf16.mxu0 0
        %851 = vmatpush1.bf16.msra.mxu0 0
        %852 = vmatprep.subr.bf16.mxu0 0
        %853 = vmatpush1.bf16.msra.mxu0 0
        %854 = vmatprep.subr.bf16.mxu0 0
        %855 = vmatpush1.bf16.msra.mxu0 0
        %856 = vmatprep.subr.bf16.mxu0 0
        %857 = vmatpush1.bf16.msra.mxu0 0
        %858 = vmatprep.subr.bf16.mxu0 0
        %859 = vmatpush1.bf16.msra.mxu0 0
        %860 = vmatprep.subr.bf16.mxu0 0
        %861 = vmatpush1.bf16.msra.mxu0 0
        %862 = vmatprep.mubr.bf16.mxu0 0
        %863 = vmatmul.mubr.bf16.gmra.mrb[0].mxu0 %v543
        %v864 = vpop.f32.mrb[0].mxu0
        %v865 = vadd.f32 %v768, %v864
        %v866 = vpop.f32.mrb[0].mxu0
        %v867 = vpop.f32.mrb[0].mxu0
        %v868 = vadd.f32 %v771, %v867
        %v869 = vpop.f32.mrb[0].mxu0
        %870 = vmatprep.mubr.bf16.mxu0 0
        %871 = vmatmul.mubr.bf16.gmra.mrb[0].mxu0 %v546
        %v872 = vpop.f32.mrb[0].mxu0
        %v873 = vadd.f32 %v776, %v872
        %v874 = vpop.f32.mrb[0].mxu0
        %v875 = vpop.f32.mrb[0].mxu0
        %v876 = vadd.f32 %v779, %v875
        %v877 = vpop.f32.mrb[0].mxu0
        %878 = vmatprep.mubr.bf16.mxu0 0
        %879 = vmatmul.mubr.bf16.gmra.mrb[0].mxu0 %v549
        %v880 = vpop.f32.mrb[0].mxu0
        %v881 = vadd.f32 %v784, %v880
        %v882 = vpop.f32.mrb[0].mxu0
        %v883 = vpop.f32.mrb[0].mxu0
        %v884 = vadd.f32 %v787, %v883
        %v885 = vpop.f32.mrb[0].mxu0
        %886 = vmatprep.mubr.bf16.mxu0 0
        %887 = vmatmul.mubr.bf16.gmra.mrb[0].mxu0 %v552
        %v888 = vpop.f32.mrb[0].mxu0
        %v889 = vadd.f32 %v792, %v888
        %v890 = vpop.f32.mrb[0].mxu0
        %v891 = vpop.f32.mrb[0].mxu0
        %v892 = vadd.f32 %v795, %v891
        %v893 = vpop.f32.mrb[0].mxu0
        %894 = vmatprep.mubr.bf16.mxu0 0
        %895 = vmatmul.mubr.bf16.gmra.mrb[0].mxu0 %v555
        %v896 = vpop.f32.mrb[0].mxu0
        %v897 = vadd.f32 %v800, %v896
        %v898 = vpop.f32.mrb[0].mxu0
        %v899 = vpop.f32.mrb[0].mxu0
        %v900 = vadd.f32 %v803, %v899
        %v901 = vpop.f32.mrb[0].mxu0
        %902 = vmatprep.mubr.bf16.mxu0 0
        %903 = vmatmul.mubr.bf16.gmra.mrb[0].mxu0 %v558
        %v904 = vpop.f32.mrb[0].mxu0
        %v905 = vadd.f32 %v808, %v904
        %v906 = vpop.f32.mrb[0].mxu0
        %v907 = vpop.f32.mrb[0].mxu0
        %v908 = vadd.f32 %v811, %v907
        %v909 = vpop.f32.mrb[0].mxu0
        %910 = vmatprep.mubr.bf16.mxu0 0
        %911 = vmatmul.mubr.bf16.gmra.mrb[0].mxu0 %v561
        %v912 = vpop.f32.mrb[0].mxu0
        %v913 = vadd.f32 %v816, %v912
        %v914 = vpop.f32.mrb[0].mxu0
        %v915 = vpop.f32.mrb[0].mxu0
        %v916 = vadd.f32 %v819, %v915
        %v917 = vpop.f32.mrb[0].mxu0
        %918 = vmatprep.mubr.bf16.mxu0 0
        %919 = vmatmul.mubr.bf16.gmra.mrb[0].mxu0 %v564
        %v920 = vpop.f32.mrb[0].mxu0
        %v921 = vadd.f32 %v824, %v920
        %v922 = vpop.f32.mrb[0].mxu0
        %v923 = vpop.f32.mrb[0].mxu0
        %v924 = vadd.f32 %v827, %v923
        %v925 = vpop.f32.mrb[0].mxu0
        %926 = vdwg.mxu0
        %v927 = vadd.f32 %v365, %v865
        %v928 = vadd.f32 %v366, %v868
        %v929 = vadd.f32 %v367, %v873
        %v930 = vadd.f32 %v368, %v876
        %v931 = vadd.f32 %v369, %v881
        %v932 = vadd.f32 %v370, %v884
        %v933 = vadd.f32 %v371, %v889
        %v934 = vadd.f32 %v372, %v892
        %v935 = vadd.f32 %v373, %v897
        %v936 = vadd.f32 %v374, %v900
        %v937 = vadd.f32 %v375, %v905
        %v938 = vadd.f32 %v376, %v908
        %v939 = vadd.f32 %v377, %v913
        %v940 = vadd.f32 %v378, %v916
        %v941 = vadd.f32 %v379, %v921
        %v942 = vadd.f32 %v380, %v924
        %943 = vst [vmem:[#allocation2] sm:$0xff] %v927
        %944 = vst [vmem:[#allocation2 + $0x8] sm:$0xff] %v928
        %945 = vst [vmem:[#allocation2 + $0x10] sm:$0xff] %v929
        %946 = vst [vmem:[#allocation2 + $0x18] sm:$0xff] %v930
        %947 = vst [vmem:[#allocation2 + $0x20] sm:$0xff] %v931
        %948 = vst [vmem:[#allocation2 + $0x28] sm:$0xff] %v932
        %949 = vst [vmem:[#allocation2 + $0x30] sm:$0xff] %v933
        %950 = vst [vmem:[#allocation2 + $0x38] sm:$0xff] %v934
        %951 = vst [vmem:[#allocation2 + $0x40] sm:$0xff] %v935
        %952 = vst [vmem:[#allocation2 + $0x48] sm:$0xff] %v936
        %953 = vst [vmem:[#allocation2 + $0x50] sm:$0xff] %v937
        %954 = vst [vmem:[#allocation2 + $0x58] sm:$0xff] %v938
        %955 = vst [vmem:[#allocation2 + $0x60] sm:$0xff] %v939
        %956 = vst [vmem:[#allocation2 + $0x68] sm:$0xff] %v940
        %957 = vst [vmem:[#allocation2 + $0x70] sm:$0xff] %v941
        %958 = vst [vmem:[#allocation2 + $0x78] sm:$0xff] %v942
        %p959 = scmp.eq.s32.totalorder %s21, 5
        // Predicated region
        $region63: #{decoder_forward.19} parent=53 // pred_check
          %p960 = pneg %p959
        $region64: #{decoder_forward.19} parent=53 // pred_check_branch
          %962 = sbr.rel (%p960) target = $region66
        $region65: #{decoder_forward.19} parent=53 // pred_region
          %v963 = vld [vmem:[#allocation2] sm:$0xff]
          %v964 = vld [vmem:[#allocation2 + $0x8] sm:$0xff]
          %v965 = vld [vmem:[#allocation2 + $0x10] sm:$0xff]
          %v966 = vld [vmem:[#allocation2 + $0x18] sm:$0xff]
          %v967 = vld [vmem:[#allocation2 + $0x20] sm:$0xff]
          %v968 = vld [vmem:[#allocation2 + $0x28] sm:$0xff]
          %v969 = vld [vmem:[#allocation2 + $0x30] sm:$0xff]
          %v970 = vld [vmem:[#allocation2 + $0x38] sm:$0xff]
          %v971 = vld [vmem:[#allocation2 + $0x40] sm:$0xff]
          %v972 = vld [vmem:[#allocation2 + $0x48] sm:$0xff]
          %v973 = vld [vmem:[#allocation2 + $0x50] sm:$0xff]
          %v974 = vld [vmem:[#allocation2 + $0x58] sm:$0xff]
          %v975 = vld [vmem:[#allocation2 + $0x60] sm:$0xff]
          %v976 = vld [vmem:[#allocation2 + $0x68] sm:$0xff]
          %v977 = vld [vmem:[#allocation2 + $0x70] sm:$0xff]
          %v978 = vld [vmem:[#allocation2 + $0x78] sm:$0xff]
          %v979 = vld [vmem:[%s334] sm:$0x1]
          %v981 = vlaneseq
          %v982 = vshrl.u32 %v981, 7
          %v983 = vsub.s32 0, %v982
          %v984 = vrot.slane %v979, %v983
          %v986 = vadd.f32 %v963, %v984
          %v987 = vadd.f32 %v964, %v984
          %v988 = vadd.f32 %v965, %v984
          %v989 = vadd.f32 %v966, %v984
          %v990 = vadd.f32 %v967, %v984
          %v991 = vadd.f32 %v968, %v984
          %v992 = vadd.f32 %v969, %v984
          %v993 = vadd.f32 %v970, %v984
          %v994 = vadd.f32 %v971, %v984
          %v995 = vadd.f32 %v972, %v984
          %v996 = vadd.f32 %v973, %v984
          %v997 = vadd.f32 %v974, %v984
          %v998 = vadd.f32 %v975, %v984
          %v999 = vadd.f32 %v976, %v984
          %v1000 = vadd.f32 %v977, %v984
          %v1001 = vadd.f32 %v978, %v984
          %1002 = vst [vmem:[%s342] sm:$0xff] %v986
          %1003 = vst [vmem:[%s342 + $0x8] sm:$0xff] %v987
          %1004 = vst [vmem:[%s342 + $0x10] sm:$0xff] %v988
          %1005 = vst [vmem:[%s342 + $0x18] sm:$0xff] %v989
          %1006 = vst [vmem:[%s342 + $0x20] sm:$0xff] %v990
          %1007 = vst [vmem:[%s342 + $0x28] sm:$0xff] %v991
          %1008 = vst [vmem:[%s342 + $0x30] sm:$0xff] %v992
          %1009 = vst [vmem:[%s342 + $0x38] sm:$0xff] %v993
          %1010 = vst [vmem:[%s342 + $0x40] sm:$0xff] %v994
          %1011 = vst [vmem:[%s342 + $0x48] sm:$0xff] %v995
          %1012 = vst [vmem:[%s342 + $0x50] sm:$0xff] %v996
          %1013 = vst [vmem:[%s342 + $0x58] sm:$0xff] %v997
          %1014 = vst [vmem:[%s342 + $0x60] sm:$0xff] %v998
          %1015 = vst [vmem:[%s342 + $0x68] sm:$0xff] %v999
          %1016 = vst [vmem:[%s342 + $0x70] sm:$0xff] %v1000
          %1017 = vst [vmem:[%s342 + $0x78] sm:$0xff] %v1001
        $region66: #{decoder_forward.19} parent=53 // pred_fallthru
          _
        %s1018 = smul.u32 16, %s19
        %p1019 = scmp.lt.s32.totalorder %s1018, 15
        %s1020 = scalar_select %p1019, %s1018, 15
        %p1021 = scmp.lt.s32.totalorder %s20, 0
        %s1022 = scalar_select %p1021, %s20, 0
        %s1023 = sadd.s32 %s1022, %s1020
        %s1024 = smul.addr %s1023, 8
        %s1025 = scalar_lea.vmem %s3, %s1024
        // Predicated region
        $region67: #{decoder_forward.19} parent=53 // pred_check
          %p1026 = pneg %p135
        $region68: #{decoder_forward.19} parent=53 // pred_check_branch
          %1028 = sbr.rel (%p1026) target = $region70
        $region69: #{decoder_forward.19} parent=53 // pred_region
          %s1029 = smul.u32 16, %s19
        $region70: #{decoder_forward.19} parent=53 // pred_fallthru
          _
        // Predicated region
        $region71: #{decoder_forward.19} parent=53 // pred_check
          %p1030 = pneg %p135
        $region72: #{decoder_forward.19} parent=53 // pred_check_branch
          %1032 = sbr.rel (%p1030) target = $region74
        $region73: #{decoder_forward.19} parent=53 // pred_region
          %s1033 = smul.u32 16, %s19
          %p1034 = scmp.lt.s32.totalorder %s1033, 15
          %s1035 = scalar_select %p1034, %s1033, 15
          %p1036 = scmp.lt.s32.totalorder %s20, 0
          %s1037 = scalar_select %p1036, %s20, 0
          %s1038 = sadd.s32 %s1037, %s1035
          %s1039 = smul.addr %s1038, 8
          %s1040 = scalar_lea.vmem %s3, %s1039
        $region74: #{decoder_forward.19} parent=53 // pred_fallthru
          _
      $region54: #{decoder_forward.19} parent=5 // pred_fallthru
        _
      %p1041 = scmp.le.s32.totalorder 2, %s9
      // Predicated region
      $region75: #{decoder_forward.19} parent=5 // pred_check
        %p1042 = pneg %p1041
      $region76: #{decoder_forward.19} parent=5 // pred_check_branch
        %1044 = sbr.rel (%p1042) target = $region78
      $region77: #{decoder_forward.19} parent=5 // pred_region
        %s1045 = ssub.s32 %s9, 2
      $region78: #{decoder_forward.19} parent=5 // pred_fallthru
        _
    $region6: #{decoder_forward.19} parent=1 // loop_footer
      %s13 = sadd.s32 1, %s9
    $region7: #{decoder_forward.19} parent=1 // loop_footer_branch
      %8 = sbr.rel target = $region3
    $region8: #{decoder_forward.19} parent=1 // loop_exit
      _

</llo_original>
